<compile_context>
chip_gen: v7x
topology: tpu7x:2x2x1
jax: 0.10.0
libtpu: 0.0.40
codegen_flags: <defaults>
</compile_context>

<pallas_src>
import functools

import jax
import jax.numpy as jnp
from jax import lax
from jax.experimental import pallas as pl
from jax.experimental.pallas import tpu as pltpu

EPS = 1e-5
_VMEM_LIMIT = 32 * 1024 * 1024  # generous for ~2.5 MiB/step; OK on v5e/v6e/v7x


def _conv_relu_stats_kernel(x_ref, w_ref, b_ref, y_ref, stats_ref, *, m_valid, tm):
    """1x1x1 conv (channel matmul) + bias + ReLU on one M-tile, plus per-tile
    per-channel sum / sum-of-squares partials for the global BN reduction."""
    y = jnp.dot(x_ref[...], w_ref[...], preferred_element_type=jnp.float32)
    y = jnp.maximum(y + b_ref[...], 0.0)
    # Zero rows that are M-padding so they neither pollute the BN statistics
    # nor feed garbage (relu(bias)) into the next layer.
    row = lax.broadcasted_iota(jnp.int32, y.shape, 0) + pl.program_id(0) * tm
    y = jnp.where(row < m_valid, y, 0.0)
    y_ref[...] = y
    s = jnp.sum(y, axis=0, keepdims=True)        # (1, Cp)
    ss = jnp.sum(y * y, axis=0, keepdims=True)   # (1, Cp)
    stats_ref[...] = jnp.concatenate([s, ss], axis=0)[None, :, :]


def _conv_kernel(x_ref, w_ref, b_ref, o_ref):
    """Final 1x1x1 conv (channel matmul) + bias on one M-tile."""
    o_ref[...] = (
        jnp.dot(x_ref[...], w_ref[...], preferred_element_type=jnp.float32)
        + b_ref[...]
    )


def _conv_relu_stats(x_p, w_mat, b_row, m_valid, tm):
    mp, cin_p = x_p.shape
    cout_p = w_mat.shape[1]
    nt = mp // tm
    kernel = functools.partial(_conv_relu_stats_kernel, m_valid=m_valid, tm=tm)
    return pl.pallas_call(
        kernel,
        out_shape=(
            jax.ShapeDtypeStruct((mp, cout_p), jnp.float32),
            jax.ShapeDtypeStruct((nt, 2, cout_p), jnp.float32),
        ),
        grid=(nt,),
        in_specs=[
            pl.BlockSpec((tm, cin_p), lambda i: (i, 0)),
            pl.BlockSpec((cin_p, cout_p), lambda i: (0, 0)),
            pl.BlockSpec((1, cout_p), lambda i: (0, 0)),
        ],
        out_specs=(
            pl.BlockSpec((tm, cout_p), lambda i: (i, 0)),
            pl.BlockSpec((1, 2, cout_p), lambda i: (i, 0, 0)),
        ),
        compiler_params=pltpu.CompilerParams(
            dimension_semantics=("parallel",),
            vmem_limit_bytes=_VMEM_LIMIT,
        ),
    )(x_p, w_mat, b_row)


def _conv1x1(x_p, w_mat, b_row, tm):
    mp, cin_p = x_p.shape
    cout_p = w_mat.shape[1]
    nt = mp // tm
    return pl.pallas_call(
        _conv_kernel,
        out_shape=jax.ShapeDtypeStruct((mp, cout_p), jnp.float32),
        grid=(nt,),
        in_specs=[
            pl.BlockSpec((tm, cin_p), lambda i: (i, 0)),
            pl.BlockSpec((cin_p, cout_p), lambda i: (0, 0)),
            pl.BlockSpec((1, cout_p), lambda i: (0, 0)),
        ],
        out_specs=pl.BlockSpec((tm, cout_p), lambda i: (i, 0)),
        compiler_params=pltpu.CompilerParams(
            dimension_semantics=("parallel",),
            vmem_limit_bytes=_VMEM_LIMIT,
        ),
    )(x_p, w_mat, b_row)


def _bn_fold(stats, m_valid, gamma_p, beta_p, w_next, b_next):
    """Finalize training-mode BatchNorm stats and fold the per-channel affine
    into the NEXT 1x1x1 conv:  bn(h) @ W + b == h @ (scale[:,None]*W) + (shift @ W + b).
    Tiny per-channel work; runs as plain JAX between the pallas passes."""
    s = jnp.sum(stats[:, 0, :], axis=0)
    ss = jnp.sum(stats[:, 1, :], axis=0)
    mean = s / m_valid
    # Single-pass E[x^2]-E[x]^2 in f32; post-ReLU magnitudes here are O(1) so
    # cancellation is benign.  Clamp tiny negative rounding residue.
    var = jnp.maximum(ss / m_valid - mean * mean, 0.0)
    inv = lax.rsqrt(var + EPS)
    scale = gamma_p * inv
    shift = beta_p - mean * scale
    return scale[:, None] * w_next, shift @ w_next + b_next


def cong_final_conv_forward(x, w1, b1, g1, be1, w2, b2, g2, be2, w3, b3, *, tm=1024):
    """x: (N, C_in, D, H, W) float32 NCDHW.  Returns (N, C_out, D, H, W)."""
    N, C_in, D, H, W = x.shape
    C_mid = w1.shape[0]
    C_out = w3.shape[0]
    M = N * D * H * W

    def cpad(c):
        return ((c + 127) // 128) * 128

    Cin_p, Cmid_p, Cout_p = cpad(C_in), cpad(C_mid), cpad(C_out)

    TM = max(8, ((min(tm, M) + 7) // 8) * 8)
    Mp = ((M + TM - 1) // TM) * TM

    # channels-last flatten once; everything stays (M, C) until the end.
    x_cl = jnp.transpose(x, (0, 2, 3, 4, 1)).reshape(M, C_in)
    x_p = jnp.pad(x_cl, ((0, Mp - M), (0, Cin_p - C_in)))

    def wmat(w, cip, cop):
        co, ci = w.shape[0], w.shape[1]
        m = w.reshape(co, ci).T                       # (Ci, Co) matmul matrix
        return jnp.pad(m, ((0, cip - ci), (0, cop - co)))

    def vpad(v, cp):
        return jnp.pad(v, (0, cp - v.shape[0]))

    w1m = wmat(w1, Cin_p, Cmid_p)
    w2m = wmat(w2, Cmid_p, Cmid_p)
    w3m = wmat(w3, Cmid_p, Cout_p)
    b1r = vpad(b1, Cmid_p).reshape(1, Cmid_p)
    g1p, be1p = vpad(g1, Cmid_p), vpad(be1, Cmid_p)
    g2p, be2p = vpad(g2, Cmid_p), vpad(be2, Cmid_p)

    # pass 1: conv1 + ReLU + BN1 partial stats
    y1, st1 = _conv_relu_stats(x_p, w1m, b1r, M, TM)
    # finalize BN1 and fold its affine into conv2
    w2f, b2f = _bn_fold(st1, M, g1p, be1p, w2m, vpad(b2, Cmid_p))
    # pass 2: (BN1 ∘ conv2) + ReLU + BN2 partial stats
    y2, st2 = _conv_relu_stats(y1, w2f, b2f.reshape(1, Cmid_p), M, TM)
    # finalize BN2 and fold its affine into the final conv
    w3f, b3f = _bn_fold(st2, M, g2p, be2p, w3m, vpad(b3, Cout_p))
    # pass 3: (BN2 ∘ finalconv)
    out = _conv1x1(y2, w3f, b3f.reshape(1, Cout_p), TM)

    out = out[:M, :C_out].reshape(N, D, H, W, C_out)
    return jnp.transpose(out, (0, 4, 1, 2, 3))  # back to NCDHW


def _reference(x, w1, b1, g1, be1, w2, b2, g2, be2, w3, b3):
    """Pure-JAX reference of CongFinalConv forward (training-mode BN)."""
    def conv(h, w, b):
        return (jnp.einsum('ncdhw,oc->nodhw', h, w[:, :, 0, 0, 0])
                + b[None, :, None, None, None])

    def bn(h, g, be):
        mean = jnp.mean(h, axis=(0, 2, 3, 4), keepdims=True)
        var = jnp.mean((h - mean) ** 2, axis=(0, 2, 3, 4), keepdims=True)
        gb = g[None, :, None, None, None]
        bb = be[None, :, None, None, None]
        return (h - mean) * lax.rsqrt(var + EPS) * gb + bb

    h = bn(jnp.maximum(conv(x, w1, b1), 0.0), g1, be1)
    h = bn(jnp.maximum(conv(h, w2, b2), 0.0), g2, be2)
    return conv(h, w3, b3)


if __name__ == "__main__":
    key = jax.random.PRNGKey(0)
    k_x, k1, k2, k3 = jax.random.split(key, 4)

    # CongFinalConv(input_channels=4, output_channels=3, inter_channels=8, norm='bn')
    N, C_in, C_mid, C_out = 2, 4, 8, 3
    D = H = W = 16
    x = jax.random.normal(k_x, (N, C_in, D, H, W), dtype=jnp.float32)

    def conv_init(k, co, ci):
        # PyTorch Conv3d default init for a 1x1x1 kernel: bound = 1/sqrt(ci)
        bound = 1.0 / (ci ** 0.5)
        kw, kb = jax.random.split(k)
        w = jax.random.uniform(kw, (co, ci, 1, 1, 1), jnp.float32, -bound, bound)
        b = jax.random.uniform(kb, (co,), jnp.float32, -bound, bound)
        return w, b

    w1, b1 = conv_init(k1, C_mid, C_in)
    w2, b2 = conv_init(k2, C_mid, C_mid)
    w3, b3 = conv_init(k3, C_out, C_mid)

    # BatchNorm3d default init
    g1 = jnp.ones((C_mid,), jnp.float32)
    be1 = jnp.zeros((C_mid,), jnp.float32)
    g2 = jnp.ones((C_mid,), jnp.float32)
    be2 = jnp.zeros((C_mid,), jnp.float32)

    out = jax.jit(cong_final_conv_forward)(
        x, w1, b1, g1, be1, w2, b2, g2, be2, w3, b3)
    jax.block_until_ready(out)
    assert out.shape == (N, C_out, D, H, W)

    ref = _reference(x, w1, b1, g1, be1, w2, b2, g2, be2, w3, b3)
    max_diff = float(jnp.max(jnp.abs(out - ref)))
    assert max_diff < 3e-3, f"mismatch vs reference: {max_diff}"

    print("KERNEL_OK")
</pallas_src>

<mosaic_0001>
module attributes {stable_mosaic.version = 11 : i64} {
  func.func @_conv_relu_stats_kernel(%arg0: i32, %arg1: memref<1024x128xf32, #tpu.memory_space<vmem>>, %arg2: memref<128x128xf32, #tpu.memory_space<vmem>>, %arg3: memref<1x128xf32, #tpu.memory_space<vmem>>, %arg4: memref<1024x128xf32, #tpu.memory_space<vmem>>, %arg5: memref<1x2x128xf32, #tpu.memory_space<vmem>>) attributes {dimension_semantics = [#tpu.dimension_semantics<parallel>], iteration_bounds = array<i64: 8>, scalar_prefetch = 0 : i64, scratch_operands = 0 : i64, tpu.core_type = #tpu.core_type<tc>, window_params = [{transform_indices = @transform_0, window_bounds = array<i64: 1024, 128>}, {pipeline_mode = #tpu.pipeline_mode<synchronous>, transform_indices = @transform_1, window_bounds = array<i64: 128, 128>}, {pipeline_mode = #tpu.pipeline_mode<synchronous>, transform_indices = @transform_2, window_bounds = array<i64: 1, 128>}, {transform_indices = @transform_3, window_bounds = array<i64: 1024, 128>}, {transform_indices = @transform_4, window_bounds = array<i64: 1, 2, 128>}]} {
    %c0 = arith.constant 0 : index
    %c0_0 = arith.constant 0 : index
    %0 = vector.load %arg1[%c0, %c0_0] : memref<1024x128xf32, #tpu.memory_space<vmem>>, vector<1024x128xf32>
    %c0_1 = arith.constant 0 : index
    %c0_2 = arith.constant 0 : index
    %1 = vector.load %arg2[%c0_1, %c0_2] : memref<128x128xf32, #tpu.memory_space<vmem>>, vector<128x128xf32>
    %cst = arith.constant dense<0.000000e+00> : vector<1024x128xf32>
    %2 = tpu.matmul %0, %1, %cst {dimension_numbers = #tpu.dot_dimension_numbers<[1], [0], [0], [1], [0, 0, 1, 1], [], []>} : vector<1024x128xf32>, vector<128x128xf32>, vector<1024x128xf32> -> vector<1024x128xf32>
    %c0_3 = arith.constant 0 : index
    %c0_4 = arith.constant 0 : index
    %3 = vector.load %arg3[%c0_3, %c0_4] : memref<1x128xf32, #tpu.memory_space<vmem>>, vector<1x128xf32>
    %4 = vector.broadcast %3 : vector<1x128xf32> to vector<1024x128xf32>
    %5 = arith.addf %2, %4 : vector<1024x128xf32>
    %cst_5 = arith.constant 0.000000e+00 : f32
    %6 = vector.broadcast %cst_5 : f32 to vector<1024x128xf32>
    %7 = arith.maximumf %5, %6 : vector<1024x128xf32>
    %8 = tpu.iota {dimensions = array<i32: 0>} : vector<1024x128xi32>
    %c1024_i32 = arith.constant 1024 : i32
    %9 = arith.muli %arg0, %c1024_i32 : i32
    %10 = vector.broadcast %9 : i32 to vector<1024x128xi32>
    %11 = arith.addi %8, %10 : vector<1024x128xi32>
    %c8192_i32 = arith.constant 8192 : i32
    %12 = vector.broadcast %c8192_i32 : i32 to vector<1024x128xi32>
    %13 = arith.cmpi slt, %11, %12 : vector<1024x128xi32>
    %cst_6 = arith.constant 0.000000e+00 : f32
    %14 = vector.broadcast %cst_6 : f32 to vector<1024x128xf32>
    %15 = arith.select %13, %7, %14 : vector<1024x128xi1>, vector<1024x128xf32>
    %c0_7 = arith.constant 0 : index
    %c0_8 = arith.constant 0 : index
    %16 = vector.load %arg4[%c0_7, %c0_8] : memref<1024x128xf32, #tpu.memory_space<vmem>>, vector<1024x128xf32>
    tpu.vector_store %arg4[%c0_7, %c0_8], %15 {strides = array<i32>} : memref<1024x128xf32, #tpu.memory_space<vmem>>, vector<1024x128xf32>,
    %cst_9 = arith.constant dense<0.000000e+00> : vector<128xf32>
    %17 = vector.multi_reduction <add>, %15, %cst_9 [0] : vector<1024x128xf32> to vector<128xf32>
    %18 = vector.shape_cast %17 : vector<128xf32> to vector<1x128xf32>
    %19 = arith.mulf %15, %15 : vector<1024x128xf32>
    %cst_10 = arith.constant dense<0.000000e+00> : vector<128xf32>
    %20 = vector.multi_reduction <add>, %19, %cst_10 [0] : vector<1024x128xf32> to vector<128xf32>
    %21 = vector.shape_cast %20 : vector<128xf32> to vector<1x128xf32>
    %22 = tpu.concatenate %18, %21 in 0 : vector<1x128xf32>, vector<1x128xf32> -> vector<2x128xf32>
    %23 = vector.shape_cast %22 : vector<2x128xf32> to vector<1x2x128xf32>
    %c0_11 = arith.constant 0 : index
    %c0_12 = arith.constant 0 : index
    %c0_13 = arith.constant 0 : index
    %24 = vector.load %arg5[%c0_11, %c0_12, %c0_13] : memref<1x2x128xf32, #tpu.memory_space<vmem>>, vector<1x2x128xf32>
    tpu.vector_store %arg5[%c0_11, %c0_12, %c0_13], %23 {strides = array<i32>} : memref<1x2x128xf32, #tpu.memory_space<vmem>>, vector<1x2x128xf32>,
    return
  }
  func.func @transform_0(%arg0: i32) -> (i32, i32) {
    %c0_i32 = arith.constant 0 : i32
    %c0_i32_0 = arith.constant 0 : i32
    return %arg0, %c0_i32 : i32, i32
  }
  func.func @transform_1(%arg0: i32) -> (i32, i32) {
    %c0_i32 = arith.constant 0 : i32
    %c0_i32_0 = arith.constant 0 : i32
    %c0_i32_1 = arith.constant 0 : i32
    return %c0_i32, %c0_i32_0 : i32, i32
  }
  func.func @transform_2(%arg0: i32) -> (i32, i32) {
    %c0_i32 = arith.constant 0 : i32
    %c0_i32_0 = arith.constant 0 : i32
    %c0_i32_1 = arith.constant 0 : i32
    return %c0_i32, %c0_i32_0 : i32, i32
  }
  func.func @transform_3(%arg0: i32) -> (i32, i32) {
    %c0_i32 = arith.constant 0 : i32
    %c0_i32_0 = arith.constant 0 : i32
    return %arg0, %c0_i32 : i32, i32
  }
  func.func @transform_4(%arg0: i32) -> (i32, i32, i32) {
    %c0_i32 = arith.constant 0 : i32
    %c0_i32_0 = arith.constant 0 : i32
    %c0_i32_1 = arith.constant 0 : i32
    return %arg0, %c0_i32, %c0_i32_0 : i32, i32, i32
  }
}

module attributes {stable_mosaic.version = 11 : i64} {
  func.func @_conv_kernel(%arg0: i32, %arg1: memref<1024x128xf32, #tpu.memory_space<vmem>>, %arg2: memref<128x128xf32, #tpu.memory_space<vmem>>, %arg3: memref<1x128xf32, #tpu.memory_space<vmem>>, %arg4: memref<1024x128xf32, #tpu.memory_space<vmem>>) attributes {dimension_semantics = [#tpu.dimension_semantics<parallel>], iteration_bounds = array<i64: 8>, scalar_prefetch = 0 : i64, scratch_operands = 0 : i64, tpu.core_type = #tpu.core_type<tc>, window_params = [{transform_indices = @transform_0, window_bounds = array<i64: 1024, 128>}, {pipeline_mode = #tpu.pipeline_mode<synchronous>, transform_indices = @transform_1, window_bounds = array<i64: 128, 128>}, {pipeline_mode = #tpu.pipeline_mode<synchronous>, transform_indices = @transform_2, window_bounds = array<i64: 1, 128>}, {transform_indices = @transform_3, window_bounds = array<i64: 1024, 128>}]} {
    %c0 = arith.constant 0 : index
    %c0_0 = arith.constant 0 : index
    %0 = vector.load %arg1[%c0, %c0_0] : memref<1024x128xf32, #tpu.memory_space<vmem>>, vector<1024x128xf32>
    %c0_1 = arith.constant 0 : index
    %c0_2 = arith.constant 0 : index
    %1 = vector.load %arg2[%c0_1, %c0_2] : memref<128x128xf32, #tpu.memory_space<vmem>>, vector<128x128xf32>
    %cst = arith.constant dense<0.000000e+00> : vector<1024x128xf32>
    %2 = tpu.matmul %0, %1, %cst {dimension_numbers = #tpu.dot_dimension_numbers<[1], [0], [0], [1], [0, 0, 1, 1], [], []>} : vector<1024x128xf32>, vector<128x128xf32>, vector<1024x128xf32> -> vector<1024x128xf32>
    %c0_3 = arith.constant 0 : index
    %c0_4 = arith.constant 0 : index
    %3 = vector.load %arg3[%c0_3, %c0_4] : memref<1x128xf32, #tpu.memory_space<vmem>>, vector<1x128xf32>
    %4 = vector.broadcast %3 : vector<1x128xf32> to vector<1024x128xf32>
    %5 = arith.addf %2, %4 : vector<1024x128xf32>
    %c0_5 = arith.constant 0 : index
    %c0_6 = arith.constant 0 : index
    %6 = vector.load %arg4[%c0_5, %c0_6] : memref<1024x128xf32, #tpu.memory_space<vmem>>, vector<1024x128xf32>
    tpu.vector_store %arg4[%c0_5, %c0_6], %5 {strides = array<i32>} : memref<1024x128xf32, #tpu.memory_space<vmem>>, vector<1024x128xf32>,
    return
  }
  func.func @transform_0(%arg0: i32) -> (i32, i32) {
    %c0_i32 = arith.constant 0 : i32
    %c0_i32_0 = arith.constant 0 : i32
    return %arg0, %c0_i32 : i32, i32
  }
  func.func @transform_1(%arg0: i32) -> (i32, i32) {
    %c0_i32 = arith.constant 0 : i32
    %c0_i32_0 = arith.constant 0 : i32
    %c0_i32_1 = arith.constant 0 : i32
    return %c0_i32, %c0_i32_0 : i32, i32
  }
  func.func @transform_2(%arg0: i32) -> (i32, i32) {
    %c0_i32 = arith.constant 0 : i32
    %c0_i32_0 = arith.constant 0 : i32
    %c0_i32_1 = arith.constant 0 : i32
    return %c0_i32, %c0_i32_0 : i32, i32
  }
  func.func @transform_3(%arg0: i32) -> (i32, i32) {
    %c0_i32 = arith.constant 0 : i32
    %c0_i32_0 = arith.constant 0 : i32
    return %arg0, %c0_i32 : i32, i32
  }
}

</mosaic_0001>

<llo_original>
// kernel: cong_final_conv_forward.5
$region0: #{cong_final_conv_forward.5}
  #allocation0 [shape = 'u32[]', space=smem, size = 0x4, offset = 0x4, fixed_abs, tag = 'smem constant byte address 0x4 - core index']
  #allocation1 [shape = 'u32[144,128]{1,0:T(1,128)}', space=vmem, size = 0x12000, scoped, tag = 'internal scratch']
  %s0 = inlined_call_operand.vmem [shape: f32[8192,128], index: 0, kind: input, shape index: {}]
  %s1 = inlined_call_operand.vmem [shape: f32[128,128], index: 1, kind: input, shape index: {}]
  %s2 = inlined_call_operand.vmem [shape: f32[1,128], index: 2, kind: input, shape index: {}]
  %s3 = inlined_call_operand.vmem [shape: f32[8192,128], index: 3, kind: output, shape index: {}]
  %s4 = sld [smem:[#allocation0]]
  $region45: #{cong_final_conv_forward.5} parent=0
    _
  %s6 = ssub.s32 1, %s4
  %s7 = scalar_select 0, %s6, %s4
  loop: start=0, step=1, limit=10
  $region2: #{cong_final_conv_forward.5} parent=0 // loop_pre_header
    _
  $region3: #{cong_final_conv_forward.5} parent=0 // loop_header
    %s9 = sphi 0, %s13
    %p10 = scmp.ge.s32.totalorder %s9, 10
    %s19 = sphi 0, %s21
    %s22 = sphi 0, %s19
    %s23 = sphi 0, %s22
    %s39 = sphi 0, %s23
    %s43 = sphi 0, %s43
    %s45 = sphi 0, %s43
    %s46 = sphi 0, %s45
    %s60 = sphi 0, %s46
    %s64 = sphi 0, %s64
    %s66 = sphi 0, %s64
    %s67 = sphi 0, %s66
    %s81 = sphi 0, %s67
    %s87 = sphi 0, %s89
    %s90 = sphi 0, %s87
    %s91 = sphi 0, %s90
    %s107 = sphi 0, %s91
  $region4: #{cong_final_conv_forward.5} parent=0 // loop_header_branch
    %12 = sbr.rel (%p10) target = $region8
  $region5: #{cong_final_conv_forward.5} parent=0 // loop_body
    %s14 = ssub.s32 %s9, 1
    %s15 = ssub.s32 %s9, 2
    %s16 = sadd.s32 %s9, 1
    %s17 = ssub.s32 %s9, %s16
    %p18 = scmp.eq.s32.totalorder %s17, 0
    %s20 = sadd.s32 %s19, 1
    %s21 = scalar_select %p18, %s19, %s20
    %p24 = pneg %p18
    %p25 = scmp.eq.s32.totalorder %s9, 7
    %p26 = por %p24, %p25
    %p27 = scmp.ne.s32.totalorder %s19, %s22
    %p28 = scmp.eq.s32.totalorder %s9, 0
    %p29 = por %p27, %p28
    %p30 = scmp.ne.s32.totalorder %s19, %s22
    %p31 = scmp.eq.s32.totalorder %s14, 7
    %p32 = por %p30, %p31
    %p33 = scmp.ne.s32.totalorder %s22, %s23
    %p34 = scmp.eq.s32.totalorder %s14, 0
    %p35 = por %p33, %p34
    %p36 = scmp.ne.s32.totalorder %s22, %s23
    %p37 = scmp.eq.s32.totalorder %s15, 7
    %p38 = por %p36, %p37
    %p40 = scmp.ne.s32.totalorder %s23, %s39
    %p41 = scmp.eq.s32.totalorder %s15, 0
    %p42 = por %p40, %p41
    %s44 = sadd.s32 %s43, 1
    %p47 = scmp.eq.s32.totalorder %s9, 7
    %p48 = scmp.ne.s32.totalorder %s43, %s45
    %p49 = scmp.eq.s32.totalorder %s9, 0
    %p50 = por %p48, %p49
    %p51 = scmp.ne.s32.totalorder %s43, %s45
    %p52 = scmp.eq.s32.totalorder %s14, 7
    %p53 = por %p51, %p52
    %p54 = scmp.ne.s32.totalorder %s45, %s46
    %p55 = scmp.eq.s32.totalorder %s14, 0
    %p56 = por %p54, %p55
    %p57 = scmp.ne.s32.totalorder %s45, %s46
    %p58 = scmp.eq.s32.totalorder %s15, 7
    %p59 = por %p57, %p58
    %p61 = scmp.ne.s32.totalorder %s46, %s60
    %p62 = scmp.eq.s32.totalorder %s15, 0
    %p63 = por %p61, %p62
    %s65 = sadd.s32 %s64, 1
    %p68 = scmp.eq.s32.totalorder %s9, 7
    %p69 = scmp.ne.s32.totalorder %s64, %s66
    %p70 = scmp.eq.s32.totalorder %s9, 0
    %p71 = por %p69, %p70
    %p72 = scmp.ne.s32.totalorder %s64, %s66
    %p73 = scmp.eq.s32.totalorder %s14, 7
    %p74 = por %p72, %p73
    %p75 = scmp.ne.s32.totalorder %s66, %s67
    %p76 = scmp.eq.s32.totalorder %s14, 0
    %p77 = por %p75, %p76
    %p78 = scmp.ne.s32.totalorder %s66, %s67
    %p79 = scmp.eq.s32.totalorder %s15, 7
    %p80 = por %p78, %p79
    %p82 = scmp.ne.s32.totalorder %s67, %s81
    %p83 = scmp.eq.s32.totalorder %s15, 0
    %p84 = por %p82, %p83
    %s85 = ssub.s32 %s9, %s16
    %p86 = scmp.eq.s32.totalorder %s85, 0
    %s88 = sadd.s32 %s87, 1
    %s89 = scalar_select %p86, %s87, %s88
    %p92 = pneg %p86
    %p93 = scmp.eq.s32.totalorder %s9, 7
    %p94 = por %p92, %p93
    %p95 = scmp.ne.s32.totalorder %s87, %s90
    %p96 = scmp.eq.s32.totalorder %s9, 0
    %p97 = por %p95, %p96
    %p98 = scmp.ne.s32.totalorder %s87, %s90
    %p99 = scmp.eq.s32.totalorder %s14, 7
    %p100 = por %p98, %p99
    %p101 = scmp.ne.s32.totalorder %s90, %s91
    %p102 = scmp.eq.s32.totalorder %s14, 0
    %p103 = por %p101, %p102
    %p104 = scmp.ne.s32.totalorder %s90, %s91
    %p105 = scmp.eq.s32.totalorder %s15, 7
    %p106 = por %p104, %p105
    %p108 = scmp.ne.s32.totalorder %s91, %s107
    %p109 = scmp.eq.s32.totalorder %s15, 0
    %p110 = por %p108, %p109
    %p111 = scmp.le.s32.totalorder 1, %s9
    %p112 = scmp.lt.s32.totalorder %s9, 9
    %p113 = pnand %p111, %p112
    %p114 = pneg %p113
    // Predicated region
    $region9: #{cong_final_conv_forward.5} parent=5 // pred_check
      _
    $region10: #{cong_final_conv_forward.5} parent=5 // pred_check_branch
      %116 = sbr.rel (%p113) target = $region12
    $region11: #{cong_final_conv_forward.5} parent=5 // pred_region
      %s117 = ssub.s32 %s9, 1
      // Predicated region
      $region13: #{cong_final_conv_forward.5} parent=11 // pred_check
        %p118 = pneg %p56
      $region14: #{cong_final_conv_forward.5} parent=11 // pred_check_branch
        %120 = sbr.rel (%p118) target = $region16
      $region15: #{cong_final_conv_forward.5} parent=11 // pred_region
        _
      $region16: #{cong_final_conv_forward.5} parent=11 // pred_fallthru
        _
      // Predicated region
      $region17: #{cong_final_conv_forward.5} parent=11 // pred_check
        %p121 = pneg %p77
      $region18: #{cong_final_conv_forward.5} parent=11 // pred_check_branch
        %123 = sbr.rel (%p121) target = $region20
      $region19: #{cong_final_conv_forward.5} parent=11 // pred_region
        _
      $region20: #{cong_final_conv_forward.5} parent=11 // pred_fallthru
        _
    $region12: #{cong_final_conv_forward.5} parent=5 // pred_fallthru
      _
    %p124 = scmp.lt.s32.totalorder %s9, 8
    // Predicated region
    $region21: #{cong_final_conv_forward.5} parent=5 // pred_check
      %p125 = pneg %p124
    $region22: #{cong_final_conv_forward.5} parent=5 // pred_check_branch
      %127 = sbr.rel (%p125) target = $region24
    $region23: #{cong_final_conv_forward.5} parent=5 // pred_region
      // Predicated region
      $region25: #{cong_final_conv_forward.5} parent=23 // pred_check
        %p128 = pneg %p29
      $region26: #{cong_final_conv_forward.5} parent=23 // pred_check_branch
        %130 = sbr.rel (%p128) target = $region28
      $region27: #{cong_final_conv_forward.5} parent=23 // pred_region
        %s131 = smul.u32 128, %s9
        %p132 = scmp.lt.s32.totalorder %s131, 1023
        %s133 = scalar_select %p132, %s131, 1023
        %s134 = smul.addr %s133, 8
        %s135 = scalar_lea.vmem %s0, %s134
        %s136 = smul.u32 128, %s9
      $region28: #{cong_final_conv_forward.5} parent=23 // pred_fallthru
        _
    $region24: #{cong_final_conv_forward.5} parent=5 // pred_fallthru
      _
    %p137 = scmp.le.s32.totalorder 1, %s9
    %p138 = scmp.lt.s32.totalorder %s9, 9
    %p139 = pnand %p137, %p138
    %p140 = pneg %p139
    // Predicated region
    $region29: #{cong_final_conv_forward.5} parent=5 // pred_check
      _
    $region30: #{cong_final_conv_forward.5} parent=5 // pred_check_branch
      %142 = sbr.rel (%p139) target = $region32
    $region31: #{cong_final_conv_forward.5} parent=5 // pred_region
      %s143 = ssub.s32 %s9, 1
      %s144 = smul.u32 128, %s14
      %p145 = scmp.lt.s32.totalorder %s144, 1023
      %s146 = scalar_select %p145, %s144, 1023
      %s147 = smul.addr %s146, 8
      %s148 = scalar_lea.vmem %s0, %s147
      %p149 = pneg %p35
      %p150 = pneg %p32
      %p151 = pneg %p56
      %p152 = pneg %p53
      %p153 = pneg %p77
      %p154 = pneg %p74
      %p155 = pneg %p103
      %p156 = pneg %p100
      %s157 = smul.u32 128, %s14
      %p158 = scmp.lt.s32.totalorder %s157, 1023
      %s159 = scalar_select %p158, %s157, 1023
      %s160 = smul.addr %s159, 8
      %s161 = scalar_lea.vmem %s3, %s160
      %s162 = smul.u32 128, %s14
      %p163 = scmp.lt.s32.totalorder %s162, 1023
      %s164 = scalar_select %p163, %s162, 1023
      %s165 = smul.addr %s164, 8
      %s166 = scalar_lea.vmem %s0, %s165
      %s167 = smul.u32 128, %s14
      %s168 = smul.u32 128, %s14
      %p169 = scmp.lt.s32.totalorder %s168, 1023
      %s170 = scalar_select %p169, %s168, 1023
      %s171 = smul.addr %s170, 8
      %s172 = scalar_lea.vmem %s3, %s171
      %s173 = smul.u32 128, %s14
      %v174 = vld [vmem:[%s166] sm:$0xff]
      %v175 = vld [vmem:[%s166 + $0x8] sm:$0xff]
      %v176 = vld [vmem:[%s166 + $0x10] sm:$0xff]
      %v177 = vld [vmem:[%s166 + $0x18] sm:$0xff]
      %v178 = vld [vmem:[%s166 + $0x20] sm:$0xff]
      %v179 = vld [vmem:[%s166 + $0x28] sm:$0xff]
      %v180 = vld [vmem:[%s166 + $0x30] sm:$0xff]
      %v181 = vld [vmem:[%s166 + $0x38] sm:$0xff]
      %v182 = vld [vmem:[%s166 + $0x40] sm:$0xff]
      %v183 = vld [vmem:[%s166 + $0x48] sm:$0xff]
      %v184 = vld [vmem:[%s166 + $0x50] sm:$0xff]
      %v185 = vld [vmem:[%s166 + $0x58] sm:$0xff]
      %v186 = vld [vmem:[%s166 + $0x60] sm:$0xff]
      %v187 = vld [vmem:[%s166 + $0x68] sm:$0xff]
      %v188 = vld [vmem:[%s166 + $0x70] sm:$0xff]
      %v189 = vld [vmem:[%s166 + $0x78] sm:$0xff]
      %v190 = vld [vmem:[%s166 + $0x80] sm:$0xff]
      %v191 = vld [vmem:[%s166 + $0x88] sm:$0xff]
      %v192 = vld [vmem:[%s166 + $0x90] sm:$0xff]
      %v193 = vld [vmem:[%s166 + $0x98] sm:$0xff]
      %v194 = vld [vmem:[%s166 + $0xa0] sm:$0xff]
      %v195 = vld [vmem:[%s166 + $0xa8] sm:$0xff]
      %v196 = vld [vmem:[%s166 + $0xb0] sm:$0xff]
      %v197 = vld [vmem:[%s166 + $0xb8] sm:$0xff]
      %v198 = vld [vmem:[%s166 + $0xc0] sm:$0xff]
      %v199 = vld [vmem:[%s166 + $0xc8] sm:$0xff]
      %v200 = vld [vmem:[%s166 + $0xd0] sm:$0xff]
      %v201 = vld [vmem:[%s166 + $0xd8] sm:$0xff]
      %v202 = vld [vmem:[%s166 + $0xe0] sm:$0xff]
      %v203 = vld [vmem:[%s166 + $0xe8] sm:$0xff]
      %v204 = vld [vmem:[%s166 + $0xf0] sm:$0xff]
      %v205 = vld [vmem:[%s166 + $0xf8] sm:$0xff]
      %v206 = vld [vmem:[%s166 + $0x100] sm:$0xff]
      %v207 = vld [vmem:[%s166 + $0x108] sm:$0xff]
      %v208 = vld [vmem:[%s166 + $0x110] sm:$0xff]
      %v209 = vld [vmem:[%s166 + $0x118] sm:$0xff]
      %v210 = vld [vmem:[%s166 + $0x120] sm:$0xff]
      %v211 = vld [vmem:[%s166 + $0x128] sm:$0xff]
      %v212 = vld [vmem:[%s166 + $0x130] sm:$0xff]
      %v213 = vld [vmem:[%s166 + $0x138] sm:$0xff]
      %v214 = vld [vmem:[%s166 + $0x140] sm:$0xff]
      %v215 = vld [vmem:[%s166 + $0x148] sm:$0xff]
      %v216 = vld [vmem:[%s166 + $0x150] sm:$0xff]
      %v217 = vld [vmem:[%s166 + $0x158] sm:$0xff]
      %v218 = vld [vmem:[%s166 + $0x160] sm:$0xff]
      %v219 = vld [vmem:[%s166 + $0x168] sm:$0xff]
      %v220 = vld [vmem:[%s166 + $0x170] sm:$0xff]
      %v221 = vld [vmem:[%s166 + $0x178] sm:$0xff]
      %v222 = vld [vmem:[%s166 + $0x180] sm:$0xff]
      %v223 = vld [vmem:[%s166 + $0x188] sm:$0xff]
      %v224 = vld [vmem:[%s166 + $0x190] sm:$0xff]
      %v225 = vld [vmem:[%s166 + $0x198] sm:$0xff]
      %v226 = vld [vmem:[%s166 + $0x1a0] sm:$0xff]
      %v227 = vld [vmem:[%s166 + $0x1a8] sm:$0xff]
      %v228 = vld [vmem:[%s166 + $0x1b0] sm:$0xff]
      %v229 = vld [vmem:[%s166 + $0x1b8] sm:$0xff]
      %v230 = vld [vmem:[%s166 + $0x1c0] sm:$0xff]
      %v231 = vld [vmem:[%s166 + $0x1c8] sm:$0xff]
      %v232 = vld [vmem:[%s166 + $0x1d0] sm:$0xff]
      %v233 = vld [vmem:[%s166 + $0x1d8] sm:$0xff]
      %v234 = vld [vmem:[%s166 + $0x1e0] sm:$0xff]
      %v235 = vld [vmem:[%s166 + $0x1e8] sm:$0xff]
      %v236 = vld [vmem:[%s166 + $0x1f0] sm:$0xff]
      %v237 = vld [vmem:[%s166 + $0x1f8] sm:$0xff]
      %v238 = vld [vmem:[%s166 + $0x200] sm:$0xff]
      %v239 = vld [vmem:[%s166 + $0x208] sm:$0xff]
      %v240 = vld [vmem:[%s166 + $0x210] sm:$0xff]
      %v241 = vld [vmem:[%s166 + $0x218] sm:$0xff]
      %v242 = vld [vmem:[%s166 + $0x220] sm:$0xff]
      %v243 = vld [vmem:[%s166 + $0x228] sm:$0xff]
      %v244 = vld [vmem:[%s166 + $0x230] sm:$0xff]
      %v245 = vld [vmem:[%s166 + $0x238] sm:$0xff]
      %v246 = vld [vmem:[%s166 + $0x240] sm:$0xff]
      %v247 = vld [vmem:[%s166 + $0x248] sm:$0xff]
      %v248 = vld [vmem:[%s166 + $0x250] sm:$0xff]
      %v249 = vld [vmem:[%s166 + $0x258] sm:$0xff]
      %v250 = vld [vmem:[%s166 + $0x260] sm:$0xff]
      %v251 = vld [vmem:[%s166 + $0x268] sm:$0xff]
      %v252 = vld [vmem:[%s166 + $0x270] sm:$0xff]
      %v253 = vld [vmem:[%s166 + $0x278] sm:$0xff]
      %v254 = vld [vmem:[%s166 + $0x280] sm:$0xff]
      %v255 = vld [vmem:[%s166 + $0x288] sm:$0xff]
      %v256 = vld [vmem:[%s166 + $0x290] sm:$0xff]
      %v257 = vld [vmem:[%s166 + $0x298] sm:$0xff]
      %v258 = vld [vmem:[%s166 + $0x2a0] sm:$0xff]
      %v259 = vld [vmem:[%s166 + $0x2a8] sm:$0xff]
      %v260 = vld [vmem:[%s166 + $0x2b0] sm:$0xff]
      %v261 = vld [vmem:[%s166 + $0x2b8] sm:$0xff]
      %v262 = vld [vmem:[%s166 + $0x2c0] sm:$0xff]
      %v263 = vld [vmem:[%s166 + $0x2c8] sm:$0xff]
      %v264 = vld [vmem:[%s166 + $0x2d0] sm:$0xff]
      %v265 = vld [vmem:[%s166 + $0x2d8] sm:$0xff]
      %v266 = vld [vmem:[%s166 + $0x2e0] sm:$0xff]
      %v267 = vld [vmem:[%s166 + $0x2e8] sm:$0xff]
      %v268 = vld [vmem:[%s166 + $0x2f0] sm:$0xff]
      %v269 = vld [vmem:[%s166 + $0x2f8] sm:$0xff]
      %v270 = vld [vmem:[%s166 + $0x300] sm:$0xff]
      %v271 = vld [vmem:[%s166 + $0x308] sm:$0xff]
      %v272 = vld [vmem:[%s166 + $0x310] sm:$0xff]
      %v273 = vld [vmem:[%s166 + $0x318] sm:$0xff]
      %v274 = vld [vmem:[%s166 + $0x320] sm:$0xff]
      %v275 = vld [vmem:[%s166 + $0x328] sm:$0xff]
      %v276 = vld [vmem:[%s166 + $0x330] sm:$0xff]
      %v277 = vld [vmem:[%s166 + $0x338] sm:$0xff]
      %v278 = vld [vmem:[%s166 + $0x340] sm:$0xff]
      %v279 = vld [vmem:[%s166 + $0x348] sm:$0xff]
      %v280 = vld [vmem:[%s166 + $0x350] sm:$0xff]
      %v281 = vld [vmem:[%s166 + $0x358] sm:$0xff]
      %v282 = vld [vmem:[%s166 + $0x360] sm:$0xff]
      %v283 = vld [vmem:[%s166 + $0x368] sm:$0xff]
      %v284 = vld [vmem:[%s166 + $0x370] sm:$0xff]
      %v285 = vld [vmem:[%s166 + $0x378] sm:$0xff]
      %v286 = vld [vmem:[%s166 + $0x380] sm:$0xff]
      %v287 = vld [vmem:[%s166 + $0x388] sm:$0xff]
      %v288 = vld [vmem:[%s166 + $0x390] sm:$0xff]
      %v289 = vld [vmem:[%s166 + $0x398] sm:$0xff]
      %v290 = vld [vmem:[%s166 + $0x3a0] sm:$0xff]
      %v291 = vld [vmem:[%s166 + $0x3a8] sm:$0xff]
      %v292 = vld [vmem:[%s166 + $0x3b0] sm:$0xff]
      %v293 = vld [vmem:[%s166 + $0x3b8] sm:$0xff]
      %v294 = vld [vmem:[%s166 + $0x3c0] sm:$0xff]
      %v295 = vld [vmem:[%s166 + $0x3c8] sm:$0xff]
      %v296 = vld [vmem:[%s166 + $0x3d0] sm:$0xff]
      %v297 = vld [vmem:[%s166 + $0x3d8] sm:$0xff]
      %v298 = vld [vmem:[%s166 + $0x3e0] sm:$0xff]
      %v299 = vld [vmem:[%s166 + $0x3e8] sm:$0xff]
      %v300 = vld [vmem:[%s166 + $0x3f0] sm:$0xff]
      %v301 = vld [vmem:[%s166 + $0x3f8] sm:$0xff]
      %v302 = vld [vmem:[%s1] sm:$0xff]
      %v303 = vld [vmem:[%s1 + $0x8] sm:$0xff]
      %v304 = vld [vmem:[%s1 + $0x10] sm:$0xff]
      %v305 = vld [vmem:[%s1 + $0x18] sm:$0xff]
      %v306 = vld [vmem:[%s1 + $0x20] sm:$0xff]
      %v307 = vld [vmem:[%s1 + $0x28] sm:$0xff]
      %v308 = vld [vmem:[%s1 + $0x30] sm:$0xff]
      %v309 = vld [vmem:[%s1 + $0x38] sm:$0xff]
      %v310 = vld [vmem:[%s1 + $0x40] sm:$0xff]
      %v311 = vld [vmem:[%s1 + $0x48] sm:$0xff]
      %v312 = vld [vmem:[%s1 + $0x50] sm:$0xff]
      %v313 = vld [vmem:[%s1 + $0x58] sm:$0xff]
      %v314 = vld [vmem:[%s1 + $0x60] sm:$0xff]
      %v315 = vld [vmem:[%s1 + $0x68] sm:$0xff]
      %v316 = vld [vmem:[%s1 + $0x70] sm:$0xff]
      %v317 = vld [vmem:[%s1 + $0x78] sm:$0xff]
      %v318 = vld [vmem:[%s2] sm:$0x1]
      %v320 = vlaneseq
      %v321 = vshrl.u32 %v320, 7
      %v322 = vsub.s32 0, %v321
      %v323 = vrot.slane %v318, %v322
      %325 = vmatprep.subr.mxu0 0.0
      %326 = vmatpush1.msra.mxu0 %v302
      %327 = vmatprep.subr.mxu0 0.0
      %328 = vmatpush1.msra.mxu0 %v303
      %329 = vmatprep.subr.mxu0 0.0
      %330 = vmatpush1.msra.mxu0 %v304
      %331 = vmatprep.subr.mxu0 0.0
      %332 = vmatpush1.msra.mxu0 %v305
      %333 = vmatprep.subr.mxu0 0.0
      %334 = vmatpush1.msra.mxu0 %v306
      %335 = vmatprep.subr.mxu0 0.0
      %336 = vmatpush1.msra.mxu0 %v307
      %337 = vmatprep.subr.mxu0 0.0
      %338 = vmatpush1.msra.mxu0 %v308
      %339 = vmatprep.subr.mxu0 0.0
      %340 = vmatpush1.msra.mxu0 %v309
      %341 = vmatprep.subr.mxu0 0.0
      %342 = vmatpush1.msra.mxu0 %v310
      %343 = vmatprep.subr.mxu0 0.0
      %344 = vmatpush1.msra.mxu0 %v311
      %345 = vmatprep.subr.mxu0 0.0
      %346 = vmatpush1.msra.mxu0 %v312
      %347 = vmatprep.subr.mxu0 0.0
      %348 = vmatpush1.msra.mxu0 %v313
      %349 = vmatprep.subr.mxu0 0.0
      %350 = vmatpush1.msra.mxu0 %v314
      %351 = vmatprep.subr.mxu0 0.0
      %352 = vmatpush1.msra.mxu0 %v315
      %353 = vmatprep.subr.mxu0 0.0
      %354 = vmatpush1.msra.mxu0 %v316
      %355 = vmatprep.subr.mxu0 0.0
      %356 = vmatpush1.msra.mxu0 %v317
      %357 = vmatprep.subr.mxu0 0.0
      %358 = vmatpush1.msra.mxu0 0.0
      %359 = vmatprep.subr.mxu0 0.0
      %360 = vmatpush1.msra.mxu0 0.0
      %361 = vmatprep.subr.mxu0 0.0
      %362 = vmatpush1.msra.mxu0 0.0
      %363 = vmatprep.subr.mxu0 0.0
      %364 = vmatpush1.msra.mxu0 0.0
      %365 = vmatprep.subr.mxu0 0.0
      %366 = vmatpush1.msra.mxu0 0.0
      %367 = vmatprep.subr.mxu0 0.0
      %368 = vmatpush1.msra.mxu0 0.0
      %369 = vmatprep.subr.mxu0 0.0
      %370 = vmatpush1.msra.mxu0 0.0
      %371 = vmatprep.subr.mxu0 0.0
      %372 = vmatpush1.msra.mxu0 0.0
      %373 = vmatprep.subr.mxu0 0.0
      %374 = vmatpush1.msra.mxu0 0.0
      %375 = vmatprep.subr.mxu0 0.0
      %376 = vmatpush1.msra.mxu0 0.0
      %377 = vmatprep.subr.mxu0 0.0
      %378 = vmatpush1.msra.mxu0 0.0
      %379 = vmatprep.subr.mxu0 0.0
      %380 = vmatpush1.msra.mxu0 0.0
      %381 = vmatprep.subr.mxu0 0.0
      %382 = vmatpush1.msra.mxu0 0.0
      %383 = vmatprep.subr.mxu0 0.0
      %384 = vmatpush1.msra.mxu0 0.0
      %385 = vmatprep.subr.mxu0 0.0
      %386 = vmatpush1.msra.mxu0 0.0
      %387 = vmatprep.subr.mxu0 0.0
      %388 = vmatpush1.msra.mxu0 0.0
      %389 = vmatprep.mubr.f32.mxu0 0.0
      %390 = vmatmul.mubr.f32.gmra.mrb[0].mxu0 %v174
      %v391 = vpop.f32.mrb[0].mxu0
      %v392 = vadd.f32 %v323, %v391
      %v393 = vpop.f32.mrb[0].mxu0
      %394 = vmatprep.mubr.f32.mxu0 0.0
      %395 = vmatmul.mubr.f32.gmra.mrb[0].mxu0 %v175
      %v396 = vpop.f32.mrb[0].mxu0
      %v397 = vadd.f32 %v323, %v396
      %v398 = vpop.f32.mrb[0].mxu0
      %399 = vmatprep.mubr.f32.mxu0 0.0
      %400 = vmatmul.mubr.f32.gmra.mrb[0].mxu0 %v176
      %v401 = vpop.f32.mrb[0].mxu0
      %v402 = vadd.f32 %v323, %v401
      %v403 = vpop.f32.mrb[0].mxu0
      %404 = vmatprep.mubr.f32.mxu0 0.0
      %405 = vmatmul.mubr.f32.gmra.mrb[0].mxu0 %v177
      %v406 = vpop.f32.mrb[0].mxu0
      %v407 = vadd.f32 %v323, %v406
      %v408 = vpop.f32.mrb[0].mxu0
      %409 = vmatprep.mubr.f32.mxu0 0.0
      %410 = vmatmul.mubr.f32.gmra.mrb[0].mxu0 %v178
      %v411 = vpop.f32.mrb[0].mxu0
      %v412 = vadd.f32 %v323, %v411
      %v413 = vpop.f32.mrb[0].mxu0
      %414 = vmatprep.mubr.f32.mxu0 0.0
      %415 = vmatmul.mubr.f32.gmra.mrb[0].mxu0 %v179
      %v416 = vpop.f32.mrb[0].mxu0
      %v417 = vadd.f32 %v323, %v416
      %v418 = vpop.f32.mrb[0].mxu0
      %419 = vmatprep.mubr.f32.mxu0 0.0
      %420 = vmatmul.mubr.f32.gmra.mrb[0].mxu0 %v180
      %v421 = vpop.f32.mrb[0].mxu0
      %v422 = vadd.f32 %v323, %v421
      %v423 = vpop.f32.mrb[0].mxu0
      %424 = vmatprep.mubr.f32.mxu0 0.0
      %425 = vmatmul.mubr.f32.gmra.mrb[0].mxu0 %v181
      %v426 = vpop.f32.mrb[0].mxu0
      %v427 = vadd.f32 %v323, %v426
      %v428 = vpop.f32.mrb[0].mxu0
      %429 = vmatprep.mubr.f32.mxu0 0.0
      %430 = vmatmul.mubr.f32.gmra.mrb[0].mxu0 %v182
      %v431 = vpop.f32.mrb[0].mxu0
      %v432 = vadd.f32 %v323, %v431
      %v433 = vpop.f32.mrb[0].mxu0
      %434 = vmatprep.mubr.f32.mxu0 0.0
      %435 = vmatmul.mubr.f32.gmra.mrb[0].mxu0 %v183
      %v436 = vpop.f32.mrb[0].mxu0
      %v437 = vadd.f32 %v323, %v436
      %v438 = vpop.f32.mrb[0].mxu0
      %439 = vmatprep.mubr.f32.mxu0 0.0
      %440 = vmatmul.mubr.f32.gmra.mrb[0].mxu0 %v184
      %v441 = vpop.f32.mrb[0].mxu0
      %v442 = vadd.f32 %v323, %v441
      %v443 = vpop.f32.mrb[0].mxu0
      %444 = vmatprep.mubr.f32.mxu0 0.0
      %445 = vmatmul.mubr.f32.gmra.mrb[0].mxu0 %v185
      %v446 = vpop.f32.mrb[0].mxu0
      %v447 = vadd.f32 %v323, %v446
      %v448 = vpop.f32.mrb[0].mxu0
      %449 = vmatprep.mubr.f32.mxu0 0.0
      %450 = vmatmul.mubr.f32.gmra.mrb[0].mxu0 %v186
      %v451 = vpop.f32.mrb[0].mxu0
      %v452 = vadd.f32 %v323, %v451
      %v453 = vpop.f32.mrb[0].mxu0
      %454 = vmatprep.mubr.f32.mxu0 0.0
      %455 = vmatmul.mubr.f32.gmra.mrb[0].mxu0 %v187
      %v456 = vpop.f32.mrb[0].mxu0
      %v457 = vadd.f32 %v323, %v456
      %v458 = vpop.f32.mrb[0].mxu0
      %459 = vmatprep.mubr.f32.mxu0 0.0
      %460 = vmatmul.mubr.f32.gmra.mrb[0].mxu0 %v188
      %v461 = vpop.f32.mrb[0].mxu0
      %v462 = vadd.f32 %v323, %v461
      %v463 = vpop.f32.mrb[0].mxu0
      %464 = vmatprep.mubr.f32.mxu0 0.0
      %465 = vmatmul.mubr.f32.gmra.mrb[0].mxu0 %v189
      %v466 = vpop.f32.mrb[0].mxu0
      %v467 = vadd.f32 %v323, %v466
      %v468 = vpop.f32.mrb[0].mxu0
      %469 = vmatprep.mubr.f32.mxu0 0.0
      %470 = vmatmul.mubr.f32.gmra.mrb[0].mxu0 %v190
      %v471 = vpop.f32.mrb[0].mxu0
      %v472 = vadd.f32 %v323, %v471
      %v473 = vpop.f32.mrb[0].mxu0
      %474 = vmatprep.mubr.f32.mxu0 0.0
      %475 = vmatmul.mubr.f32.gmra.mrb[0].mxu0 %v191
      %v476 = vpop.f32.mrb[0].mxu0
      %v477 = vadd.f32 %v323, %v476
      %v478 = vpop.f32.mrb[0].mxu0
      %479 = vmatprep.mubr.f32.mxu0 0.0
      %480 = vmatmul.mubr.f32.gmra.mrb[0].mxu0 %v192
      %v481 = vpop.f32.mrb[0].mxu0
      %v482 = vadd.f32 %v323, %v481
      %v483 = vpop.f32.mrb[0].mxu0
      %484 = vmatprep.mubr.f32.mxu0 0.0
      %485 = vmatmul.mubr.f32.gmra.mrb[0].mxu0 %v193
      %v486 = vpop.f32.mrb[0].mxu0
      %v487 = vadd.f32 %v323, %v486
      %v488 = vpop.f32.mrb[0].mxu0
      %489 = vmatprep.mubr.f32.mxu0 0.0
      %490 = vmatmul.mubr.f32.gmra.mrb[0].mxu0 %v194
      %v491 = vpop.f32.mrb[0].mxu0
      %v492 = vadd.f32 %v323, %v491
      %v493 = vpop.f32.mrb[0].mxu0
      %494 = vmatprep.mubr.f32.mxu0 0.0
      %495 = vmatmul.mubr.f32.gmra.mrb[0].mxu0 %v195
      %v496 = vpop.f32.mrb[0].mxu0
      %v497 = vadd.f32 %v323, %v496
      %v498 = vpop.f32.mrb[0].mxu0
      %499 = vmatprep.mubr.f32.mxu0 0.0
      %500 = vmatmul.mubr.f32.gmra.mrb[0].mxu0 %v196
      %v501 = vpop.f32.mrb[0].mxu0
      %v502 = vadd.f32 %v323, %v501
      %v503 = vpop.f32.mrb[0].mxu0
      %504 = vmatprep.mubr.f32.mxu0 0.0
      %505 = vmatmul.mubr.f32.gmra.mrb[0].mxu0 %v197
      %v506 = vpop.f32.mrb[0].mxu0
      %v507 = vadd.f32 %v323, %v506
      %v508 = vpop.f32.mrb[0].mxu0
      %509 = vmatprep.mubr.f32.mxu0 0.0
      %510 = vmatmul.mubr.f32.gmra.mrb[0].mxu0 %v198
      %v511 = vpop.f32.mrb[0].mxu0
      %v512 = vadd.f32 %v323, %v511
      %v513 = vpop.f32.mrb[0].mxu0
      %514 = vmatprep.mubr.f32.mxu0 0.0
      %515 = vmatmul.mubr.f32.gmra.mrb[0].mxu0 %v199
      %v516 = vpop.f32.mrb[0].mxu0
      %v517 = vadd.f32 %v323, %v516
      %v518 = vpop.f32.mrb[0].mxu0
      %519 = vmatprep.mubr.f32.mxu0 0.0
      %520 = vmatmul.mubr.f32.gmra.mrb[0].mxu0 %v200
      %v521 = vpop.f32.mrb[0].mxu0
      %v522 = vadd.f32 %v323, %v521
      %v523 = vpop.f32.mrb[0].mxu0
      %524 = vmatprep.mubr.f32.mxu0 0.0
      %525 = vmatmul.mubr.f32.gmra.mrb[0].mxu0 %v201
      %v526 = vpop.f32.mrb[0].mxu0
      %v527 = vadd.f32 %v323, %v526
      %v528 = vpop.f32.mrb[0].mxu0
      %529 = vmatprep.mubr.f32.mxu0 0.0
      %530 = vmatmul.mubr.f32.gmra.mrb[0].mxu0 %v202
      %v531 = vpop.f32.mrb[0].mxu0
      %v532 = vadd.f32 %v323, %v531
      %v533 = vpop.f32.mrb[0].mxu0
      %534 = vmatprep.mubr.f32.mxu0 0.0
      %535 = vmatmul.mubr.f32.gmra.mrb[0].mxu0 %v203
      %v536 = vpop.f32.mrb[0].mxu0
      %v537 = vadd.f32 %v323, %v536
      %v538 = vpop.f32.mrb[0].mxu0
      %539 = vmatprep.mubr.f32.mxu0 0.0
      %540 = vmatmul.mubr.f32.gmra.mrb[0].mxu0 %v204
      %v541 = vpop.f32.mrb[0].mxu0
      %v542 = vadd.f32 %v323, %v541
      %v543 = vpop.f32.mrb[0].mxu0
      %544 = vmatprep.mubr.f32.mxu0 0.0
      %545 = vmatmul.mubr.f32.gmra.mrb[0].mxu0 %v205
      %v546 = vpop.f32.mrb[0].mxu0
      %v547 = vadd.f32 %v323, %v546
      %v548 = vpop.f32.mrb[0].mxu0
      %549 = vmatprep.mubr.f32.mxu0 0.0
      %550 = vmatmul.mubr.f32.gmra.mrb[0].mxu0 %v206
      %v551 = vpop.f32.mrb[0].mxu0
      %v552 = vadd.f32 %v323, %v551
      %v553 = vpop.f32.mrb[0].mxu0
      %554 = vmatprep.mubr.f32.mxu0 0.0
      %555 = vmatmul.mubr.f32.gmra.mrb[0].mxu0 %v207
      %v556 = vpop.f32.mrb[0].mxu0
      %v557 = vadd.f32 %v323, %v556
      %v558 = vpop.f32.mrb[0].mxu0
      %559 = vmatprep.mubr.f32.mxu0 0.0
      %560 = vmatmul.mubr.f32.gmra.mrb[0].mxu0 %v208
      %v561 = vpop.f32.mrb[0].mxu0
      %v562 = vadd.f32 %v323, %v561
      %v563 = vpop.f32.mrb[0].mxu0
      %564 = vmatprep.mubr.f32.mxu0 0.0
      %565 = vmatmul.mubr.f32.gmra.mrb[0].mxu0 %v209
      %v566 = vpop.f32.mrb[0].mxu0
      %v567 = vadd.f32 %v323, %v566
      %v568 = vpop.f32.mrb[0].mxu0
      %569 = vmatprep.mubr.f32.mxu0 0.0
      %570 = vmatmul.mubr.f32.gmra.mrb[0].mxu0 %v210
      %v571 = vpop.f32.mrb[0].mxu0
      %v572 = vadd.f32 %v323, %v571
      %v573 = vpop.f32.mrb[0].mxu0
      %574 = vmatprep.mubr.f32.mxu0 0.0
      %575 = vmatmul.mubr.f32.gmra.mrb[0].mxu0 %v211
      %v576 = vpop.f32.mrb[0].mxu0
      %v577 = vadd.f32 %v323, %v576
      %v578 = vpop.f32.mrb[0].mxu0
      %579 = vmatprep.mubr.f32.mxu0 0.0
      %580 = vmatmul.mubr.f32.gmra.mrb[0].mxu0 %v212
      %v581 = vpop.f32.mrb[0].mxu0
      %v582 = vadd.f32 %v323, %v581
      %v583 = vpop.f32.mrb[0].mxu0
      %584 = vmatprep.mubr.f32.mxu0 0.0
      %585 = vmatmul.mubr.f32.gmra.mrb[0].mxu0 %v213
      %v586 = vpop.f32.mrb[0].mxu0
      %v587 = vadd.f32 %v323, %v586
      %v588 = vpop.f32.mrb[0].mxu0
      %589 = vmatprep.mubr.f32.mxu0 0.0
      %590 = vmatmul.mubr.f32.gmra.mrb[0].mxu0 %v214
      %v591 = vpop.f32.mrb[0].mxu0
      %v592 = vadd.f32 %v323, %v591
      %v593 = vpop.f32.mrb[0].mxu0
      %594 = vmatprep.mubr.f32.mxu0 0.0
      %595 = vmatmul.mubr.f32.gmra.mrb[0].mxu0 %v215
      %v596 = vpop.f32.mrb[0].mxu0
      %v597 = vadd.f32 %v323, %v596
      %v598 = vpop.f32.mrb[0].mxu0
      %599 = vmatprep.mubr.f32.mxu0 0.0
      %600 = vmatmul.mubr.f32.gmra.mrb[0].mxu0 %v216
      %v601 = vpop.f32.mrb[0].mxu0
      %v602 = vadd.f32 %v323, %v601
      %v603 = vpop.f32.mrb[0].mxu0
      %604 = vmatprep.mubr.f32.mxu0 0.0
      %605 = vmatmul.mubr.f32.gmra.mrb[0].mxu0 %v217
      %v606 = vpop.f32.mrb[0].mxu0
      %v607 = vadd.f32 %v323, %v606
      %v608 = vpop.f32.mrb[0].mxu0
      %609 = vmatprep.mubr.f32.mxu0 0.0
      %610 = vmatmul.mubr.f32.gmra.mrb[0].mxu0 %v218
      %v611 = vpop.f32.mrb[0].mxu0
      %v612 = vadd.f32 %v323, %v611
      %v613 = vpop.f32.mrb[0].mxu0
      %614 = vmatprep.mubr.f32.mxu0 0.0
      %615 = vmatmul.mubr.f32.gmra.mrb[0].mxu0 %v219
      %v616 = vpop.f32.mrb[0].mxu0
      %v617 = vadd.f32 %v323, %v616
      %v618 = vpop.f32.mrb[0].mxu0
      %619 = vmatprep.mubr.f32.mxu0 0.0
      %620 = vmatmul.mubr.f32.gmra.mrb[0].mxu0 %v220
      %v621 = vpop.f32.mrb[0].mxu0
      %v622 = vadd.f32 %v323, %v621
      %v623 = vpop.f32.mrb[0].mxu0
      %624 = vmatprep.mubr.f32.mxu0 0.0
      %625 = vmatmul.mubr.f32.gmra.mrb[0].mxu0 %v221
      %v626 = vpop.f32.mrb[0].mxu0
      %v627 = vadd.f32 %v323, %v626
      %v628 = vpop.f32.mrb[0].mxu0
      %629 = vmatprep.mubr.f32.mxu0 0.0
      %630 = vmatmul.mubr.f32.gmra.mrb[0].mxu0 %v222
      %v631 = vpop.f32.mrb[0].mxu0
      %v632 = vadd.f32 %v323, %v631
      %v633 = vpop.f32.mrb[0].mxu0
      %634 = vmatprep.mubr.f32.mxu0 0.0
      %635 = vmatmul.mubr.f32.gmra.mrb[0].mxu0 %v223
      %v636 = vpop.f32.mrb[0].mxu0
      %v637 = vadd.f32 %v323, %v636
      %v638 = vpop.f32.mrb[0].mxu0
      %639 = vmatprep.mubr.f32.mxu0 0.0
      %640 = vmatmul.mubr.f32.gmra.mrb[0].mxu0 %v224
      %v641 = vpop.f32.mrb[0].mxu0
      %v642 = vadd.f32 %v323, %v641
      %v643 = vpop.f32.mrb[0].mxu0
      %644 = vmatprep.mubr.f32.mxu0 0.0
      %645 = vmatmul.mubr.f32.gmra.mrb[0].mxu0 %v225
      %v646 = vpop.f32.mrb[0].mxu0
      %v647 = vadd.f32 %v323, %v646
      %v648 = vpop.f32.mrb[0].mxu0
      %649 = vmatprep.mubr.f32.mxu0 0.0
      %650 = vmatmul.mubr.f32.gmra.mrb[0].mxu0 %v226
      %v651 = vpop.f32.mrb[0].mxu0
      %v652 = vadd.f32 %v323, %v651
      %v653 = vpop.f32.mrb[0].mxu0
      %654 = vmatprep.mubr.f32.mxu0 0.0
      %655 = vmatmul.mubr.f32.gmra.mrb[0].mxu0 %v227
      %v656 = vpop.f32.mrb[0].mxu0
      %v657 = vadd.f32 %v323, %v656
      %v658 = vpop.f32.mrb[0].mxu0
      %659 = vmatprep.mubr.f32.mxu0 0.0
      %660 = vmatmul.mubr.f32.gmra.mrb[0].mxu0 %v228
      %v661 = vpop.f32.mrb[0].mxu0
      %v662 = vadd.f32 %v323, %v661
      %v663 = vpop.f32.mrb[0].mxu0
      %664 = vmatprep.mubr.f32.mxu0 0.0
      %665 = vmatmul.mubr.f32.gmra.mrb[0].mxu0 %v229
      %v666 = vpop.f32.mrb[0].mxu0
      %v667 = vadd.f32 %v323, %v666
      %v668 = vpop.f32.mrb[0].mxu0
      %669 = vmatprep.mubr.f32.mxu0 0.0
      %670 = vmatmul.mubr.f32.gmra.mrb[0].mxu0 %v230
      %v671 = vpop.f32.mrb[0].mxu0
      %v672 = vadd.f32 %v323, %v671
      %v673 = vpop.f32.mrb[0].mxu0
      %674 = vmatprep.mubr.f32.mxu0 0.0
      %675 = vmatmul.mubr.f32.gmra.mrb[0].mxu0 %v231
      %v676 = vpop.f32.mrb[0].mxu0
      %v677 = vadd.f32 %v323, %v676
      %v678 = vpop.f32.mrb[0].mxu0
      %679 = vmatprep.mubr.f32.mxu0 0.0
      %680 = vmatmul.mubr.f32.gmra.mrb[0].mxu0 %v232
      %v681 = vpop.f32.mrb[0].mxu0
      %v682 = vadd.f32 %v323, %v681
      %v683 = vpop.f32.mrb[0].mxu0
      %684 = vmatprep.mubr.f32.mxu0 0.0
      %685 = vmatmul.mubr.f32.gmra.mrb[0].mxu0 %v233
      %v686 = vpop.f32.mrb[0].mxu0
      %v687 = vadd.f32 %v323, %v686
      %v688 = vpop.f32.mrb[0].mxu0
      %689 = vmatprep.mubr.f32.mxu0 0.0
      %690 = vmatmul.mubr.f32.gmra.mrb[0].mxu0 %v234
      %v691 = vpop.f32.mrb[0].mxu0
      %v692 = vadd.f32 %v323, %v691
      %v693 = vpop.f32.mrb[0].mxu0
      %694 = vmatprep.mubr.f32.mxu0 0.0
      %695 = vmatmul.mubr.f32.gmra.mrb[0].mxu0 %v235
      %v696 = vpop.f32.mrb[0].mxu0
      %v697 = vadd.f32 %v323, %v696
      %v698 = vpop.f32.mrb[0].mxu0
      %699 = vmatprep.mubr.f32.mxu0 0.0
      %700 = vmatmul.mubr.f32.gmra.mrb[0].mxu0 %v236
      %v701 = vpop.f32.mrb[0].mxu0
      %v702 = vadd.f32 %v323, %v701
      %v703 = vpop.f32.mrb[0].mxu0
      %704 = vmatprep.mubr.f32.mxu0 0.0
      %705 = vmatmul.mubr.f32.gmra.mrb[0].mxu0 %v237
      %v706 = vpop.f32.mrb[0].mxu0
      %v707 = vadd.f32 %v323, %v706
      %v708 = vpop.f32.mrb[0].mxu0
      %709 = vmatprep.mubr.f32.mxu0 0.0
      %710 = vmatmul.mubr.f32.gmra.mrb[0].mxu0 %v238
      %v711 = vpop.f32.mrb[0].mxu0
      %v712 = vadd.f32 %v323, %v711
      %v713 = vpop.f32.mrb[0].mxu0
      %714 = vmatprep.mubr.f32.mxu0 0.0
      %715 = vmatmul.mubr.f32.gmra.mrb[0].mxu0 %v239
      %v716 = vpop.f32.mrb[0].mxu0
      %v717 = vadd.f32 %v323, %v716
      %v718 = vpop.f32.mrb[0].mxu0
      %719 = vmatprep.mubr.f32.mxu0 0.0
      %720 = vmatmul.mubr.f32.gmra.mrb[0].mxu0 %v240
      %v721 = vpop.f32.mrb[0].mxu0
      %v722 = vadd.f32 %v323, %v721
      %v723 = vpop.f32.mrb[0].mxu0
      %724 = vmatprep.mubr.f32.mxu0 0.0
      %725 = vmatmul.mubr.f32.gmra.mrb[0].mxu0 %v241
      %v726 = vpop.f32.mrb[0].mxu0
      %v727 = vadd.f32 %v323, %v726
      %v728 = vpop.f32.mrb[0].mxu0
      %729 = vmatprep.mubr.f32.mxu0 0.0
      %730 = vmatmul.mubr.f32.gmra.mrb[0].mxu0 %v242
      %v731 = vpop.f32.mrb[0].mxu0
      %v732 = vadd.f32 %v323, %v731
      %v733 = vpop.f32.mrb[0].mxu0
      %734 = vmatprep.mubr.f32.mxu0 0.0
      %735 = vmatmul.mubr.f32.gmra.mrb[0].mxu0 %v243
      %v736 = vpop.f32.mrb[0].mxu0
      %v737 = vadd.f32 %v323, %v736
      %v738 = vpop.f32.mrb[0].mxu0
      %739 = vmatprep.mubr.f32.mxu0 0.0
      %740 = vmatmul.mubr.f32.gmra.mrb[0].mxu0 %v244
      %v741 = vpop.f32.mrb[0].mxu0
      %v742 = vadd.f32 %v323, %v741
      %v743 = vpop.f32.mrb[0].mxu0
      %744 = vmatprep.mubr.f32.mxu0 0.0
      %745 = vmatmul.mubr.f32.gmra.mrb[0].mxu0 %v245
      %v746 = vpop.f32.mrb[0].mxu0
      %v747 = vadd.f32 %v323, %v746
      %v748 = vpop.f32.mrb[0].mxu0
      %749 = vmatprep.mubr.f32.mxu0 0.0
      %750 = vmatmul.mubr.f32.gmra.mrb[0].mxu0 %v246
      %v751 = vpop.f32.mrb[0].mxu0
      %v752 = vadd.f32 %v323, %v751
      %v753 = vpop.f32.mrb[0].mxu0
      %754 = vmatprep.mubr.f32.mxu0 0.0
      %755 = vmatmul.mubr.f32.gmra.mrb[0].mxu0 %v247
      %v756 = vpop.f32.mrb[0].mxu0
      %v757 = vadd.f32 %v323, %v756
      %v758 = vpop.f32.mrb[0].mxu0
      %759 = vmatprep.mubr.f32.mxu0 0.0
      %760 = vmatmul.mubr.f32.gmra.mrb[0].mxu0 %v248
      %v761 = vpop.f32.mrb[0].mxu0
      %v762 = vadd.f32 %v323, %v761
      %v763 = vpop.f32.mrb[0].mxu0
      %764 = vmatprep.mubr.f32.mxu0 0.0
      %765 = vmatmul.mubr.f32.gmra.mrb[0].mxu0 %v249
      %v766 = vpop.f32.mrb[0].mxu0
      %v767 = vadd.f32 %v323, %v766
      %v768 = vpop.f32.mrb[0].mxu0
      %769 = vmatprep.mubr.f32.mxu0 0.0
      %770 = vmatmul.mubr.f32.gmra.mrb[0].mxu0 %v250
      %v771 = vpop.f32.mrb[0].mxu0
      %v772 = vadd.f32 %v323, %v771
      %v773 = vpop.f32.mrb[0].mxu0
      %774 = vmatprep.mubr.f32.mxu0 0.0
      %775 = vmatmul.mubr.f32.gmra.mrb[0].mxu0 %v251
      %v776 = vpop.f32.mrb[0].mxu0
      %v777 = vadd.f32 %v323, %v776
      %v778 = vpop.f32.mrb[0].mxu0
      %779 = vmatprep.mubr.f32.mxu0 0.0
      %780 = vmatmul.mubr.f32.gmra.mrb[0].mxu0 %v252
      %v781 = vpop.f32.mrb[0].mxu0
      %v782 = vadd.f32 %v323, %v781
      %v783 = vpop.f32.mrb[0].mxu0
      %784 = vmatprep.mubr.f32.mxu0 0.0
      %785 = vmatmul.mubr.f32.gmra.mrb[0].mxu0 %v253
      %v786 = vpop.f32.mrb[0].mxu0
      %v787 = vadd.f32 %v323, %v786
      %v788 = vpop.f32.mrb[0].mxu0
      %789 = vmatprep.mubr.f32.mxu0 0.0
      %790 = vmatmul.mubr.f32.gmra.mrb[0].mxu0 %v254
      %v791 = vpop.f32.mrb[0].mxu0
      %v792 = vadd.f32 %v323, %v791
      %v793 = vpop.f32.mrb[0].mxu0
      %794 = vmatprep.mubr.f32.mxu0 0.0
      %795 = vmatmul.mubr.f32.gmra.mrb[0].mxu0 %v255
      %v796 = vpop.f32.mrb[0].mxu0
      %v797 = vadd.f32 %v323, %v796
      %v798 = vpop.f32.mrb[0].mxu0
      %799 = vmatprep.mubr.f32.mxu0 0.0
      %800 = vmatmul.mubr.f32.gmra.mrb[0].mxu0 %v256
      %v801 = vpop.f32.mrb[0].mxu0
      %v802 = vadd.f32 %v323, %v801
      %v803 = vpop.f32.mrb[0].mxu0
      %804 = vmatprep.mubr.f32.mxu0 0.0
      %805 = vmatmul.mubr.f32.gmra.mrb[0].mxu0 %v257
      %v806 = vpop.f32.mrb[0].mxu0
      %v807 = vadd.f32 %v323, %v806
      %v808 = vpop.f32.mrb[0].mxu0
      %809 = vmatprep.mubr.f32.mxu0 0.0
      %810 = vmatmul.mubr.f32.gmra.mrb[0].mxu0 %v258
      %v811 = vpop.f32.mrb[0].mxu0
      %v812 = vadd.f32 %v323, %v811
      %v813 = vpop.f32.mrb[0].mxu0
      %814 = vmatprep.mubr.f32.mxu0 0.0
      %815 = vmatmul.mubr.f32.gmra.mrb[0].mxu0 %v259
      %v816 = vpop.f32.mrb[0].mxu0
      %v817 = vadd.f32 %v323, %v816
      %v818 = vpop.f32.mrb[0].mxu0
      %819 = vmatprep.mubr.f32.mxu0 0.0
      %820 = vmatmul.mubr.f32.gmra.mrb[0].mxu0 %v260
      %v821 = vpop.f32.mrb[0].mxu0
      %v822 = vadd.f32 %v323, %v821
      %v823 = vpop.f32.mrb[0].mxu0
      %824 = vmatprep.mubr.f32.mxu0 0.0
      %825 = vmatmul.mubr.f32.gmra.mrb[0].mxu0 %v261
      %v826 = vpop.f32.mrb[0].mxu0
      %v827 = vadd.f32 %v323, %v826
      %v828 = vpop.f32.mrb[0].mxu0
      %829 = vmatprep.mubr.f32.mxu0 0.0
      %830 = vmatmul.mubr.f32.gmra.mrb[0].mxu0 %v262
      %v831 = vpop.f32.mrb[0].mxu0
      %v832 = vadd.f32 %v323, %v831
      %v833 = vpop.f32.mrb[0].mxu0
      %834 = vmatprep.mubr.f32.mxu0 0.0
      %835 = vmatmul.mubr.f32.gmra.mrb[0].mxu0 %v263
      %v836 = vpop.f32.mrb[0].mxu0
      %v837 = vadd.f32 %v323, %v836
      %v838 = vpop.f32.mrb[0].mxu0
      %839 = vmatprep.mubr.f32.mxu0 0.0
      %840 = vmatmul.mubr.f32.gmra.mrb[0].mxu0 %v264
      %v841 = vpop.f32.mrb[0].mxu0
      %v842 = vadd.f32 %v323, %v841
      %v843 = vpop.f32.mrb[0].mxu0
      %844 = vmatprep.mubr.f32.mxu0 0.0
      %845 = vmatmul.mubr.f32.gmra.mrb[0].mxu0 %v265
      %v846 = vpop.f32.mrb[0].mxu0
      %v847 = vadd.f32 %v323, %v846
      %v848 = vpop.f32.mrb[0].mxu0
      %849 = vmatprep.mubr.f32.mxu0 0.0
      %850 = vmatmul.mubr.f32.gmra.mrb[0].mxu0 %v266
      %v851 = vpop.f32.mrb[0].mxu0
      %v852 = vadd.f32 %v323, %v851
      %v853 = vpop.f32.mrb[0].mxu0
      %854 = vmatprep.mubr.f32.mxu0 0.0
      %855 = vmatmul.mubr.f32.gmra.mrb[0].mxu0 %v267
      %v856 = vpop.f32.mrb[0].mxu0
      %v857 = vadd.f32 %v323, %v856
      %v858 = vpop.f32.mrb[0].mxu0
      %859 = vmatprep.mubr.f32.mxu0 0.0
      %860 = vmatmul.mubr.f32.gmra.mrb[0].mxu0 %v268
      %v861 = vpop.f32.mrb[0].mxu0
      %v862 = vadd.f32 %v323, %v861
      %v863 = vpop.f32.mrb[0].mxu0
      %864 = vmatprep.mubr.f32.mxu0 0.0
      %865 = vmatmul.mubr.f32.gmra.mrb[0].mxu0 %v269
      %v866 = vpop.f32.mrb[0].mxu0
      %v867 = vadd.f32 %v323, %v866
      %v868 = vpop.f32.mrb[0].mxu0
      %869 = vmatprep.mubr.f32.mxu0 0.0
      %870 = vmatmul.mubr.f32.gmra.mrb[0].mxu0 %v270
      %v871 = vpop.f32.mrb[0].mxu0
      %v872 = vadd.f32 %v323, %v871
      %v873 = vpop.f32.mrb[0].mxu0
      %874 = vmatprep.mubr.f32.mxu0 0.0
      %875 = vmatmul.mubr.f32.gmra.mrb[0].mxu0 %v271
      %v876 = vpop.f32.mrb[0].mxu0
      %v877 = vadd.f32 %v323, %v876
      %v878 = vpop.f32.mrb[0].mxu0
      %879 = vmatprep.mubr.f32.mxu0 0.0
      %880 = vmatmul.mubr.f32.gmra.mrb[0].mxu0 %v272
      %v881 = vpop.f32.mrb[0].mxu0
      %v882 = vadd.f32 %v323, %v881
      %v883 = vpop.f32.mrb[0].mxu0
      %884 = vmatprep.mubr.f32.mxu0 0.0
      %885 = vmatmul.mubr.f32.gmra.mrb[0].mxu0 %v273
      %v886 = vpop.f32.mrb[0].mxu0
      %v887 = vadd.f32 %v323, %v886
      %v888 = vpop.f32.mrb[0].mxu0
      %889 = vmatprep.mubr.f32.mxu0 0.0
      %890 = vmatmul.mubr.f32.gmra.mrb[0].mxu0 %v274
      %v891 = vpop.f32.mrb[0].mxu0
      %v892 = vadd.f32 %v323, %v891
      %v893 = vpop.f32.mrb[0].mxu0
      %894 = vmatprep.mubr.f32.mxu0 0.0
      %895 = vmatmul.mubr.f32.gmra.mrb[0].mxu0 %v275
      %v896 = vpop.f32.mrb[0].mxu0
      %v897 = vadd.f32 %v323, %v896
      %v898 = vpop.f32.mrb[0].mxu0
      %899 = vmatprep.mubr.f32.mxu0 0.0
      %900 = vmatmul.mubr.f32.gmra.mrb[0].mxu0 %v276
      %v901 = vpop.f32.mrb[0].mxu0
      %v902 = vadd.f32 %v323, %v901
      %v903 = vpop.f32.mrb[0].mxu0
      %904 = vmatprep.mubr.f32.mxu0 0.0
      %905 = vmatmul.mubr.f32.gmra.mrb[0].mxu0 %v277
      %v906 = vpop.f32.mrb[0].mxu0
      %v907 = vadd.f32 %v323, %v906
      %v908 = vpop.f32.mrb[0].mxu0
      %909 = vmatprep.mubr.f32.mxu0 0.0
      %910 = vmatmul.mubr.f32.gmra.mrb[0].mxu0 %v278
      %v911 = vpop.f32.mrb[0].mxu0
      %v912 = vadd.f32 %v323, %v911
      %v913 = vpop.f32.mrb[0].mxu0
      %914 = vmatprep.mubr.f32.mxu0 0.0
      %915 = vmatmul.mubr.f32.gmra.mrb[0].mxu0 %v279
      %v916 = vpop.f32.mrb[0].mxu0
      %v917 = vadd.f32 %v323, %v916
      %v918 = vpop.f32.mrb[0].mxu0
      %919 = vmatprep.mubr.f32.mxu0 0.0
      %920 = vmatmul.mubr.f32.gmra.mrb[0].mxu0 %v280
      %v921 = vpop.f32.mrb[0].mxu0
      %v922 = vadd.f32 %v323, %v921
      %v923 = vpop.f32.mrb[0].mxu0
      %924 = vmatprep.mubr.f32.mxu0 0.0
      %925 = vmatmul.mubr.f32.gmra.mrb[0].mxu0 %v281
      %v926 = vpop.f32.mrb[0].mxu0
      %v927 = vadd.f32 %v323, %v926
      %v928 = vpop.f32.mrb[0].mxu0
      %929 = vmatprep.mubr.f32.mxu0 0.0
      %930 = vmatmul.mubr.f32.gmra.mrb[0].mxu0 %v282
      %v931 = vpop.f32.mrb[0].mxu0
      %v932 = vadd.f32 %v323, %v931
      %v933 = vpop.f32.mrb[0].mxu0
      %934 = vmatprep.mubr.f32.mxu0 0.0
      %935 = vmatmul.mubr.f32.gmra.mrb[0].mxu0 %v283
      %v936 = vpop.f32.mrb[0].mxu0
      %v937 = vadd.f32 %v323, %v936
      %v938 = vpop.f32.mrb[0].mxu0
      %939 = vmatprep.mubr.f32.mxu0 0.0
      %940 = vmatmul.mubr.f32.gmra.mrb[0].mxu0 %v284
      %v941 = vpop.f32.mrb[0].mxu0
      %v942 = vadd.f32 %v323, %v941
      %v943 = vpop.f32.mrb[0].mxu0
      %944 = vmatprep.mubr.f32.mxu0 0.0
      %945 = vmatmul.mubr.f32.gmra.mrb[0].mxu0 %v285
      %v946 = vpop.f32.mrb[0].mxu0
      %v947 = vadd.f32 %v323, %v946
      %v948 = vpop.f32.mrb[0].mxu0
      %949 = vmatprep.mubr.f32.mxu0 0.0
      %950 = vmatmul.mubr.f32.gmra.mrb[0].mxu0 %v286
      %v951 = vpop.f32.mrb[0].mxu0
      %v952 = vadd.f32 %v323, %v951
      %v953 = vpop.f32.mrb[0].mxu0
      %954 = vmatprep.mubr.f32.mxu0 0.0
      %955 = vmatmul.mubr.f32.gmra.mrb[0].mxu0 %v287
      %v956 = vpop.f32.mrb[0].mxu0
      %v957 = vadd.f32 %v323, %v956
      %v958 = vpop.f32.mrb[0].mxu0
      %959 = vmatprep.mubr.f32.mxu0 0.0
      %960 = vmatmul.mubr.f32.gmra.mrb[0].mxu0 %v288
      %v961 = vpop.f32.mrb[0].mxu0
      %v962 = vadd.f32 %v323, %v961
      %v963 = vpop.f32.mrb[0].mxu0
      %964 = vmatprep.mubr.f32.mxu0 0.0
      %965 = vmatmul.mubr.f32.gmra.mrb[0].mxu0 %v289
      %v966 = vpop.f32.mrb[0].mxu0
      %v967 = vadd.f32 %v323, %v966
      %v968 = vpop.f32.mrb[0].mxu0
      %969 = vmatprep.mubr.f32.mxu0 0.0
      %970 = vmatmul.mubr.f32.gmra.mrb[0].mxu0 %v290
      %v971 = vpop.f32.mrb[0].mxu0
      %v972 = vadd.f32 %v323, %v971
      %v973 = vpop.f32.mrb[0].mxu0
      %974 = vmatprep.mubr.f32.mxu0 0.0
      %975 = vmatmul.mubr.f32.gmra.mrb[0].mxu0 %v291
      %v976 = vpop.f32.mrb[0].mxu0
      %v977 = vadd.f32 %v323, %v976
      %v978 = vpop.f32.mrb[0].mxu0
      %979 = vmatprep.mubr.f32.mxu0 0.0
      %980 = vmatmul.mubr.f32.gmra.mrb[0].mxu0 %v292
      %v981 = vpop.f32.mrb[0].mxu0
      %v982 = vadd.f32 %v323, %v981
      %v983 = vpop.f32.mrb[0].mxu0
      %984 = vmatprep.mubr.f32.mxu0 0.0
      %985 = vmatmul.mubr.f32.gmra.mrb[0].mxu0 %v293
      %v986 = vpop.f32.mrb[0].mxu0
      %v987 = vadd.f32 %v323, %v986
      %v988 = vpop.f32.mrb[0].mxu0
      %989 = vmatprep.mubr.f32.mxu0 0.0
      %990 = vmatmul.mubr.f32.gmra.mrb[0].mxu0 %v294
      %v991 = vpop.f32.mrb[0].mxu0
      %v992 = vadd.f32 %v323, %v991
      %v993 = vpop.f32.mrb[0].mxu0
      %994 = vmatprep.mubr.f32.mxu0 0.0
      %995 = vmatmul.mubr.f32.gmra.mrb[0].mxu0 %v295
      %v996 = vpop.f32.mrb[0].mxu0
      %v997 = vadd.f32 %v323, %v996
      %v998 = vpop.f32.mrb[0].mxu0
      %999 = vmatprep.mubr.f32.mxu0 0.0
      %1000 = vmatmul.mubr.f32.gmra.mrb[0].mxu0 %v296
      %v1001 = vpop.f32.mrb[0].mxu0
      %v1002 = vadd.f32 %v323, %v1001
      %v1003 = vpop.f32.mrb[0].mxu0
      %1004 = vmatprep.mubr.f32.mxu0 0.0
      %1005 = vmatmul.mubr.f32.gmra.mrb[0].mxu0 %v297
      %v1006 = vpop.f32.mrb[0].mxu0
      %v1007 = vadd.f32 %v323, %v1006
      %v1008 = vpop.f32.mrb[0].mxu0
      %1009 = vmatprep.mubr.f32.mxu0 0.0
      %1010 = vmatmul.mubr.f32.gmra.mrb[0].mxu0 %v298
      %v1011 = vpop.f32.mrb[0].mxu0
      %v1012 = vadd.f32 %v323, %v1011
      %v1013 = vpop.f32.mrb[0].mxu0
      %1014 = vmatprep.mubr.f32.mxu0 0.0
      %1015 = vmatmul.mubr.f32.gmra.mrb[0].mxu0 %v299
      %v1016 = vpop.f32.mrb[0].mxu0
      %v1017 = vadd.f32 %v323, %v1016
      %v1018 = vpop.f32.mrb[0].mxu0
      %1019 = vmatprep.mubr.f32.mxu0 0.0
      %1020 = vmatmul.mubr.f32.gmra.mrb[0].mxu0 %v300
      %v1021 = vpop.f32.mrb[0].mxu0
      %v1022 = vadd.f32 %v323, %v1021
      %v1023 = vpop.f32.mrb[0].mxu0
      %1024 = vmatprep.mubr.f32.mxu0 0.0
      %1025 = vmatmul.mubr.f32.gmra.mrb[0].mxu0 %v301
      %v1026 = vpop.f32.mrb[0].mxu0
      %v1027 = vadd.f32 %v323, %v1026
      %v1028 = vpop.f32.mrb[0].mxu0
      %1029 = vdwg.mxu0
      %1030 = vst [vmem:[%s172] sm:$0xff] %v392
      %1031 = vst [vmem:[%s172 + $0x8] sm:$0xff] %v397
      %1032 = vst [vmem:[%s172 + $0x10] sm:$0xff] %v402
      %1033 = vst [vmem:[%s172 + $0x18] sm:$0xff] %v407
      %1034 = vst [vmem:[%s172 + $0x20] sm:$0xff] %v412
      %1035 = vst [vmem:[%s172 + $0x28] sm:$0xff] %v417
      %1036 = vst [vmem:[%s172 + $0x30] sm:$0xff] %v422
      %1037 = vst [vmem:[%s172 + $0x38] sm:$0xff] %v427
      %1038 = vst [vmem:[%s172 + $0x40] sm:$0xff] %v432
      %1039 = vst [vmem:[%s172 + $0x48] sm:$0xff] %v437
      %1040 = vst [vmem:[%s172 + $0x50] sm:$0xff] %v442
      %1041 = vst [vmem:[%s172 + $0x58] sm:$0xff] %v447
      %1042 = vst [vmem:[%s172 + $0x60] sm:$0xff] %v452
      %1043 = vst [vmem:[%s172 + $0x68] sm:$0xff] %v457
      %1044 = vst [vmem:[%s172 + $0x70] sm:$0xff] %v462
      %1045 = vst [vmem:[%s172 + $0x78] sm:$0xff] %v467
      %1046 = vst [vmem:[%s172 + $0x80] sm:$0xff] %v472
      %1047 = vst [vmem:[%s172 + $0x88] sm:$0xff] %v477
      %1048 = vst [vmem:[%s172 + $0x90] sm:$0xff] %v482
      %1049 = vst [vmem:[%s172 + $0x98] sm:$0xff] %v487
      %1050 = vst [vmem:[%s172 + $0xa0] sm:$0xff] %v492
      %1051 = vst [vmem:[%s172 + $0xa8] sm:$0xff] %v497
      %1052 = vst [vmem:[%s172 + $0xb0] sm:$0xff] %v502
      %1053 = vst [vmem:[%s172 + $0xb8] sm:$0xff] %v507
      %1054 = vst [vmem:[%s172 + $0xc0] sm:$0xff] %v512
      %1055 = vst [vmem:[%s172 + $0xc8] sm:$0xff] %v517
      %1056 = vst [vmem:[%s172 + $0xd0] sm:$0xff] %v522
      %1057 = vst [vmem:[%s172 + $0xd8] sm:$0xff] %v527
      %1058 = vst [vmem:[%s172 + $0xe0] sm:$0xff] %v532
      %1059 = vst [vmem:[%s172 + $0xe8] sm:$0xff] %v537
      %1060 = vst [vmem:[%s172 + $0xf0] sm:$0xff] %v542
      %1061 = vst [vmem:[%s172 + $0xf8] sm:$0xff] %v547
      %1062 = vst [vmem:[%s172 + $0x100] sm:$0xff] %v552
      %1063 = vst [vmem:[%s172 + $0x108] sm:$0xff] %v557
      %1064 = vst [vmem:[%s172 + $0x110] sm:$0xff] %v562
      %1065 = vst [vmem:[%s172 + $0x118] sm:$0xff] %v567
      %1066 = vst [vmem:[%s172 + $0x120] sm:$0xff] %v572
      %1067 = vst [vmem:[%s172 + $0x128] sm:$0xff] %v577
      %1068 = vst [vmem:[%s172 + $0x130] sm:$0xff] %v582
      %1069 = vst [vmem:[%s172 + $0x138] sm:$0xff] %v587
      %1070 = vst [vmem:[%s172 + $0x140] sm:$0xff] %v592
      %1071 = vst [vmem:[%s172 + $0x148] sm:$0xff] %v597
      %1072 = vst [vmem:[%s172 + $0x150] sm:$0xff] %v602
      %1073 = vst [vmem:[%s172 + $0x158] sm:$0xff] %v607
      %1074 = vst [vmem:[%s172 + $0x160] sm:$0xff] %v612
      %1075 = vst [vmem:[%s172 + $0x168] sm:$0xff] %v617
      %1076 = vst [vmem:[%s172 + $0x170] sm:$0xff] %v622
      %1077 = vst [vmem:[%s172 + $0x178] sm:$0xff] %v627
      %1078 = vst [vmem:[%s172 + $0x180] sm:$0xff] %v632
      %1079 = vst [vmem:[%s172 + $0x188] sm:$0xff] %v637
      %1080 = vst [vmem:[%s172 + $0x190] sm:$0xff] %v642
      %1081 = vst [vmem:[%s172 + $0x198] sm:$0xff] %v647
      %1082 = vst [vmem:[%s172 + $0x1a0] sm:$0xff] %v652
      %1083 = vst [vmem:[%s172 + $0x1a8] sm:$0xff] %v657
      %1084 = vst [vmem:[%s172 + $0x1b0] sm:$0xff] %v662
      %1085 = vst [vmem:[%s172 + $0x1b8] sm:$0xff] %v667
      %1086 = vst [vmem:[%s172 + $0x1c0] sm:$0xff] %v672
      %1087 = vst [vmem:[%s172 + $0x1c8] sm:$0xff] %v677
      %1088 = vst [vmem:[%s172 + $0x1d0] sm:$0xff] %v682
      %1089 = vst [vmem:[%s172 + $0x1d8] sm:$0xff] %v687
      %1090 = vst [vmem:[%s172 + $0x1e0] sm:$0xff] %v692
      %1091 = vst [vmem:[%s172 + $0x1e8] sm:$0xff] %v697
      %1092 = vst [vmem:[%s172 + $0x1f0] sm:$0xff] %v702
      %1093 = vst [vmem:[%s172 + $0x1f8] sm:$0xff] %v707
      %1094 = vst [vmem:[%s172 + $0x200] sm:$0xff] %v712
      %1095 = vst [vmem:[%s172 + $0x208] sm:$0xff] %v717
      %1096 = vst [vmem:[%s172 + $0x210] sm:$0xff] %v722
      %1097 = vst [vmem:[%s172 + $0x218] sm:$0xff] %v727
      %1098 = vst [vmem:[%s172 + $0x220] sm:$0xff] %v732
      %1099 = vst [vmem:[%s172 + $0x228] sm:$0xff] %v737
      %1100 = vst [vmem:[%s172 + $0x230] sm:$0xff] %v742
      %1101 = vst [vmem:[%s172 + $0x238] sm:$0xff] %v747
      %1102 = vst [vmem:[%s172 + $0x240] sm:$0xff] %v752
      %1103 = vst [vmem:[%s172 + $0x248] sm:$0xff] %v757
      %1104 = vst [vmem:[%s172 + $0x250] sm:$0xff] %v762
      %1105 = vst [vmem:[%s172 + $0x258] sm:$0xff] %v767
      %1106 = vst [vmem:[%s172 + $0x260] sm:$0xff] %v772
      %1107 = vst [vmem:[%s172 + $0x268] sm:$0xff] %v777
      %1108 = vst [vmem:[%s172 + $0x270] sm:$0xff] %v782
      %1109 = vst [vmem:[%s172 + $0x278] sm:$0xff] %v787
      %1110 = vst [vmem:[%s172 + $0x280] sm:$0xff] %v792
      %1111 = vst [vmem:[%s172 + $0x288] sm:$0xff] %v797
      %1112 = vst [vmem:[%s172 + $0x290] sm:$0xff] %v802
      %1113 = vst [vmem:[%s172 + $0x298] sm:$0xff] %v807
      %1114 = vst [vmem:[%s172 + $0x2a0] sm:$0xff] %v812
      %1115 = vst [vmem:[%s172 + $0x2a8] sm:$0xff] %v817
      %1116 = vst [vmem:[%s172 + $0x2b0] sm:$0xff] %v822
      %1117 = vst [vmem:[%s172 + $0x2b8] sm:$0xff] %v827
      %1118 = vst [vmem:[%s172 + $0x2c0] sm:$0xff] %v832
      %1119 = vst [vmem:[%s172 + $0x2c8] sm:$0xff] %v837
      %1120 = vst [vmem:[%s172 + $0x2d0] sm:$0xff] %v842
      %1121 = vst [vmem:[%s172 + $0x2d8] sm:$0xff] %v847
      %1122 = vst [vmem:[%s172 + $0x2e0] sm:$0xff] %v852
      %1123 = vst [vmem:[%s172 + $0x2e8] sm:$0xff] %v857
      %1124 = vst [vmem:[%s172 + $0x2f0] sm:$0xff] %v862
      %1125 = vst [vmem:[%s172 + $0x2f8] sm:$0xff] %v867
      %1126 = vst [vmem:[%s172 + $0x300] sm:$0xff] %v872
      %1127 = vst [vmem:[%s172 + $0x308] sm:$0xff] %v877
      %1128 = vst [vmem:[%s172 + $0x310] sm:$0xff] %v882
      %1129 = vst [vmem:[%s172 + $0x318] sm:$0xff] %v887
      %1130 = vst [vmem:[%s172 + $0x320] sm:$0xff] %v892
      %1131 = vst [vmem:[%s172 + $0x328] sm:$0xff] %v897
      %1132 = vst [vmem:[%s172 + $0x330] sm:$0xff] %v902
      %1133 = vst [vmem:[%s172 + $0x338] sm:$0xff] %v907
      %1134 = vst [vmem:[%s172 + $0x340] sm:$0xff] %v912
      %1135 = vst [vmem:[%s172 + $0x348] sm:$0xff] %v917
      %1136 = vst [vmem:[%s172 + $0x350] sm:$0xff] %v922
      %1137 = vst [vmem:[%s172 + $0x358] sm:$0xff] %v927
      %1138 = vst [vmem:[%s172 + $0x360] sm:$0xff] %v932
      %1139 = vst [vmem:[%s172 + $0x368] sm:$0xff] %v937
      %1140 = vst [vmem:[%s172 + $0x370] sm:$0xff] %v942
      %1141 = vst [vmem:[%s172 + $0x378] sm:$0xff] %v947
      %1142 = vst [vmem:[%s172 + $0x380] sm:$0xff] %v952
      %1143 = vst [vmem:[%s172 + $0x388] sm:$0xff] %v957
      %1144 = vst [vmem:[%s172 + $0x390] sm:$0xff] %v962
      %1145 = vst [vmem:[%s172 + $0x398] sm:$0xff] %v967
      %1146 = vst [vmem:[%s172 + $0x3a0] sm:$0xff] %v972
      %1147 = vst [vmem:[%s172 + $0x3a8] sm:$0xff] %v977
      %1148 = vst [vmem:[%s172 + $0x3b0] sm:$0xff] %v982
      %1149 = vst [vmem:[%s172 + $0x3b8] sm:$0xff] %v987
      %1150 = vst [vmem:[%s172 + $0x3c0] sm:$0xff] %v992
      %1151 = vst [vmem:[%s172 + $0x3c8] sm:$0xff] %v997
      %1152 = vst [vmem:[%s172 + $0x3d0] sm:$0xff] %v1002
      %1153 = vst [vmem:[%s172 + $0x3d8] sm:$0xff] %v1007
      %1154 = vst [vmem:[%s172 + $0x3e0] sm:$0xff] %v1012
      %1155 = vst [vmem:[%s172 + $0x3e8] sm:$0xff] %v1017
      %1156 = vst [vmem:[%s172 + $0x3f0] sm:$0xff] %v1022
      %1157 = vst [vmem:[%s172 + $0x3f8] sm:$0xff] %v1027
      %s1158 = smul.u32 128, %s14
      %p1159 = scmp.lt.s32.totalorder %s1158, 1023
      %s1160 = scalar_select %p1159, %s1158, 1023
      %s1161 = smul.addr %s1160, 8
      %s1162 = scalar_lea.vmem %s3, %s1161
      // Predicated region
      $region33: #{cong_final_conv_forward.5} parent=31 // pred_check
        %p1163 = pneg %p100
      $region34: #{cong_final_conv_forward.5} parent=31 // pred_check_branch
        %1165 = sbr.rel (%p1163) target = $region36
      $region35: #{cong_final_conv_forward.5} parent=31 // pred_region
        %s1166 = smul.u32 128, %s14
      $region36: #{cong_final_conv_forward.5} parent=31 // pred_fallthru
        _
    $region32: #{cong_final_conv_forward.5} parent=5 // pred_fallthru
      _
    %p1167 = scmp.le.s32.totalorder 2, %s9
    // Predicated region
    $region37: #{cong_final_conv_forward.5} parent=5 // pred_check
      %p1168 = pneg %p1167
    $region38: #{cong_final_conv_forward.5} parent=5 // pred_check_branch
      %1170 = sbr.rel (%p1168) target = $region40
    $region39: #{cong_final_conv_forward.5} parent=5 // pred_region
      %s1171 = ssub.s32 %s9, 2
      // Predicated region
      $region41: #{cong_final_conv_forward.5} parent=39 // pred_check
        %p1172 = pneg %p106
      $region42: #{cong_final_conv_forward.5} parent=39 // pred_check_branch
        %1174 = sbr.rel (%p1172) target = $region44
      $region43: #{cong_final_conv_forward.5} parent=39 // pred_region
        %s1175 = smul.u32 128, %s15
        %p1176 = scmp.lt.s32.totalorder %s1175, 1023
        %s1177 = scalar_select %p1176, %s1175, 1023
        %s1178 = smul.addr %s1177, 8
        %s1179 = scalar_lea.vmem %s3, %s1178
      $region44: #{cong_final_conv_forward.5} parent=39 // pred_fallthru
        _
    $region40: #{cong_final_conv_forward.5} parent=5 // pred_fallthru
      _
  $region6: #{cong_final_conv_forward.5} parent=0 // loop_footer
    %s13 = sadd.s32 1, %s9
  $region7: #{cong_final_conv_forward.5} parent=0 // loop_footer_branch
    %8 = sbr.rel target = $region3
  $region8: #{cong_final_conv_forward.5} parent=0 // loop_exit
    _

// kernel: cong_final_conv_forward.3
$region0: #{cong_final_conv_forward.3}
  #allocation0 [shape = 'u32[]', space=smem, size = 0x4, offset = 0x4, fixed_abs, tag = 'smem constant byte address 0x4 - core index']
  #allocation1 [shape = 'u32[144,128]{1,0:T(1,128)}', space=vmem, size = 0x12000, scoped, tag = 'internal scratch']
  %s0 = inlined_call_operand.vmem [shape: f32[8192,128], index: 0, kind: input, shape index: {}]
  %s1 = inlined_call_operand.vmem [shape: f32[128,128], index: 1, kind: input, shape index: {}]
  %s2 = inlined_call_operand.vmem [shape: f32[1,128], index: 2, kind: input, shape index: {}]
  %s3 = inlined_call_operand.vmem [shape: f32[8192,128], index: 3, kind: output, shape index: {0}]
  %s4 = inlined_call_operand.vmem [shape: f32[8,2,128], index: 4, kind: output, shape index: {1}]
  %5 = xla_tuple %s3, %s4
  %s6 = sld [smem:[#allocation0]]
  $region53: #{cong_final_conv_forward.3} parent=0
    _
  %s8 = ssub.s32 1, %s6
  %s9 = scalar_select 0, %s8, %s6
  loop: start=0, step=1, limit=10
  $region2: #{cong_final_conv_forward.3} parent=0 // loop_pre_header
    _
  $region3: #{cong_final_conv_forward.3} parent=0 // loop_header
    %s11 = sphi 0, %s15
    %p12 = scmp.ge.s32.totalorder %s11, 10
    %s21 = sphi 0, %s23
    %s24 = sphi 0, %s21
    %s25 = sphi 0, %s24
    %s41 = sphi 0, %s25
    %s45 = sphi 0, %s45
    %s47 = sphi 0, %s45
    %s48 = sphi 0, %s47
    %s62 = sphi 0, %s48
    %s66 = sphi 0, %s66
    %s68 = sphi 0, %s66
    %s69 = sphi 0, %s68
    %s83 = sphi 0, %s69
    %s89 = sphi 0, %s91
    %s92 = sphi 0, %s89
    %s93 = sphi 0, %s92
    %s109 = sphi 0, %s93
    %s115 = sphi 0, %s117
    %s118 = sphi 0, %s115
    %s119 = sphi 0, %s118
    %s135 = sphi 0, %s119
  $region4: #{cong_final_conv_forward.3} parent=0 // loop_header_branch
    %14 = sbr.rel (%p12) target = $region8
  $region5: #{cong_final_conv_forward.3} parent=0 // loop_body
    %s16 = ssub.s32 %s11, 1
    %s17 = ssub.s32 %s11, 2
    %s18 = sadd.s32 %s11, 1
    %s19 = ssub.s32 %s11, %s18
    %p20 = scmp.eq.s32.totalorder %s19, 0
    %s22 = sadd.s32 %s21, 1
    %s23 = scalar_select %p20, %s21, %s22
    %p26 = pneg %p20
    %p27 = scmp.eq.s32.totalorder %s11, 7
    %p28 = por %p26, %p27
    %p29 = scmp.ne.s32.totalorder %s21, %s24
    %p30 = scmp.eq.s32.totalorder %s11, 0
    %p31 = por %p29, %p30
    %p32 = scmp.ne.s32.totalorder %s21, %s24
    %p33 = scmp.eq.s32.totalorder %s16, 7
    %p34 = por %p32, %p33
    %p35 = scmp.ne.s32.totalorder %s24, %s25
    %p36 = scmp.eq.s32.totalorder %s16, 0
    %p37 = por %p35, %p36
    %p38 = scmp.ne.s32.totalorder %s24, %s25
    %p39 = scmp.eq.s32.totalorder %s17, 7
    %p40 = por %p38, %p39
    %p42 = scmp.ne.s32.totalorder %s25, %s41
    %p43 = scmp.eq.s32.totalorder %s17, 0
    %p44 = por %p42, %p43
    %s46 = sadd.s32 %s45, 1
    %p49 = scmp.eq.s32.totalorder %s11, 7
    %p50 = scmp.ne.s32.totalorder %s45, %s47
    %p51 = scmp.eq.s32.totalorder %s11, 0
    %p52 = por %p50, %p51
    %p53 = scmp.ne.s32.totalorder %s45, %s47
    %p54 = scmp.eq.s32.totalorder %s16, 7
    %p55 = por %p53, %p54
    %p56 = scmp.ne.s32.totalorder %s47, %s48
    %p57 = scmp.eq.s32.totalorder %s16, 0
    %p58 = por %p56, %p57
    %p59 = scmp.ne.s32.totalorder %s47, %s48
    %p60 = scmp.eq.s32.totalorder %s17, 7
    %p61 = por %p59, %p60
    %p63 = scmp.ne.s32.totalorder %s48, %s62
    %p64 = scmp.eq.s32.totalorder %s17, 0
    %p65 = por %p63, %p64
    %s67 = sadd.s32 %s66, 1
    %p70 = scmp.eq.s32.totalorder %s11, 7
    %p71 = scmp.ne.s32.totalorder %s66, %s68
    %p72 = scmp.eq.s32.totalorder %s11, 0
    %p73 = por %p71, %p72
    %p74 = scmp.ne.s32.totalorder %s66, %s68
    %p75 = scmp.eq.s32.totalorder %s16, 7
    %p76 = por %p74, %p75
    %p77 = scmp.ne.s32.totalorder %s68, %s69
    %p78 = scmp.eq.s32.totalorder %s16, 0
    %p79 = por %p77, %p78
    %p80 = scmp.ne.s32.totalorder %s68, %s69
    %p81 = scmp.eq.s32.totalorder %s17, 7
    %p82 = por %p80, %p81
    %p84 = scmp.ne.s32.totalorder %s69, %s83
    %p85 = scmp.eq.s32.totalorder %s17, 0
    %p86 = por %p84, %p85
    %s87 = ssub.s32 %s11, %s18
    %p88 = scmp.eq.s32.totalorder %s87, 0
    %s90 = sadd.s32 %s89, 1
    %s91 = scalar_select %p88, %s89, %s90
    %p94 = pneg %p88
    %p95 = scmp.eq.s32.totalorder %s11, 7
    %p96 = por %p94, %p95
    %p97 = scmp.ne.s32.totalorder %s89, %s92
    %p98 = scmp.eq.s32.totalorder %s11, 0
    %p99 = por %p97, %p98
    %p100 = scmp.ne.s32.totalorder %s89, %s92
    %p101 = scmp.eq.s32.totalorder %s16, 7
    %p102 = por %p100, %p101
    %p103 = scmp.ne.s32.totalorder %s92, %s93
    %p104 = scmp.eq.s32.totalorder %s16, 0
    %p105 = por %p103, %p104
    %p106 = scmp.ne.s32.totalorder %s92, %s93
    %p107 = scmp.eq.s32.totalorder %s17, 7
    %p108 = por %p106, %p107
    %p110 = scmp.ne.s32.totalorder %s93, %s109
    %p111 = scmp.eq.s32.totalorder %s17, 0
    %p112 = por %p110, %p111
    %s113 = ssub.s32 %s11, %s18
    %p114 = scmp.eq.s32.totalorder %s113, 0
    %s116 = sadd.s32 %s115, 1
    %s117 = scalar_select %p114, %s115, %s116
    %p120 = pneg %p114
    %p121 = scmp.eq.s32.totalorder %s11, 7
    %p122 = por %p120, %p121
    %p123 = scmp.ne.s32.totalorder %s115, %s118
    %p124 = scmp.eq.s32.totalorder %s11, 0
    %p125 = por %p123, %p124
    %p126 = scmp.ne.s32.totalorder %s115, %s118
    %p127 = scmp.eq.s32.totalorder %s16, 7
    %p128 = por %p126, %p127
    %p129 = scmp.ne.s32.totalorder %s118, %s119
    %p130 = scmp.eq.s32.totalorder %s16, 0
    %p131 = por %p129, %p130
    %p132 = scmp.ne.s32.totalorder %s118, %s119
    %p133 = scmp.eq.s32.totalorder %s17, 7
    %p134 = por %p132, %p133
    %p136 = scmp.ne.s32.totalorder %s119, %s135
    %p137 = scmp.eq.s32.totalorder %s17, 0
    %p138 = por %p136, %p137
    %p139 = scmp.le.s32.totalorder 1, %s11
    %p140 = scmp.lt.s32.totalorder %s11, 9
    %p141 = pnand %p139, %p140
    %p142 = pneg %p141
    // Predicated region
    $region9: #{cong_final_conv_forward.3} parent=5 // pred_check
      _
    $region10: #{cong_final_conv_forward.3} parent=5 // pred_check_branch
      %144 = sbr.rel (%p141) target = $region12
    $region11: #{cong_final_conv_forward.3} parent=5 // pred_region
      %s145 = ssub.s32 %s11, 1
      // Predicated region
      $region13: #{cong_final_conv_forward.3} parent=11 // pred_check
        %p146 = pneg %p58
      $region14: #{cong_final_conv_forward.3} parent=11 // pred_check_branch
        %148 = sbr.rel (%p146) target = $region16
      $region15: #{cong_final_conv_forward.3} parent=11 // pred_region
        _
      $region16: #{cong_final_conv_forward.3} parent=11 // pred_fallthru
        _
      // Predicated region
      $region17: #{cong_final_conv_forward.3} parent=11 // pred_check
        %p149 = pneg %p79
      $region18: #{cong_final_conv_forward.3} parent=11 // pred_check_branch
        %151 = sbr.rel (%p149) target = $region20
      $region19: #{cong_final_conv_forward.3} parent=11 // pred_region
        _
      $region20: #{cong_final_conv_forward.3} parent=11 // pred_fallthru
        _
    $region12: #{cong_final_conv_forward.3} parent=5 // pred_fallthru
      _
    %p152 = scmp.lt.s32.totalorder %s11, 8
    // Predicated region
    $region21: #{cong_final_conv_forward.3} parent=5 // pred_check
      %p153 = pneg %p152
    $region22: #{cong_final_conv_forward.3} parent=5 // pred_check_branch
      %155 = sbr.rel (%p153) target = $region24
    $region23: #{cong_final_conv_forward.3} parent=5 // pred_region
      // Predicated region
      $region25: #{cong_final_conv_forward.3} parent=23 // pred_check
        %p156 = pneg %p31
      $region26: #{cong_final_conv_forward.3} parent=23 // pred_check_branch
        %158 = sbr.rel (%p156) target = $region28
      $region27: #{cong_final_conv_forward.3} parent=23 // pred_region
        %s159 = smul.u32 128, %s11
        %p160 = scmp.lt.s32.totalorder %s159, 1023
        %s161 = scalar_select %p160, %s159, 1023
        %s162 = smul.addr %s161, 8
        %s163 = scalar_lea.vmem %s0, %s162
        %s164 = smul.u32 128, %s11
      $region28: #{cong_final_conv_forward.3} parent=23 // pred_fallthru
        _
    $region24: #{cong_final_conv_forward.3} parent=5 // pred_fallthru
      _
    %p165 = scmp.le.s32.totalorder 1, %s11
    %p166 = scmp.lt.s32.totalorder %s11, 9
    %p167 = pnand %p165, %p166
    %p168 = pneg %p167
    // Predicated region
    $region29: #{cong_final_conv_forward.3} parent=5 // pred_check
      _
    $region30: #{cong_final_conv_forward.3} parent=5 // pred_check_branch
      %170 = sbr.rel (%p167) target = $region32
    $region31: #{cong_final_conv_forward.3} parent=5 // pred_region
      %s171 = ssub.s32 %s11, 1
      %s172 = smul.u32 128, %s16
      %p173 = scmp.lt.s32.totalorder %s172, 1023
      %s174 = scalar_select %p173, %s172, 1023
      %s175 = smul.addr %s174, 8
      %s176 = scalar_lea.vmem %s0, %s175
      %p177 = pneg %p37
      %p178 = pneg %p34
      %p179 = pneg %p58
      %p180 = pneg %p55
      %p181 = pneg %p79
      %p182 = pneg %p76
      %p183 = pneg %p105
      %p184 = pneg %p102
      %s185 = smul.u32 128, %s16
      %p186 = scmp.lt.s32.totalorder %s185, 1023
      %s187 = scalar_select %p186, %s185, 1023
      %s188 = smul.addr %s187, 8
      %s189 = scalar_lea.vmem %s3, %s188
      %p190 = pneg %p131
      %p191 = pneg %p128
      %p192 = scmp.lt.s32.totalorder %s16, 7
      %s193 = scalar_select %p192, %s16, 7
      %s194 = smul.addr %s193, 2
      %s195 = scalar_lea.vmem %s4, %s194
      %s196 = smul.u32 128, %s16
      %p197 = scmp.lt.s32.totalorder %s196, 1023
      %s198 = scalar_select %p197, %s196, 1023
      %s199 = smul.addr %s198, 8
      %s200 = scalar_lea.vmem %s0, %s199
      %s201 = smul.u32 128, %s16
      %s202 = smul.u32 128, %s16
      %p203 = scmp.lt.s32.totalorder %s202, 1023
      %s204 = scalar_select %p203, %s202, 1023
      %s205 = smul.addr %s204, 8
      %s206 = scalar_lea.vmem %s3, %s205
      %s207 = smul.u32 128, %s16
      %p208 = scmp.lt.s32.totalorder %s16, 7
      %s209 = scalar_select %p208, %s16, 7
      %s210 = smul.addr %s209, 2
      %s211 = scalar_lea.vmem %s4, %s210
      %v212 = vld [vmem:[%s200] sm:$0xff]
      %v213 = vld [vmem:[%s200 + $0x8] sm:$0xff]
      %v214 = vld [vmem:[%s200 + $0x10] sm:$0xff]
      %v215 = vld [vmem:[%s200 + $0x18] sm:$0xff]
      %v216 = vld [vmem:[%s200 + $0x20] sm:$0xff]
      %v217 = vld [vmem:[%s200 + $0x28] sm:$0xff]
      %v218 = vld [vmem:[%s200 + $0x30] sm:$0xff]
      %v219 = vld [vmem:[%s200 + $0x38] sm:$0xff]
      %v220 = vld [vmem:[%s200 + $0x40] sm:$0xff]
      %v221 = vld [vmem:[%s200 + $0x48] sm:$0xff]
      %v222 = vld [vmem:[%s200 + $0x50] sm:$0xff]
      %v223 = vld [vmem:[%s200 + $0x58] sm:$0xff]
      %v224 = vld [vmem:[%s200 + $0x60] sm:$0xff]
      %v225 = vld [vmem:[%s200 + $0x68] sm:$0xff]
      %v226 = vld [vmem:[%s200 + $0x70] sm:$0xff]
      %v227 = vld [vmem:[%s200 + $0x78] sm:$0xff]
      %v228 = vld [vmem:[%s200 + $0x80] sm:$0xff]
      %v229 = vld [vmem:[%s200 + $0x88] sm:$0xff]
      %v230 = vld [vmem:[%s200 + $0x90] sm:$0xff]
      %v231 = vld [vmem:[%s200 + $0x98] sm:$0xff]
      %v232 = vld [vmem:[%s200 + $0xa0] sm:$0xff]
      %v233 = vld [vmem:[%s200 + $0xa8] sm:$0xff]
      %v234 = vld [vmem:[%s200 + $0xb0] sm:$0xff]
      %v235 = vld [vmem:[%s200 + $0xb8] sm:$0xff]
      %v236 = vld [vmem:[%s200 + $0xc0] sm:$0xff]
      %v237 = vld [vmem:[%s200 + $0xc8] sm:$0xff]
      %v238 = vld [vmem:[%s200 + $0xd0] sm:$0xff]
      %v239 = vld [vmem:[%s200 + $0xd8] sm:$0xff]
      %v240 = vld [vmem:[%s200 + $0xe0] sm:$0xff]
      %v241 = vld [vmem:[%s200 + $0xe8] sm:$0xff]
      %v242 = vld [vmem:[%s200 + $0xf0] sm:$0xff]
      %v243 = vld [vmem:[%s200 + $0xf8] sm:$0xff]
      %v244 = vld [vmem:[%s200 + $0x100] sm:$0xff]
      %v245 = vld [vmem:[%s200 + $0x108] sm:$0xff]
      %v246 = vld [vmem:[%s200 + $0x110] sm:$0xff]
      %v247 = vld [vmem:[%s200 + $0x118] sm:$0xff]
      %v248 = vld [vmem:[%s200 + $0x120] sm:$0xff]
      %v249 = vld [vmem:[%s200 + $0x128] sm:$0xff]
      %v250 = vld [vmem:[%s200 + $0x130] sm:$0xff]
      %v251 = vld [vmem:[%s200 + $0x138] sm:$0xff]
      %v252 = vld [vmem:[%s200 + $0x140] sm:$0xff]
      %v253 = vld [vmem:[%s200 + $0x148] sm:$0xff]
      %v254 = vld [vmem:[%s200 + $0x150] sm:$0xff]
      %v255 = vld [vmem:[%s200 + $0x158] sm:$0xff]
      %v256 = vld [vmem:[%s200 + $0x160] sm:$0xff]
      %v257 = vld [vmem:[%s200 + $0x168] sm:$0xff]
      %v258 = vld [vmem:[%s200 + $0x170] sm:$0xff]
      %v259 = vld [vmem:[%s200 + $0x178] sm:$0xff]
      %v260 = vld [vmem:[%s200 + $0x180] sm:$0xff]
      %v261 = vld [vmem:[%s200 + $0x188] sm:$0xff]
      %v262 = vld [vmem:[%s200 + $0x190] sm:$0xff]
      %v263 = vld [vmem:[%s200 + $0x198] sm:$0xff]
      %v264 = vld [vmem:[%s200 + $0x1a0] sm:$0xff]
      %v265 = vld [vmem:[%s200 + $0x1a8] sm:$0xff]
      %v266 = vld [vmem:[%s200 + $0x1b0] sm:$0xff]
      %v267 = vld [vmem:[%s200 + $0x1b8] sm:$0xff]
      %v268 = vld [vmem:[%s200 + $0x1c0] sm:$0xff]
      %v269 = vld [vmem:[%s200 + $0x1c8] sm:$0xff]
      %v270 = vld [vmem:[%s200 + $0x1d0] sm:$0xff]
      %v271 = vld [vmem:[%s200 + $0x1d8] sm:$0xff]
      %v272 = vld [vmem:[%s200 + $0x1e0] sm:$0xff]
      %v273 = vld [vmem:[%s200 + $0x1e8] sm:$0xff]
      %v274 = vld [vmem:[%s200 + $0x1f0] sm:$0xff]
      %v275 = vld [vmem:[%s200 + $0x1f8] sm:$0xff]
      %v276 = vld [vmem:[%s200 + $0x200] sm:$0xff]
      %v277 = vld [vmem:[%s200 + $0x208] sm:$0xff]
      %v278 = vld [vmem:[%s200 + $0x210] sm:$0xff]
      %v279 = vld [vmem:[%s200 + $0x218] sm:$0xff]
      %v280 = vld [vmem:[%s200 + $0x220] sm:$0xff]
      %v281 = vld [vmem:[%s200 + $0x228] sm:$0xff]
      %v282 = vld [vmem:[%s200 + $0x230] sm:$0xff]
      %v283 = vld [vmem:[%s200 + $0x238] sm:$0xff]
      %v284 = vld [vmem:[%s200 + $0x240] sm:$0xff]
      %v285 = vld [vmem:[%s200 + $0x248] sm:$0xff]
      %v286 = vld [vmem:[%s200 + $0x250] sm:$0xff]
      %v287 = vld [vmem:[%s200 + $0x258] sm:$0xff]
      %v288 = vld [vmem:[%s200 + $0x260] sm:$0xff]
      %v289 = vld [vmem:[%s200 + $0x268] sm:$0xff]
      %v290 = vld [vmem:[%s200 + $0x270] sm:$0xff]
      %v291 = vld [vmem:[%s200 + $0x278] sm:$0xff]
      %v292 = vld [vmem:[%s200 + $0x280] sm:$0xff]
      %v293 = vld [vmem:[%s200 + $0x288] sm:$0xff]
      %v294 = vld [vmem:[%s200 + $0x290] sm:$0xff]
      %v295 = vld [vmem:[%s200 + $0x298] sm:$0xff]
      %v296 = vld [vmem:[%s200 + $0x2a0] sm:$0xff]
      %v297 = vld [vmem:[%s200 + $0x2a8] sm:$0xff]
      %v298 = vld [vmem:[%s200 + $0x2b0] sm:$0xff]
      %v299 = vld [vmem:[%s200 + $0x2b8] sm:$0xff]
      %v300 = vld [vmem:[%s200 + $0x2c0] sm:$0xff]
      %v301 = vld [vmem:[%s200 + $0x2c8] sm:$0xff]
      %v302 = vld [vmem:[%s200 + $0x2d0] sm:$0xff]
      %v303 = vld [vmem:[%s200 + $0x2d8] sm:$0xff]
      %v304 = vld [vmem:[%s200 + $0x2e0] sm:$0xff]
      %v305 = vld [vmem:[%s200 + $0x2e8] sm:$0xff]
      %v306 = vld [vmem:[%s200 + $0x2f0] sm:$0xff]
      %v307 = vld [vmem:[%s200 + $0x2f8] sm:$0xff]
      %v308 = vld [vmem:[%s200 + $0x300] sm:$0xff]
      %v309 = vld [vmem:[%s200 + $0x308] sm:$0xff]
      %v310 = vld [vmem:[%s200 + $0x310] sm:$0xff]
      %v311 = vld [vmem:[%s200 + $0x318] sm:$0xff]
      %v312 = vld [vmem:[%s200 + $0x320] sm:$0xff]
      %v313 = vld [vmem:[%s200 + $0x328] sm:$0xff]
      %v314 = vld [vmem:[%s200 + $0x330] sm:$0xff]
      %v315 = vld [vmem:[%s200 + $0x338] sm:$0xff]
      %v316 = vld [vmem:[%s200 + $0x340] sm:$0xff]
      %v317 = vld [vmem:[%s200 + $0x348] sm:$0xff]
      %v318 = vld [vmem:[%s200 + $0x350] sm:$0xff]
      %v319 = vld [vmem:[%s200 + $0x358] sm:$0xff]
      %v320 = vld [vmem:[%s200 + $0x360] sm:$0xff]
      %v321 = vld [vmem:[%s200 + $0x368] sm:$0xff]
      %v322 = vld [vmem:[%s200 + $0x370] sm:$0xff]
      %v323 = vld [vmem:[%s200 + $0x378] sm:$0xff]
      %v324 = vld [vmem:[%s200 + $0x380] sm:$0xff]
      %v325 = vld [vmem:[%s200 + $0x388] sm:$0xff]
      %v326 = vld [vmem:[%s200 + $0x390] sm:$0xff]
      %v327 = vld [vmem:[%s200 + $0x398] sm:$0xff]
      %v328 = vld [vmem:[%s200 + $0x3a0] sm:$0xff]
      %v329 = vld [vmem:[%s200 + $0x3a8] sm:$0xff]
      %v330 = vld [vmem:[%s200 + $0x3b0] sm:$0xff]
      %v331 = vld [vmem:[%s200 + $0x3b8] sm:$0xff]
      %v332 = vld [vmem:[%s200 + $0x3c0] sm:$0xff]
      %v333 = vld [vmem:[%s200 + $0x3c8] sm:$0xff]
      %v334 = vld [vmem:[%s200 + $0x3d0] sm:$0xff]
      %v335 = vld [vmem:[%s200 + $0x3d8] sm:$0xff]
      %v336 = vld [vmem:[%s200 + $0x3e0] sm:$0xff]
      %v337 = vld [vmem:[%s200 + $0x3e8] sm:$0xff]
      %v338 = vld [vmem:[%s200 + $0x3f0] sm:$0xff]
      %v339 = vld [vmem:[%s200 + $0x3f8] sm:$0xff]
      %v340 = vld [vmem:[%s1] sm:$0xff]
      %v341 = vld [vmem:[%s1 + $0x8] sm:$0xff]
      %v342 = vld [vmem:[%s1 + $0x10] sm:$0xff]
      %v343 = vld [vmem:[%s1 + $0x18] sm:$0xff]
      %v344 = vld [vmem:[%s1 + $0x20] sm:$0xff]
      %v345 = vld [vmem:[%s1 + $0x28] sm:$0xff]
      %v346 = vld [vmem:[%s1 + $0x30] sm:$0xff]
      %v347 = vld [vmem:[%s1 + $0x38] sm:$0xff]
      %v348 = vld [vmem:[%s1 + $0x40] sm:$0xff]
      %v349 = vld [vmem:[%s1 + $0x48] sm:$0xff]
      %v350 = vld [vmem:[%s1 + $0x50] sm:$0xff]
      %v351 = vld [vmem:[%s1 + $0x58] sm:$0xff]
      %v352 = vld [vmem:[%s1 + $0x60] sm:$0xff]
      %v353 = vld [vmem:[%s1 + $0x68] sm:$0xff]
      %v354 = vld [vmem:[%s1 + $0x70] sm:$0xff]
      %v355 = vld [vmem:[%s1 + $0x78] sm:$0xff]
      %v356 = vld [vmem:[%s2] sm:$0x1]
      %v358 = vlaneseq
      %v359 = vshrl.u32 %v358, 7
      %v360 = vsub.s32 0, %v359
      %v361 = vrot.slane %v356, %v360
      %363 = vmatprep.subr.mxu0 0.0
      %364 = vmatpush1.msra.mxu0 %v340
      %365 = vmatprep.subr.mxu0 0.0
      %366 = vmatpush1.msra.mxu0 %v341
      %367 = vmatprep.subr.mxu0 0.0
      %368 = vmatpush1.msra.mxu0 %v342
      %369 = vmatprep.subr.mxu0 0.0
      %370 = vmatpush1.msra.mxu0 %v343
      %371 = vmatprep.subr.mxu0 0.0
      %372 = vmatpush1.msra.mxu0 %v344
      %373 = vmatprep.subr.mxu0 0.0
      %374 = vmatpush1.msra.mxu0 %v345
      %375 = vmatprep.subr.mxu0 0.0
      %376 = vmatpush1.msra.mxu0 %v346
      %377 = vmatprep.subr.mxu0 0.0
      %378 = vmatpush1.msra.mxu0 %v347
      %379 = vmatprep.subr.mxu0 0.0
      %380 = vmatpush1.msra.mxu0 %v348
      %381 = vmatprep.subr.mxu0 0.0
      %382 = vmatpush1.msra.mxu0 %v349
      %383 = vmatprep.subr.mxu0 0.0
      %384 = vmatpush1.msra.mxu0 %v350
      %385 = vmatprep.subr.mxu0 0.0
      %386 = vmatpush1.msra.mxu0 %v351
      %387 = vmatprep.subr.mxu0 0.0
      %388 = vmatpush1.msra.mxu0 %v352
      %389 = vmatprep.subr.mxu0 0.0
      %390 = vmatpush1.msra.mxu0 %v353
      %391 = vmatprep.subr.mxu0 0.0
      %392 = vmatpush1.msra.mxu0 %v354
      %393 = vmatprep.subr.mxu0 0.0
      %394 = vmatpush1.msra.mxu0 %v355
      %395 = vmatprep.subr.mxu0 0.0
      %396 = vmatpush1.msra.mxu0 0.0
      %397 = vmatprep.subr.mxu0 0.0
      %398 = vmatpush1.msra.mxu0 0.0
      %399 = vmatprep.subr.mxu0 0.0
      %400 = vmatpush1.msra.mxu0 0.0
      %401 = vmatprep.subr.mxu0 0.0
      %402 = vmatpush1.msra.mxu0 0.0
      %403 = vmatprep.subr.mxu0 0.0
      %404 = vmatpush1.msra.mxu0 0.0
      %405 = vmatprep.subr.mxu0 0.0
      %406 = vmatpush1.msra.mxu0 0.0
      %407 = vmatprep.subr.mxu0 0.0
      %408 = vmatpush1.msra.mxu0 0.0
      %409 = vmatprep.subr.mxu0 0.0
      %410 = vmatpush1.msra.mxu0 0.0
      %411 = vmatprep.subr.mxu0 0.0
      %412 = vmatpush1.msra.mxu0 0.0
      %413 = vmatprep.subr.mxu0 0.0
      %414 = vmatpush1.msra.mxu0 0.0
      %415 = vmatprep.subr.mxu0 0.0
      %416 = vmatpush1.msra.mxu0 0.0
      %417 = vmatprep.subr.mxu0 0.0
      %418 = vmatpush1.msra.mxu0 0.0
      %419 = vmatprep.subr.mxu0 0.0
      %420 = vmatpush1.msra.mxu0 0.0
      %421 = vmatprep.subr.mxu0 0.0
      %422 = vmatpush1.msra.mxu0 0.0
      %423 = vmatprep.subr.mxu0 0.0
      %424 = vmatpush1.msra.mxu0 0.0
      %425 = vmatprep.subr.mxu0 0.0
      %426 = vmatpush1.msra.mxu0 0.0
      %427 = vmatprep.mubr.f32.mxu0 0.0
      %428 = vmatmul.mubr.f32.gmra.mrb[0].mxu0 %v212
      %v429 = vpop.f32.mrb[0].mxu0
      %v430 = vadd.f32 %v361, %v429
      %v431 = vpop.f32.mrb[0].mxu0
      %432 = vmatprep.mubr.f32.mxu0 0.0
      %433 = vmatmul.mubr.f32.gmra.mrb[0].mxu0 %v213
      %v434 = vpop.f32.mrb[0].mxu0
      %v435 = vadd.f32 %v361, %v434
      %v436 = vpop.f32.mrb[0].mxu0
      %437 = vmatprep.mubr.f32.mxu0 0.0
      %438 = vmatmul.mubr.f32.gmra.mrb[0].mxu0 %v214
      %v439 = vpop.f32.mrb[0].mxu0
      %v440 = vadd.f32 %v361, %v439
      %v441 = vpop.f32.mrb[0].mxu0
      %442 = vmatprep.mubr.f32.mxu0 0.0
      %443 = vmatmul.mubr.f32.gmra.mrb[0].mxu0 %v215
      %v444 = vpop.f32.mrb[0].mxu0
      %v445 = vadd.f32 %v361, %v444
      %v446 = vpop.f32.mrb[0].mxu0
      %447 = vmatprep.mubr.f32.mxu0 0.0
      %448 = vmatmul.mubr.f32.gmra.mrb[0].mxu0 %v216
      %v449 = vpop.f32.mrb[0].mxu0
      %v450 = vadd.f32 %v361, %v449
      %v451 = vpop.f32.mrb[0].mxu0
      %452 = vmatprep.mubr.f32.mxu0 0.0
      %453 = vmatmul.mubr.f32.gmra.mrb[0].mxu0 %v217
      %v454 = vpop.f32.mrb[0].mxu0
      %v455 = vadd.f32 %v361, %v454
      %v456 = vpop.f32.mrb[0].mxu0
      %457 = vmatprep.mubr.f32.mxu0 0.0
      %458 = vmatmul.mubr.f32.gmra.mrb[0].mxu0 %v218
      %v459 = vpop.f32.mrb[0].mxu0
      %v460 = vadd.f32 %v361, %v459
      %v461 = vpop.f32.mrb[0].mxu0
      %462 = vmatprep.mubr.f32.mxu0 0.0
      %463 = vmatmul.mubr.f32.gmra.mrb[0].mxu0 %v219
      %v464 = vpop.f32.mrb[0].mxu0
      %v465 = vadd.f32 %v361, %v464
      %v466 = vpop.f32.mrb[0].mxu0
      %467 = vmatprep.mubr.f32.mxu0 0.0
      %468 = vmatmul.mubr.f32.gmra.mrb[0].mxu0 %v220
      %v469 = vpop.f32.mrb[0].mxu0
      %v470 = vadd.f32 %v361, %v469
      %v471 = vpop.f32.mrb[0].mxu0
      %472 = vmatprep.mubr.f32.mxu0 0.0
      %473 = vmatmul.mubr.f32.gmra.mrb[0].mxu0 %v221
      %v474 = vpop.f32.mrb[0].mxu0
      %v475 = vadd.f32 %v361, %v474
      %v476 = vpop.f32.mrb[0].mxu0
      %477 = vmatprep.mubr.f32.mxu0 0.0
      %478 = vmatmul.mubr.f32.gmra.mrb[0].mxu0 %v222
      %v479 = vpop.f32.mrb[0].mxu0
      %v480 = vadd.f32 %v361, %v479
      %v481 = vpop.f32.mrb[0].mxu0
      %482 = vmatprep.mubr.f32.mxu0 0.0
      %483 = vmatmul.mubr.f32.gmra.mrb[0].mxu0 %v223
      %v484 = vpop.f32.mrb[0].mxu0
      %v485 = vadd.f32 %v361, %v484
      %v486 = vpop.f32.mrb[0].mxu0
      %487 = vmatprep.mubr.f32.mxu0 0.0
      %488 = vmatmul.mubr.f32.gmra.mrb[0].mxu0 %v224
      %v489 = vpop.f32.mrb[0].mxu0
      %v490 = vadd.f32 %v361, %v489
      %v491 = vpop.f32.mrb[0].mxu0
      %492 = vmatprep.mubr.f32.mxu0 0.0
      %493 = vmatmul.mubr.f32.gmra.mrb[0].mxu0 %v225
      %v494 = vpop.f32.mrb[0].mxu0
      %v495 = vadd.f32 %v361, %v494
      %v496 = vpop.f32.mrb[0].mxu0
      %497 = vmatprep.mubr.f32.mxu0 0.0
      %498 = vmatmul.mubr.f32.gmra.mrb[0].mxu0 %v226
      %v499 = vpop.f32.mrb[0].mxu0
      %v500 = vadd.f32 %v361, %v499
      %v501 = vpop.f32.mrb[0].mxu0
      %502 = vmatprep.mubr.f32.mxu0 0.0
      %503 = vmatmul.mubr.f32.gmra.mrb[0].mxu0 %v227
      %v504 = vpop.f32.mrb[0].mxu0
      %v505 = vadd.f32 %v361, %v504
      %v506 = vpop.f32.mrb[0].mxu0
      %507 = vmatprep.mubr.f32.mxu0 0.0
      %508 = vmatmul.mubr.f32.gmra.mrb[0].mxu0 %v228
      %v509 = vpop.f32.mrb[0].mxu0
      %v510 = vadd.f32 %v361, %v509
      %v511 = vpop.f32.mrb[0].mxu0
      %512 = vmatprep.mubr.f32.mxu0 0.0
      %513 = vmatmul.mubr.f32.gmra.mrb[0].mxu0 %v229
      %v514 = vpop.f32.mrb[0].mxu0
      %v515 = vadd.f32 %v361, %v514
      %v516 = vpop.f32.mrb[0].mxu0
      %517 = vmatprep.mubr.f32.mxu0 0.0
      %518 = vmatmul.mubr.f32.gmra.mrb[0].mxu0 %v230
      %v519 = vpop.f32.mrb[0].mxu0
      %v520 = vadd.f32 %v361, %v519
      %v521 = vpop.f32.mrb[0].mxu0
      %522 = vmatprep.mubr.f32.mxu0 0.0
      %523 = vmatmul.mubr.f32.gmra.mrb[0].mxu0 %v231
      %v524 = vpop.f32.mrb[0].mxu0
      %v525 = vadd.f32 %v361, %v524
      %v526 = vpop.f32.mrb[0].mxu0
      %527 = vmatprep.mubr.f32.mxu0 0.0
      %528 = vmatmul.mubr.f32.gmra.mrb[0].mxu0 %v232
      %v529 = vpop.f32.mrb[0].mxu0
      %v530 = vadd.f32 %v361, %v529
      %v531 = vpop.f32.mrb[0].mxu0
      %532 = vmatprep.mubr.f32.mxu0 0.0
      %533 = vmatmul.mubr.f32.gmra.mrb[0].mxu0 %v233
      %v534 = vpop.f32.mrb[0].mxu0
      %v535 = vadd.f32 %v361, %v534
      %v536 = vpop.f32.mrb[0].mxu0
      %537 = vmatprep.mubr.f32.mxu0 0.0
      %538 = vmatmul.mubr.f32.gmra.mrb[0].mxu0 %v234
      %v539 = vpop.f32.mrb[0].mxu0
      %v540 = vadd.f32 %v361, %v539
      %v541 = vpop.f32.mrb[0].mxu0
      %542 = vmatprep.mubr.f32.mxu0 0.0
      %543 = vmatmul.mubr.f32.gmra.mrb[0].mxu0 %v235
      %v544 = vpop.f32.mrb[0].mxu0
      %v545 = vadd.f32 %v361, %v544
      %v546 = vpop.f32.mrb[0].mxu0
      %547 = vmatprep.mubr.f32.mxu0 0.0
      %548 = vmatmul.mubr.f32.gmra.mrb[0].mxu0 %v236
      %v549 = vpop.f32.mrb[0].mxu0
      %v550 = vadd.f32 %v361, %v549
      %v551 = vpop.f32.mrb[0].mxu0
      %552 = vmatprep.mubr.f32.mxu0 0.0
      %553 = vmatmul.mubr.f32.gmra.mrb[0].mxu0 %v237
      %v554 = vpop.f32.mrb[0].mxu0
      %v555 = vadd.f32 %v361, %v554
      %v556 = vpop.f32.mrb[0].mxu0
      %557 = vmatprep.mubr.f32.mxu0 0.0
      %558 = vmatmul.mubr.f32.gmra.mrb[0].mxu0 %v238
      %v559 = vpop.f32.mrb[0].mxu0
      %v560 = vadd.f32 %v361, %v559
      %v561 = vpop.f32.mrb[0].mxu0
      %562 = vmatprep.mubr.f32.mxu0 0.0
      %563 = vmatmul.mubr.f32.gmra.mrb[0].mxu0 %v239
      %v564 = vpop.f32.mrb[0].mxu0
      %v565 = vadd.f32 %v361, %v564
      %v566 = vpop.f32.mrb[0].mxu0
      %567 = vmatprep.mubr.f32.mxu0 0.0
      %568 = vmatmul.mubr.f32.gmra.mrb[0].mxu0 %v240
      %v569 = vpop.f32.mrb[0].mxu0
      %v570 = vadd.f32 %v361, %v569
      %v571 = vpop.f32.mrb[0].mxu0
      %572 = vmatprep.mubr.f32.mxu0 0.0
      %573 = vmatmul.mubr.f32.gmra.mrb[0].mxu0 %v241
      %v574 = vpop.f32.mrb[0].mxu0
      %v575 = vadd.f32 %v361, %v574
      %v576 = vpop.f32.mrb[0].mxu0
      %577 = vmatprep.mubr.f32.mxu0 0.0
      %578 = vmatmul.mubr.f32.gmra.mrb[0].mxu0 %v242
      %v579 = vpop.f32.mrb[0].mxu0
      %v580 = vadd.f32 %v361, %v579
      %v581 = vpop.f32.mrb[0].mxu0
      %582 = vmatprep.mubr.f32.mxu0 0.0
      %583 = vmatmul.mubr.f32.gmra.mrb[0].mxu0 %v243
      %v584 = vpop.f32.mrb[0].mxu0
      %v585 = vadd.f32 %v361, %v584
      %v586 = vpop.f32.mrb[0].mxu0
      %587 = vmatprep.mubr.f32.mxu0 0.0
      %588 = vmatmul.mubr.f32.gmra.mrb[0].mxu0 %v244
      %v589 = vpop.f32.mrb[0].mxu0
      %v590 = vadd.f32 %v361, %v589
      %v591 = vpop.f32.mrb[0].mxu0
      %592 = vmatprep.mubr.f32.mxu0 0.0
      %593 = vmatmul.mubr.f32.gmra.mrb[0].mxu0 %v245
      %v594 = vpop.f32.mrb[0].mxu0
      %v595 = vadd.f32 %v361, %v594
      %v596 = vpop.f32.mrb[0].mxu0
      %597 = vmatprep.mubr.f32.mxu0 0.0
      %598 = vmatmul.mubr.f32.gmra.mrb[0].mxu0 %v246
      %v599 = vpop.f32.mrb[0].mxu0
      %v600 = vadd.f32 %v361, %v599
      %v601 = vpop.f32.mrb[0].mxu0
      %602 = vmatprep.mubr.f32.mxu0 0.0
      %603 = vmatmul.mubr.f32.gmra.mrb[0].mxu0 %v247
      %v604 = vpop.f32.mrb[0].mxu0
      %v605 = vadd.f32 %v361, %v604
      %v606 = vpop.f32.mrb[0].mxu0
      %607 = vmatprep.mubr.f32.mxu0 0.0
      %608 = vmatmul.mubr.f32.gmra.mrb[0].mxu0 %v248
      %v609 = vpop.f32.mrb[0].mxu0
      %v610 = vadd.f32 %v361, %v609
      %v611 = vpop.f32.mrb[0].mxu0
      %612 = vmatprep.mubr.f32.mxu0 0.0
      %613 = vmatmul.mubr.f32.gmra.mrb[0].mxu0 %v249
      %v614 = vpop.f32.mrb[0].mxu0
      %v615 = vadd.f32 %v361, %v614
      %v616 = vpop.f32.mrb[0].mxu0
      %617 = vmatprep.mubr.f32.mxu0 0.0
      %618 = vmatmul.mubr.f32.gmra.mrb[0].mxu0 %v250
      %v619 = vpop.f32.mrb[0].mxu0
      %v620 = vadd.f32 %v361, %v619
      %v621 = vpop.f32.mrb[0].mxu0
      %622 = vmatprep.mubr.f32.mxu0 0.0
      %623 = vmatmul.mubr.f32.gmra.mrb[0].mxu0 %v251
      %v624 = vpop.f32.mrb[0].mxu0
      %v625 = vadd.f32 %v361, %v624
      %v626 = vpop.f32.mrb[0].mxu0
      %627 = vmatprep.mubr.f32.mxu0 0.0
      %628 = vmatmul.mubr.f32.gmra.mrb[0].mxu0 %v252
      %v629 = vpop.f32.mrb[0].mxu0
      %v630 = vadd.f32 %v361, %v629
      %v631 = vpop.f32.mrb[0].mxu0
      %632 = vmatprep.mubr.f32.mxu0 0.0
      %633 = vmatmul.mubr.f32.gmra.mrb[0].mxu0 %v253
      %v634 = vpop.f32.mrb[0].mxu0
      %v635 = vadd.f32 %v361, %v634
      %v636 = vpop.f32.mrb[0].mxu0
      %637 = vmatprep.mubr.f32.mxu0 0.0
      %638 = vmatmul.mubr.f32.gmra.mrb[0].mxu0 %v254
      %v639 = vpop.f32.mrb[0].mxu0
      %v640 = vadd.f32 %v361, %v639
      %v641 = vpop.f32.mrb[0].mxu0
      %642 = vmatprep.mubr.f32.mxu0 0.0
      %643 = vmatmul.mubr.f32.gmra.mrb[0].mxu0 %v255
      %v644 = vpop.f32.mrb[0].mxu0
      %v645 = vadd.f32 %v361, %v644
      %v646 = vpop.f32.mrb[0].mxu0
      %647 = vmatprep.mubr.f32.mxu0 0.0
      %648 = vmatmul.mubr.f32.gmra.mrb[0].mxu0 %v256
      %v649 = vpop.f32.mrb[0].mxu0
      %v650 = vadd.f32 %v361, %v649
      %v651 = vpop.f32.mrb[0].mxu0
      %652 = vmatprep.mubr.f32.mxu0 0.0
      %653 = vmatmul.mubr.f32.gmra.mrb[0].mxu0 %v257
      %v654 = vpop.f32.mrb[0].mxu0
      %v655 = vadd.f32 %v361, %v654
      %v656 = vpop.f32.mrb[0].mxu0
      %657 = vmatprep.mubr.f32.mxu0 0.0
      %658 = vmatmul.mubr.f32.gmra.mrb[0].mxu0 %v258
      %v659 = vpop.f32.mrb[0].mxu0
      %v660 = vadd.f32 %v361, %v659
      %v661 = vpop.f32.mrb[0].mxu0
      %662 = vmatprep.mubr.f32.mxu0 0.0
      %663 = vmatmul.mubr.f32.gmra.mrb[0].mxu0 %v259
      %v664 = vpop.f32.mrb[0].mxu0
      %v665 = vadd.f32 %v361, %v664
      %v666 = vpop.f32.mrb[0].mxu0
      %667 = vmatprep.mubr.f32.mxu0 0.0
      %668 = vmatmul.mubr.f32.gmra.mrb[0].mxu0 %v260
      %v669 = vpop.f32.mrb[0].mxu0
      %v670 = vadd.f32 %v361, %v669
      %v671 = vpop.f32.mrb[0].mxu0
      %672 = vmatprep.mubr.f32.mxu0 0.0
      %673 = vmatmul.mubr.f32.gmra.mrb[0].mxu0 %v261
      %v674 = vpop.f32.mrb[0].mxu0
      %v675 = vadd.f32 %v361, %v674
      %v676 = vpop.f32.mrb[0].mxu0
      %677 = vmatprep.mubr.f32.mxu0 0.0
      %678 = vmatmul.mubr.f32.gmra.mrb[0].mxu0 %v262
      %v679 = vpop.f32.mrb[0].mxu0
      %v680 = vadd.f32 %v361, %v679
      %v681 = vpop.f32.mrb[0].mxu0
      %682 = vmatprep.mubr.f32.mxu0 0.0
      %683 = vmatmul.mubr.f32.gmra.mrb[0].mxu0 %v263
      %v684 = vpop.f32.mrb[0].mxu0
      %v685 = vadd.f32 %v361, %v684
      %v686 = vpop.f32.mrb[0].mxu0
      %687 = vmatprep.mubr.f32.mxu0 0.0
      %688 = vmatmul.mubr.f32.gmra.mrb[0].mxu0 %v264
      %v689 = vpop.f32.mrb[0].mxu0
      %v690 = vadd.f32 %v361, %v689
      %v691 = vpop.f32.mrb[0].mxu0
      %692 = vmatprep.mubr.f32.mxu0 0.0
      %693 = vmatmul.mubr.f32.gmra.mrb[0].mxu0 %v265
      %v694 = vpop.f32.mrb[0].mxu0
      %v695 = vadd.f32 %v361, %v694
      %v696 = vpop.f32.mrb[0].mxu0
      %697 = vmatprep.mubr.f32.mxu0 0.0
      %698 = vmatmul.mubr.f32.gmra.mrb[0].mxu0 %v266
      %v699 = vpop.f32.mrb[0].mxu0
      %v700 = vadd.f32 %v361, %v699
      %v701 = vpop.f32.mrb[0].mxu0
      %702 = vmatprep.mubr.f32.mxu0 0.0
      %703 = vmatmul.mubr.f32.gmra.mrb[0].mxu0 %v267
      %v704 = vpop.f32.mrb[0].mxu0
      %v705 = vadd.f32 %v361, %v704
      %v706 = vpop.f32.mrb[0].mxu0
      %707 = vmatprep.mubr.f32.mxu0 0.0
      %708 = vmatmul.mubr.f32.gmra.mrb[0].mxu0 %v268
      %v709 = vpop.f32.mrb[0].mxu0
      %v710 = vadd.f32 %v361, %v709
      %v711 = vpop.f32.mrb[0].mxu0
      %712 = vmatprep.mubr.f32.mxu0 0.0
      %713 = vmatmul.mubr.f32.gmra.mrb[0].mxu0 %v269
      %v714 = vpop.f32.mrb[0].mxu0
      %v715 = vadd.f32 %v361, %v714
      %v716 = vpop.f32.mrb[0].mxu0
      %717 = vmatprep.mubr.f32.mxu0 0.0
      %718 = vmatmul.mubr.f32.gmra.mrb[0].mxu0 %v270
      %v719 = vpop.f32.mrb[0].mxu0
      %v720 = vadd.f32 %v361, %v719
      %v721 = vpop.f32.mrb[0].mxu0
      %722 = vmatprep.mubr.f32.mxu0 0.0
      %723 = vmatmul.mubr.f32.gmra.mrb[0].mxu0 %v271
      %v724 = vpop.f32.mrb[0].mxu0
      %v725 = vadd.f32 %v361, %v724
      %v726 = vpop.f32.mrb[0].mxu0
      %727 = vmatprep.mubr.f32.mxu0 0.0
      %728 = vmatmul.mubr.f32.gmra.mrb[0].mxu0 %v272
      %v729 = vpop.f32.mrb[0].mxu0
      %v730 = vadd.f32 %v361, %v729
      %v731 = vpop.f32.mrb[0].mxu0
      %732 = vmatprep.mubr.f32.mxu0 0.0
      %733 = vmatmul.mubr.f32.gmra.mrb[0].mxu0 %v273
      %v734 = vpop.f32.mrb[0].mxu0
      %v735 = vadd.f32 %v361, %v734
      %v736 = vpop.f32.mrb[0].mxu0
      %737 = vmatprep.mubr.f32.mxu0 0.0
      %738 = vmatmul.mubr.f32.gmra.mrb[0].mxu0 %v274
      %v739 = vpop.f32.mrb[0].mxu0
      %v740 = vadd.f32 %v361, %v739
      %v741 = vpop.f32.mrb[0].mxu0
      %742 = vmatprep.mubr.f32.mxu0 0.0
      %743 = vmatmul.mubr.f32.gmra.mrb[0].mxu0 %v275
      %v744 = vpop.f32.mrb[0].mxu0
      %v745 = vadd.f32 %v361, %v744
      %v746 = vpop.f32.mrb[0].mxu0
      %747 = vmatprep.mubr.f32.mxu0 0.0
      %748 = vmatmul.mubr.f32.gmra.mrb[0].mxu0 %v276
      %v749 = vpop.f32.mrb[0].mxu0
      %v750 = vadd.f32 %v361, %v749
      %v751 = vpop.f32.mrb[0].mxu0
      %752 = vmatprep.mubr.f32.mxu0 0.0
      %753 = vmatmul.mubr.f32.gmra.mrb[0].mxu0 %v277
      %v754 = vpop.f32.mrb[0].mxu0
      %v755 = vadd.f32 %v361, %v754
      %v756 = vpop.f32.mrb[0].mxu0
      %757 = vmatprep.mubr.f32.mxu0 0.0
      %758 = vmatmul.mubr.f32.gmra.mrb[0].mxu0 %v278
      %v759 = vpop.f32.mrb[0].mxu0
      %v760 = vadd.f32 %v361, %v759
      %v761 = vpop.f32.mrb[0].mxu0
      %762 = vmatprep.mubr.f32.mxu0 0.0
      %763 = vmatmul.mubr.f32.gmra.mrb[0].mxu0 %v279
      %v764 = vpop.f32.mrb[0].mxu0
      %v765 = vadd.f32 %v361, %v764
      %v766 = vpop.f32.mrb[0].mxu0
      %767 = vmatprep.mubr.f32.mxu0 0.0
      %768 = vmatmul.mubr.f32.gmra.mrb[0].mxu0 %v280
      %v769 = vpop.f32.mrb[0].mxu0
      %v770 = vadd.f32 %v361, %v769
      %v771 = vpop.f32.mrb[0].mxu0
      %772 = vmatprep.mubr.f32.mxu0 0.0
      %773 = vmatmul.mubr.f32.gmra.mrb[0].mxu0 %v281
      %v774 = vpop.f32.mrb[0].mxu0
      %v775 = vadd.f32 %v361, %v774
      %v776 = vpop.f32.mrb[0].mxu0
      %777 = vmatprep.mubr.f32.mxu0 0.0
      %778 = vmatmul.mubr.f32.gmra.mrb[0].mxu0 %v282
      %v779 = vpop.f32.mrb[0].mxu0
      %v780 = vadd.f32 %v361, %v779
      %v781 = vpop.f32.mrb[0].mxu0
      %782 = vmatprep.mubr.f32.mxu0 0.0
      %783 = vmatmul.mubr.f32.gmra.mrb[0].mxu0 %v283
      %v784 = vpop.f32.mrb[0].mxu0
      %v785 = vadd.f32 %v361, %v784
      %v786 = vpop.f32.mrb[0].mxu0
      %787 = vmatprep.mubr.f32.mxu0 0.0
      %788 = vmatmul.mubr.f32.gmra.mrb[0].mxu0 %v284
      %v789 = vpop.f32.mrb[0].mxu0
      %v790 = vadd.f32 %v361, %v789
      %v791 = vpop.f32.mrb[0].mxu0
      %792 = vmatprep.mubr.f32.mxu0 0.0
      %793 = vmatmul.mubr.f32.gmra.mrb[0].mxu0 %v285
      %v794 = vpop.f32.mrb[0].mxu0
      %v795 = vadd.f32 %v361, %v794
      %v796 = vpop.f32.mrb[0].mxu0
      %797 = vmatprep.mubr.f32.mxu0 0.0
      %798 = vmatmul.mubr.f32.gmra.mrb[0].mxu0 %v286
      %v799 = vpop.f32.mrb[0].mxu0
      %v800 = vadd.f32 %v361, %v799
      %v801 = vpop.f32.mrb[0].mxu0
      %802 = vmatprep.mubr.f32.mxu0 0.0
      %803 = vmatmul.mubr.f32.gmra.mrb[0].mxu0 %v287
      %v804 = vpop.f32.mrb[0].mxu0
      %v805 = vadd.f32 %v361, %v804
      %v806 = vpop.f32.mrb[0].mxu0
      %807 = vmatprep.mubr.f32.mxu0 0.0
      %808 = vmatmul.mubr.f32.gmra.mrb[0].mxu0 %v288
      %v809 = vpop.f32.mrb[0].mxu0
      %v810 = vadd.f32 %v361, %v809
      %v811 = vpop.f32.mrb[0].mxu0
      %812 = vmatprep.mubr.f32.mxu0 0.0
      %813 = vmatmul.mubr.f32.gmra.mrb[0].mxu0 %v289
      %v814 = vpop.f32.mrb[0].mxu0
      %v815 = vadd.f32 %v361, %v814
      %v816 = vpop.f32.mrb[0].mxu0
      %817 = vmatprep.mubr.f32.mxu0 0.0
      %818 = vmatmul.mubr.f32.gmra.mrb[0].mxu0 %v290
      %v819 = vpop.f32.mrb[0].mxu0
      %v820 = vadd.f32 %v361, %v819
      %v821 = vpop.f32.mrb[0].mxu0
      %822 = vmatprep.mubr.f32.mxu0 0.0
      %823 = vmatmul.mubr.f32.gmra.mrb[0].mxu0 %v291
      %v824 = vpop.f32.mrb[0].mxu0
      %v825 = vadd.f32 %v361, %v824
      %v826 = vpop.f32.mrb[0].mxu0
      %827 = vmatprep.mubr.f32.mxu0 0.0
      %828 = vmatmul.mubr.f32.gmra.mrb[0].mxu0 %v292
      %v829 = vpop.f32.mrb[0].mxu0
      %v830 = vadd.f32 %v361, %v829
      %v831 = vpop.f32.mrb[0].mxu0
      %832 = vmatprep.mubr.f32.mxu0 0.0
      %833 = vmatmul.mubr.f32.gmra.mrb[0].mxu0 %v293
      %v834 = vpop.f32.mrb[0].mxu0
      %v835 = vadd.f32 %v361, %v834
      %v836 = vpop.f32.mrb[0].mxu0
      %837 = vmatprep.mubr.f32.mxu0 0.0
      %838 = vmatmul.mubr.f32.gmra.mrb[0].mxu0 %v294
      %v839 = vpop.f32.mrb[0].mxu0
      %v840 = vadd.f32 %v361, %v839
      %v841 = vpop.f32.mrb[0].mxu0
      %842 = vmatprep.mubr.f32.mxu0 0.0
      %843 = vmatmul.mubr.f32.gmra.mrb[0].mxu0 %v295
      %v844 = vpop.f32.mrb[0].mxu0
      %v845 = vadd.f32 %v361, %v844
      %v846 = vpop.f32.mrb[0].mxu0
      %847 = vmatprep.mubr.f32.mxu0 0.0
      %848 = vmatmul.mubr.f32.gmra.mrb[0].mxu0 %v296
      %v849 = vpop.f32.mrb[0].mxu0
      %v850 = vadd.f32 %v361, %v849
      %v851 = vpop.f32.mrb[0].mxu0
      %852 = vmatprep.mubr.f32.mxu0 0.0
      %853 = vmatmul.mubr.f32.gmra.mrb[0].mxu0 %v297
      %v854 = vpop.f32.mrb[0].mxu0
      %v855 = vadd.f32 %v361, %v854
      %v856 = vpop.f32.mrb[0].mxu0
      %857 = vmatprep.mubr.f32.mxu0 0.0
      %858 = vmatmul.mubr.f32.gmra.mrb[0].mxu0 %v298
      %v859 = vpop.f32.mrb[0].mxu0
      %v860 = vadd.f32 %v361, %v859
      %v861 = vpop.f32.mrb[0].mxu0
      %862 = vmatprep.mubr.f32.mxu0 0.0
      %863 = vmatmul.mubr.f32.gmra.mrb[0].mxu0 %v299
      %v864 = vpop.f32.mrb[0].mxu0
      %v865 = vadd.f32 %v361, %v864
      %v866 = vpop.f32.mrb[0].mxu0
      %867 = vmatprep.mubr.f32.mxu0 0.0
      %868 = vmatmul.mubr.f32.gmra.mrb[0].mxu0 %v300
      %v869 = vpop.f32.mrb[0].mxu0
      %v870 = vadd.f32 %v361, %v869
      %v871 = vpop.f32.mrb[0].mxu0
      %872 = vmatprep.mubr.f32.mxu0 0.0
      %873 = vmatmul.mubr.f32.gmra.mrb[0].mxu0 %v301
      %v874 = vpop.f32.mrb[0].mxu0
      %v875 = vadd.f32 %v361, %v874
      %v876 = vpop.f32.mrb[0].mxu0
      %877 = vmatprep.mubr.f32.mxu0 0.0
      %878 = vmatmul.mubr.f32.gmra.mrb[0].mxu0 %v302
      %v879 = vpop.f32.mrb[0].mxu0
      %v880 = vadd.f32 %v361, %v879
      %v881 = vpop.f32.mrb[0].mxu0
      %882 = vmatprep.mubr.f32.mxu0 0.0
      %883 = vmatmul.mubr.f32.gmra.mrb[0].mxu0 %v303
      %v884 = vpop.f32.mrb[0].mxu0
      %v885 = vadd.f32 %v361, %v884
      %v886 = vpop.f32.mrb[0].mxu0
      %887 = vmatprep.mubr.f32.mxu0 0.0
      %888 = vmatmul.mubr.f32.gmra.mrb[0].mxu0 %v304
      %v889 = vpop.f32.mrb[0].mxu0
      %v890 = vadd.f32 %v361, %v889
      %v891 = vpop.f32.mrb[0].mxu0
      %892 = vmatprep.mubr.f32.mxu0 0.0
      %893 = vmatmul.mubr.f32.gmra.mrb[0].mxu0 %v305
      %v894 = vpop.f32.mrb[0].mxu0
      %v895 = vadd.f32 %v361, %v894
      %v896 = vpop.f32.mrb[0].mxu0
      %897 = vmatprep.mubr.f32.mxu0 0.0
      %898 = vmatmul.mubr.f32.gmra.mrb[0].mxu0 %v306
      %v899 = vpop.f32.mrb[0].mxu0
      %v900 = vadd.f32 %v361, %v899
      %v901 = vpop.f32.mrb[0].mxu0
      %902 = vmatprep.mubr.f32.mxu0 0.0
      %903 = vmatmul.mubr.f32.gmra.mrb[0].mxu0 %v307
      %v904 = vpop.f32.mrb[0].mxu0
      %v905 = vadd.f32 %v361, %v904
      %v906 = vpop.f32.mrb[0].mxu0
      %907 = vmatprep.mubr.f32.mxu0 0.0
      %908 = vmatmul.mubr.f32.gmra.mrb[0].mxu0 %v308
      %v909 = vpop.f32.mrb[0].mxu0
      %v910 = vadd.f32 %v361, %v909
      %v911 = vpop.f32.mrb[0].mxu0
      %912 = vmatprep.mubr.f32.mxu0 0.0
      %913 = vmatmul.mubr.f32.gmra.mrb[0].mxu0 %v309
      %v914 = vpop.f32.mrb[0].mxu0
      %v915 = vadd.f32 %v361, %v914
      %v916 = vpop.f32.mrb[0].mxu0
      %917 = vmatprep.mubr.f32.mxu0 0.0
      %918 = vmatmul.mubr.f32.gmra.mrb[0].mxu0 %v310
      %v919 = vpop.f32.mrb[0].mxu0
      %v920 = vadd.f32 %v361, %v919
      %v921 = vpop.f32.mrb[0].mxu0
      %922 = vmatprep.mubr.f32.mxu0 0.0
      %923 = vmatmul.mubr.f32.gmra.mrb[0].mxu0 %v311
      %v924 = vpop.f32.mrb[0].mxu0
      %v925 = vadd.f32 %v361, %v924
      %v926 = vpop.f32.mrb[0].mxu0
      %927 = vmatprep.mubr.f32.mxu0 0.0
      %928 = vmatmul.mubr.f32.gmra.mrb[0].mxu0 %v312
      %v929 = vpop.f32.mrb[0].mxu0
      %v930 = vadd.f32 %v361, %v929
      %v931 = vpop.f32.mrb[0].mxu0
      %932 = vmatprep.mubr.f32.mxu0 0.0
      %933 = vmatmul.mubr.f32.gmra.mrb[0].mxu0 %v313
      %v934 = vpop.f32.mrb[0].mxu0
      %v935 = vadd.f32 %v361, %v934
      %v936 = vpop.f32.mrb[0].mxu0
      %937 = vmatprep.mubr.f32.mxu0 0.0
      %938 = vmatmul.mubr.f32.gmra.mrb[0].mxu0 %v314
      %v939 = vpop.f32.mrb[0].mxu0
      %v940 = vadd.f32 %v361, %v939
      %v941 = vpop.f32.mrb[0].mxu0
      %942 = vmatprep.mubr.f32.mxu0 0.0
      %943 = vmatmul.mubr.f32.gmra.mrb[0].mxu0 %v315
      %v944 = vpop.f32.mrb[0].mxu0
      %v945 = vadd.f32 %v361, %v944
      %v946 = vpop.f32.mrb[0].mxu0
      %947 = vmatprep.mubr.f32.mxu0 0.0
      %948 = vmatmul.mubr.f32.gmra.mrb[0].mxu0 %v316
      %v949 = vpop.f32.mrb[0].mxu0
      %v950 = vadd.f32 %v361, %v949
      %v951 = vpop.f32.mrb[0].mxu0
      %952 = vmatprep.mubr.f32.mxu0 0.0
      %953 = vmatmul.mubr.f32.gmra.mrb[0].mxu0 %v317
      %v954 = vpop.f32.mrb[0].mxu0
      %v955 = vadd.f32 %v361, %v954
      %v956 = vpop.f32.mrb[0].mxu0
      %957 = vmatprep.mubr.f32.mxu0 0.0
      %958 = vmatmul.mubr.f32.gmra.mrb[0].mxu0 %v318
      %v959 = vpop.f32.mrb[0].mxu0
      %v960 = vadd.f32 %v361, %v959
      %v961 = vpop.f32.mrb[0].mxu0
      %962 = vmatprep.mubr.f32.mxu0 0.0
      %963 = vmatmul.mubr.f32.gmra.mrb[0].mxu0 %v319
      %v964 = vpop.f32.mrb[0].mxu0
      %v965 = vadd.f32 %v361, %v964
      %v966 = vpop.f32.mrb[0].mxu0
      %967 = vmatprep.mubr.f32.mxu0 0.0
      %968 = vmatmul.mubr.f32.gmra.mrb[0].mxu0 %v320
      %v969 = vpop.f32.mrb[0].mxu0
      %v970 = vadd.f32 %v361, %v969
      %v971 = vpop.f32.mrb[0].mxu0
      %972 = vmatprep.mubr.f32.mxu0 0.0
      %973 = vmatmul.mubr.f32.gmra.mrb[0].mxu0 %v321
      %v974 = vpop.f32.mrb[0].mxu0
      %v975 = vadd.f32 %v361, %v974
      %v976 = vpop.f32.mrb[0].mxu0
      %977 = vmatprep.mubr.f32.mxu0 0.0
      %978 = vmatmul.mubr.f32.gmra.mrb[0].mxu0 %v322
      %v979 = vpop.f32.mrb[0].mxu0
      %v980 = vadd.f32 %v361, %v979
      %v981 = vpop.f32.mrb[0].mxu0
      %982 = vmatprep.mubr.f32.mxu0 0.0
      %983 = vmatmul.mubr.f32.gmra.mrb[0].mxu0 %v323
      %v984 = vpop.f32.mrb[0].mxu0
      %v985 = vadd.f32 %v361, %v984
      %v986 = vpop.f32.mrb[0].mxu0
      %987 = vmatprep.mubr.f32.mxu0 0.0
      %988 = vmatmul.mubr.f32.gmra.mrb[0].mxu0 %v324
      %v989 = vpop.f32.mrb[0].mxu0
      %v990 = vadd.f32 %v361, %v989
      %v991 = vpop.f32.mrb[0].mxu0
      %992 = vmatprep.mubr.f32.mxu0 0.0
      %993 = vmatmul.mubr.f32.gmra.mrb[0].mxu0 %v325
      %v994 = vpop.f32.mrb[0].mxu0
      %v995 = vadd.f32 %v361, %v994
      %v996 = vpop.f32.mrb[0].mxu0
      %997 = vmatprep.mubr.f32.mxu0 0.0
      %998 = vmatmul.mubr.f32.gmra.mrb[0].mxu0 %v326
      %v999 = vpop.f32.mrb[0].mxu0
      %v1000 = vadd.f32 %v361, %v999
      %v1001 = vpop.f32.mrb[0].mxu0
      %1002 = vmatprep.mubr.f32.mxu0 0.0
      %1003 = vmatmul.mubr.f32.gmra.mrb[0].mxu0 %v327
      %v1004 = vpop.f32.mrb[0].mxu0
      %v1005 = vadd.f32 %v361, %v1004
      %v1006 = vpop.f32.mrb[0].mxu0
      %1007 = vmatprep.mubr.f32.mxu0 0.0
      %1008 = vmatmul.mubr.f32.gmra.mrb[0].mxu0 %v328
      %v1009 = vpop.f32.mrb[0].mxu0
      %v1010 = vadd.f32 %v361, %v1009
      %v1011 = vpop.f32.mrb[0].mxu0
      %1012 = vmatprep.mubr.f32.mxu0 0.0
      %1013 = vmatmul.mubr.f32.gmra.mrb[0].mxu0 %v329
      %v1014 = vpop.f32.mrb[0].mxu0
      %v1015 = vadd.f32 %v361, %v1014
      %v1016 = vpop.f32.mrb[0].mxu0
      %1017 = vmatprep.mubr.f32.mxu0 0.0
      %1018 = vmatmul.mubr.f32.gmra.mrb[0].mxu0 %v330
      %v1019 = vpop.f32.mrb[0].mxu0
      %v1020 = vadd.f32 %v361, %v1019
      %v1021 = vpop.f32.mrb[0].mxu0
      %1022 = vmatprep.mubr.f32.mxu0 0.0
      %1023 = vmatmul.mubr.f32.gmra.mrb[0].mxu0 %v331
      %v1024 = vpop.f32.mrb[0].mxu0
      %v1025 = vadd.f32 %v361, %v1024
      %v1026 = vpop.f32.mrb[0].mxu0
      %1027 = vmatprep.mubr.f32.mxu0 0.0
      %1028 = vmatmul.mubr.f32.gmra.mrb[0].mxu0 %v332
      %v1029 = vpop.f32.mrb[0].mxu0
      %v1030 = vadd.f32 %v361, %v1029
      %v1031 = vpop.f32.mrb[0].mxu0
      %1032 = vmatprep.mubr.f32.mxu0 0.0
      %1033 = vmatmul.mubr.f32.gmra.mrb[0].mxu0 %v333
      %v1034 = vpop.f32.mrb[0].mxu0
      %v1035 = vadd.f32 %v361, %v1034
      %v1036 = vpop.f32.mrb[0].mxu0
      %1037 = vmatprep.mubr.f32.mxu0 0.0
      %1038 = vmatmul.mubr.f32.gmra.mrb[0].mxu0 %v334
      %v1039 = vpop.f32.mrb[0].mxu0
      %v1040 = vadd.f32 %v361, %v1039
      %v1041 = vpop.f32.mrb[0].mxu0
      %1042 = vmatprep.mubr.f32.mxu0 0.0
      %1043 = vmatmul.mubr.f32.gmra.mrb[0].mxu0 %v335
      %v1044 = vpop.f32.mrb[0].mxu0
      %v1045 = vadd.f32 %v361, %v1044
      %v1046 = vpop.f32.mrb[0].mxu0
      %1047 = vmatprep.mubr.f32.mxu0 0.0
      %1048 = vmatmul.mubr.f32.gmra.mrb[0].mxu0 %v336
      %v1049 = vpop.f32.mrb[0].mxu0
      %v1050 = vadd.f32 %v361, %v1049
      %v1051 = vpop.f32.mrb[0].mxu0
      %1052 = vmatprep.mubr.f32.mxu0 0.0
      %1053 = vmatmul.mubr.f32.gmra.mrb[0].mxu0 %v337
      %v1054 = vpop.f32.mrb[0].mxu0
      %v1055 = vadd.f32 %v361, %v1054
      %v1056 = vpop.f32.mrb[0].mxu0
      %1057 = vmatprep.mubr.f32.mxu0 0.0
      %1058 = vmatmul.mubr.f32.gmra.mrb[0].mxu0 %v338
      %v1059 = vpop.f32.mrb[0].mxu0
      %v1060 = vadd.f32 %v361, %v1059
      %v1061 = vpop.f32.mrb[0].mxu0
      %1062 = vmatprep.mubr.f32.mxu0 0.0
      %1063 = vmatmul.mubr.f32.gmra.mrb[0].mxu0 %v339
      %v1064 = vpop.f32.mrb[0].mxu0
      %v1065 = vadd.f32 %v361, %v1064
      %v1066 = vpop.f32.mrb[0].mxu0
      %1067 = vdwg.mxu0
      %v1068 = vmax.f32 %v430, 0.0
      %v1069 = vmax.f32 %v435, 0.0
      %v1070 = vmax.f32 %v440, 0.0
      %v1071 = vmax.f32 %v445, 0.0
      %v1072 = vmax.f32 %v450, 0.0
      %v1073 = vmax.f32 %v455, 0.0
      %v1074 = vmax.f32 %v460, 0.0
      %v1075 = vmax.f32 %v465, 0.0
      %v1076 = vmax.f32 %v470, 0.0
      %v1077 = vmax.f32 %v475, 0.0
      %v1078 = vmax.f32 %v480, 0.0
      %v1079 = vmax.f32 %v485, 0.0
      %v1080 = vmax.f32 %v490, 0.0
      %v1081 = vmax.f32 %v495, 0.0
      %v1082 = vmax.f32 %v500, 0.0
      %v1083 = vmax.f32 %v505, 0.0
      %v1084 = vmax.f32 %v510, 0.0
      %v1085 = vmax.f32 %v515, 0.0
      %v1086 = vmax.f32 %v520, 0.0
      %v1087 = vmax.f32 %v525, 0.0
      %v1088 = vmax.f32 %v530, 0.0
      %v1089 = vmax.f32 %v535, 0.0
      %v1090 = vmax.f32 %v540, 0.0
      %v1091 = vmax.f32 %v545, 0.0
      %v1092 = vmax.f32 %v550, 0.0
      %v1093 = vmax.f32 %v555, 0.0
      %v1094 = vmax.f32 %v560, 0.0
      %v1095 = vmax.f32 %v565, 0.0
      %v1096 = vmax.f32 %v570, 0.0
      %v1097 = vmax.f32 %v575, 0.0
      %v1098 = vmax.f32 %v580, 0.0
      %v1099 = vmax.f32 %v585, 0.0
      %v1100 = vmax.f32 %v590, 0.0
      %v1101 = vmax.f32 %v595, 0.0
      %v1102 = vmax.f32 %v600, 0.0
      %v1103 = vmax.f32 %v605, 0.0
      %v1104 = vmax.f32 %v610, 0.0
      %v1105 = vmax.f32 %v615, 0.0
      %v1106 = vmax.f32 %v620, 0.0
      %v1107 = vmax.f32 %v625, 0.0
      %v1108 = vmax.f32 %v630, 0.0
      %v1109 = vmax.f32 %v635, 0.0
      %v1110 = vmax.f32 %v640, 0.0
      %v1111 = vmax.f32 %v645, 0.0
      %v1112 = vmax.f32 %v650, 0.0
      %v1113 = vmax.f32 %v655, 0.0
      %v1114 = vmax.f32 %v660, 0.0
      %v1115 = vmax.f32 %v665, 0.0
      %v1116 = vmax.f32 %v670, 0.0
      %v1117 = vmax.f32 %v675, 0.0
      %v1118 = vmax.f32 %v680, 0.0
      %v1119 = vmax.f32 %v685, 0.0
      %v1120 = vmax.f32 %v690, 0.0
      %v1121 = vmax.f32 %v695, 0.0
      %v1122 = vmax.f32 %v700, 0.0
      %v1123 = vmax.f32 %v705, 0.0
      %v1124 = vmax.f32 %v710, 0.0
      %v1125 = vmax.f32 %v715, 0.0
      %v1126 = vmax.f32 %v720, 0.0
      %v1127 = vmax.f32 %v725, 0.0
      %v1128 = vmax.f32 %v730, 0.0
      %v1129 = vmax.f32 %v735, 0.0
      %v1130 = vmax.f32 %v740, 0.0
      %v1131 = vmax.f32 %v745, 0.0
      %v1132 = vmax.f32 %v750, 0.0
      %v1133 = vmax.f32 %v755, 0.0
      %v1134 = vmax.f32 %v760, 0.0
      %v1135 = vmax.f32 %v765, 0.0
      %v1136 = vmax.f32 %v770, 0.0
      %v1137 = vmax.f32 %v775, 0.0
      %v1138 = vmax.f32 %v780, 0.0
      %v1139 = vmax.f32 %v785, 0.0
      %v1140 = vmax.f32 %v790, 0.0
      %v1141 = vmax.f32 %v795, 0.0
      %v1142 = vmax.f32 %v800, 0.0
      %v1143 = vmax.f32 %v805, 0.0
      %v1144 = vmax.f32 %v810, 0.0
      %v1145 = vmax.f32 %v815, 0.0
      %v1146 = vmax.f32 %v820, 0.0
      %v1147 = vmax.f32 %v825, 0.0
      %v1148 = vmax.f32 %v830, 0.0
      %v1149 = vmax.f32 %v835, 0.0
      %v1150 = vmax.f32 %v840, 0.0
      %v1151 = vmax.f32 %v845, 0.0
      %v1152 = vmax.f32 %v850, 0.0
      %v1153 = vmax.f32 %v855, 0.0
      %v1154 = vmax.f32 %v860, 0.0
      %v1155 = vmax.f32 %v865, 0.0
      %v1156 = vmax.f32 %v870, 0.0
      %v1157 = vmax.f32 %v875, 0.0
      %v1158 = vmax.f32 %v880, 0.0
      %v1159 = vmax.f32 %v885, 0.0
      %v1160 = vmax.f32 %v890, 0.0
      %v1161 = vmax.f32 %v895, 0.0
      %v1162 = vmax.f32 %v900, 0.0
      %v1163 = vmax.f32 %v905, 0.0
      %v1164 = vmax.f32 %v910, 0.0
      %v1165 = vmax.f32 %v915, 0.0
      %v1166 = vmax.f32 %v920, 0.0
      %v1167 = vmax.f32 %v925, 0.0
      %v1168 = vmax.f32 %v930, 0.0
      %v1169 = vmax.f32 %v935, 0.0
      %v1170 = vmax.f32 %v940, 0.0
      %v1171 = vmax.f32 %v945, 0.0
      %v1172 = vmax.f32 %v950, 0.0
      %v1173 = vmax.f32 %v955, 0.0
      %v1174 = vmax.f32 %v960, 0.0
      %v1175 = vmax.f32 %v965, 0.0
      %v1176 = vmax.f32 %v970, 0.0
      %v1177 = vmax.f32 %v975, 0.0
      %v1178 = vmax.f32 %v980, 0.0
      %v1179 = vmax.f32 %v985, 0.0
      %v1180 = vmax.f32 %v990, 0.0
      %v1181 = vmax.f32 %v995, 0.0
      %v1182 = vmax.f32 %v1000, 0.0
      %v1183 = vmax.f32 %v1005, 0.0
      %v1184 = vmax.f32 %v1010, 0.0
      %v1185 = vmax.f32 %v1015, 0.0
      %v1186 = vmax.f32 %v1020, 0.0
      %v1187 = vmax.f32 %v1025, 0.0
      %v1188 = vmax.f32 %v1030, 0.0
      %v1189 = vmax.f32 %v1035, 0.0
      %v1190 = vmax.f32 %v1040, 0.0
      %v1191 = vmax.f32 %v1045, 0.0
      %v1192 = vmax.f32 %v1050, 0.0
      %v1193 = vmax.f32 %v1055, 0.0
      %v1194 = vmax.f32 %v1060, 0.0
      %v1195 = vmax.f32 %v1065, 0.0
      %v1196 = vlaneseq
      %v1197 = vshrl.u32 %v1196, 7
      %v1198 = vadd.s32 %v1197, 8
      %v1199 = vadd.s32 %v1197, 16
      %v1200 = vadd.s32 %v1197, 24
      %v1201 = vadd.s32 %v1197, 32
      %v1202 = vadd.s32 %v1197, 40
      %v1203 = vadd.s32 %v1197, 48
      %v1204 = vadd.s32 %v1197, 56
      %v1205 = vadd.s32 %v1197, 64
      %v1206 = vadd.s32 %v1197, 72
      %v1207 = vadd.s32 %v1197, 80
      %v1208 = vadd.s32 %v1197, 88
      %v1209 = vadd.s32 %v1197, 96
      %v1210 = vadd.s32 %v1197, 104
      %v1211 = vadd.s32 %v1197, 112
      %v1212 = vadd.s32 %v1197, 120
      %v1213 = vadd.s32 %v1197, 128
      %v1214 = vadd.s32 %v1197, 136
      %v1215 = vadd.s32 %v1197, 144
      %v1216 = vadd.s32 %v1197, 152
      %v1217 = vadd.s32 %v1197, 160
      %v1218 = vadd.s32 %v1197, 168
      %v1219 = vadd.s32 %v1197, 176
      %v1220 = vadd.s32 %v1197, 184
      %v1221 = vadd.s32 %v1197, 192
      %v1222 = vadd.s32 %v1197, 200
      %v1223 = vadd.s32 %v1197, 208
      %v1224 = vadd.s32 %v1197, 216
      %v1225 = vadd.s32 %v1197, 224
      %v1226 = vadd.s32 %v1197, 232
      %v1227 = vadd.s32 %v1197, 240
      %v1228 = vadd.s32 %v1197, 248
      %v1229 = vadd.s32 %v1197, 256
      %v1230 = vadd.s32 %v1197, 264
      %v1231 = vadd.s32 %v1197, 272
      %v1232 = vadd.s32 %v1197, 280
      %v1233 = vadd.s32 %v1197, 288
      %v1234 = vadd.s32 %v1197, 296
      %v1235 = vadd.s32 %v1197, 304
      %v1236 = vadd.s32 %v1197, 312
      %v1237 = vadd.s32 %v1197, 320
      %v1238 = vadd.s32 %v1197, 328
      %v1239 = vadd.s32 %v1197, 336
      %v1240 = vadd.s32 %v1197, 344
      %v1241 = vadd.s32 %v1197, 352
      %v1242 = vadd.s32 %v1197, 360
      %v1243 = vadd.s32 %v1197, 368
      %v1244 = vadd.s32 %v1197, 376
      %v1245 = vadd.s32 %v1197, 384
      %v1246 = vadd.s32 %v1197, 392
      %v1247 = vadd.s32 %v1197, 400
      %v1248 = vadd.s32 %v1197, 408
      %v1249 = vadd.s32 %v1197, 416
      %v1250 = vadd.s32 %v1197, 424
      %v1251 = vadd.s32 %v1197, 432
      %v1252 = vadd.s32 %v1197, 440
      %v1253 = vadd.s32 %v1197, 448
      %v1254 = vadd.s32 %v1197, 456
      %v1255 = vadd.s32 %v1197, 464
      %v1256 = vadd.s32 %v1197, 472
      %v1257 = vadd.s32 %v1197, 480
      %v1258 = vadd.s32 %v1197, 488
      %v1259 = vadd.s32 %v1197, 496
      %v1260 = vadd.s32 %v1197, 504
      %v1261 = vadd.s32 %v1197, 512
      %v1262 = vadd.s32 %v1197, 520
      %v1263 = vadd.s32 %v1197, 528
      %v1264 = vadd.s32 %v1197, 536
      %v1265 = vadd.s32 %v1197, 544
      %v1266 = vadd.s32 %v1197, 552
      %v1267 = vadd.s32 %v1197, 560
      %v1268 = vadd.s32 %v1197, 568
      %v1269 = vadd.s32 %v1197, 576
      %v1270 = vadd.s32 %v1197, 584
      %v1271 = vadd.s32 %v1197, 592
      %v1272 = vadd.s32 %v1197, 600
      %v1273 = vadd.s32 %v1197, 608
      %v1274 = vadd.s32 %v1197, 616
      %v1275 = vadd.s32 %v1197, 624
      %v1276 = vadd.s32 %v1197, 632
      %v1277 = vadd.s32 %v1197, 640
      %v1278 = vadd.s32 %v1197, 648
      %v1279 = vadd.s32 %v1197, 656
      %v1280 = vadd.s32 %v1197, 664
      %v1281 = vadd.s32 %v1197, 672
      %v1282 = vadd.s32 %v1197, 680
      %v1283 = vadd.s32 %v1197, 688
      %v1284 = vadd.s32 %v1197, 696
      %v1285 = vadd.s32 %v1197, 704
      %v1286 = vadd.s32 %v1197, 712
      %v1287 = vadd.s32 %v1197, 720
      %v1288 = vadd.s32 %v1197, 728
      %v1289 = vadd.s32 %v1197, 736
      %v1290 = vadd.s32 %v1197, 744
      %v1291 = vadd.s32 %v1197, 752
      %v1292 = vadd.s32 %v1197, 760
      %v1293 = vadd.s32 %v1197, 768
      %v1294 = vadd.s32 %v1197, 776
      %v1295 = vadd.s32 %v1197, 784
      %v1296 = vadd.s32 %v1197, 792
      %v1297 = vadd.s32 %v1197, 800
      %v1298 = vadd.s32 %v1197, 808
      %v1299 = vadd.s32 %v1197, 816
      %v1300 = vadd.s32 %v1197, 824
      %v1301 = vadd.s32 %v1197, 832
      %v1302 = vadd.s32 %v1197, 840
      %v1303 = vadd.s32 %v1197, 848
      %v1304 = vadd.s32 %v1197, 856
      %v1305 = vadd.s32 %v1197, 864
      %v1306 = vadd.s32 %v1197, 872
      %v1307 = vadd.s32 %v1197, 880
      %v1308 = vadd.s32 %v1197, 888
      %v1309 = vadd.s32 %v1197, 896
      %v1310 = vadd.s32 %v1197, 904
      %v1311 = vadd.s32 %v1197, 912
      %v1312 = vadd.s32 %v1197, 920
      %v1313 = vadd.s32 %v1197, 928
      %v1314 = vadd.s32 %v1197, 936
      %v1315 = vadd.s32 %v1197, 944
      %v1316 = vadd.s32 %v1197, 952
      %v1317 = vadd.s32 %v1197, 960
      %v1318 = vadd.s32 %v1197, 968
      %v1319 = vadd.s32 %v1197, 976
      %v1320 = vadd.s32 %v1197, 984
      %v1321 = vadd.s32 %v1197, 992
      %v1322 = vadd.s32 %v1197, 1000
      %v1323 = vadd.s32 %v1197, 1008
      %v1324 = vadd.s32 %v1197, 1016
      %s1325 = smul.u32 %s16, 1024
      %v1326 = vstv %s1325
      %v1327 = vadd.s32 %v1197, %v1326
      %v1328 = vadd.s32 %v1198, %v1326
      %v1329 = vadd.s32 %v1199, %v1326
      %v1330 = vadd.s32 %v1200, %v1326
      %v1331 = vadd.s32 %v1201, %v1326
      %v1332 = vadd.s32 %v1202, %v1326
      %v1333 = vadd.s32 %v1203, %v1326
      %v1334 = vadd.s32 %v1204, %v1326
      %v1335 = vadd.s32 %v1205, %v1326
      %v1336 = vadd.s32 %v1206, %v1326
      %v1337 = vadd.s32 %v1207, %v1326
      %v1338 = vadd.s32 %v1208, %v1326
      %v1339 = vadd.s32 %v1209, %v1326
      %v1340 = vadd.s32 %v1210, %v1326
      %v1341 = vadd.s32 %v1211, %v1326
      %v1342 = vadd.s32 %v1212, %v1326
      %v1343 = vadd.s32 %v1213, %v1326
      %v1344 = vadd.s32 %v1214, %v1326
      %v1345 = vadd.s32 %v1215, %v1326
      %v1346 = vadd.s32 %v1216, %v1326
      %v1347 = vadd.s32 %v1217, %v1326
      %v1348 = vadd.s32 %v1218, %v1326
      %v1349 = vadd.s32 %v1219, %v1326
      %v1350 = vadd.s32 %v1220, %v1326
      %v1351 = vadd.s32 %v1221, %v1326
      %v1352 = vadd.s32 %v1222, %v1326
      %v1353 = vadd.s32 %v1223, %v1326
      %v1354 = vadd.s32 %v1224, %v1326
      %v1355 = vadd.s32 %v1225, %v1326
      %v1356 = vadd.s32 %v1226, %v1326
      %v1357 = vadd.s32 %v1227, %v1326
      %v1358 = vadd.s32 %v1228, %v1326
      %v1359 = vadd.s32 %v1229, %v1326
      %v1360 = vadd.s32 %v1230, %v1326
      %v1361 = vadd.s32 %v1231, %v1326
      %v1362 = vadd.s32 %v1232, %v1326
      %v1363 = vadd.s32 %v1233, %v1326
      %v1364 = vadd.s32 %v1234, %v1326
      %v1365 = vadd.s32 %v1235, %v1326
      %v1366 = vadd.s32 %v1236, %v1326
      %v1367 = vadd.s32 %v1237, %v1326
      %v1368 = vadd.s32 %v1238, %v1326
      %v1369 = vadd.s32 %v1239, %v1326
      %v1370 = vadd.s32 %v1240, %v1326
      %v1371 = vadd.s32 %v1241, %v1326
      %v1372 = vadd.s32 %v1242, %v1326
      %v1373 = vadd.s32 %v1243, %v1326
      %v1374 = vadd.s32 %v1244, %v1326
      %v1375 = vadd.s32 %v1245, %v1326
      %v1376 = vadd.s32 %v1246, %v1326
      %v1377 = vadd.s32 %v1247, %v1326
      %v1378 = vadd.s32 %v1248, %v1326
      %v1379 = vadd.s32 %v1249, %v1326
      %v1380 = vadd.s32 %v1250, %v1326
      %v1381 = vadd.s32 %v1251, %v1326
      %v1382 = vadd.s32 %v1252, %v1326
      %v1383 = vadd.s32 %v1253, %v1326
      %v1384 = vadd.s32 %v1254, %v1326
      %v1385 = vadd.s32 %v1255, %v1326
      %v1386 = vadd.s32 %v1256, %v1326
      %v1387 = vadd.s32 %v1257, %v1326
      %v1388 = vadd.s32 %v1258, %v1326
      %v1389 = vadd.s32 %v1259, %v1326
      %v1390 = vadd.s32 %v1260, %v1326
      %v1391 = vadd.s32 %v1261, %v1326
      %v1392 = vadd.s32 %v1262, %v1326
      %v1393 = vadd.s32 %v1263, %v1326
      %v1394 = vadd.s32 %v1264, %v1326
      %v1395 = vadd.s32 %v1265, %v1326
      %v1396 = vadd.s32 %v1266, %v1326
      %v1397 = vadd.s32 %v1267, %v1326
      %v1398 = vadd.s32 %v1268, %v1326
      %v1399 = vadd.s32 %v1269, %v1326
      %v1400 = vadd.s32 %v1270, %v1326
      %v1401 = vadd.s32 %v1271, %v1326
      %v1402 = vadd.s32 %v1272, %v1326
      %v1403 = vadd.s32 %v1273, %v1326
      %v1404 = vadd.s32 %v1274, %v1326
      %v1405 = vadd.s32 %v1275, %v1326
      %v1406 = vadd.s32 %v1276, %v1326
      %v1407 = vadd.s32 %v1277, %v1326
      %v1408 = vadd.s32 %v1278, %v1326
      %v1409 = vadd.s32 %v1279, %v1326
      %v1410 = vadd.s32 %v1280, %v1326
      %v1411 = vadd.s32 %v1281, %v1326
      %v1412 = vadd.s32 %v1282, %v1326
      %v1413 = vadd.s32 %v1283, %v1326
      %v1414 = vadd.s32 %v1284, %v1326
      %v1415 = vadd.s32 %v1285, %v1326
      %v1416 = vadd.s32 %v1286, %v1326
      %v1417 = vadd.s32 %v1287, %v1326
      %v1418 = vadd.s32 %v1288, %v1326
      %v1419 = vadd.s32 %v1289, %v1326
      %v1420 = vadd.s32 %v1290, %v1326
      %v1421 = vadd.s32 %v1291, %v1326
      %v1422 = vadd.s32 %v1292, %v1326
      %v1423 = vadd.s32 %v1293, %v1326
      %v1424 = vadd.s32 %v1294, %v1326
      %v1425 = vadd.s32 %v1295, %v1326
      %v1426 = vadd.s32 %v1296, %v1326
      %v1427 = vadd.s32 %v1297, %v1326
      %v1428 = vadd.s32 %v1298, %v1326
      %v1429 = vadd.s32 %v1299, %v1326
      %v1430 = vadd.s32 %v1300, %v1326
      %v1431 = vadd.s32 %v1301, %v1326
      %v1432 = vadd.s32 %v1302, %v1326
      %v1433 = vadd.s32 %v1303, %v1326
      %v1434 = vadd.s32 %v1304, %v1326
      %v1435 = vadd.s32 %v1305, %v1326
      %v1436 = vadd.s32 %v1306, %v1326
      %v1437 = vadd.s32 %v1307, %v1326
      %v1438 = vadd.s32 %v1308, %v1326
      %v1439 = vadd.s32 %v1309, %v1326
      %v1440 = vadd.s32 %v1310, %v1326
      %v1441 = vadd.s32 %v1311, %v1326
      %v1442 = vadd.s32 %v1312, %v1326
      %v1443 = vadd.s32 %v1313, %v1326
      %v1444 = vadd.s32 %v1314, %v1326
      %v1445 = vadd.s32 %v1315, %v1326
      %v1446 = vadd.s32 %v1316, %v1326
      %v1447 = vadd.s32 %v1317, %v1326
      %v1448 = vadd.s32 %v1318, %v1326
      %v1449 = vadd.s32 %v1319, %v1326
      %v1450 = vadd.s32 %v1320, %v1326
      %v1451 = vadd.s32 %v1321, %v1326
      %v1452 = vadd.s32 %v1322, %v1326
      %v1453 = vadd.s32 %v1323, %v1326
      %v1454 = vadd.s32 %v1324, %v1326
      %vm1455 = vcmp.lt.s32.totalorder %v1327, 8192
      %vm1456 = vcmp.lt.s32.totalorder %v1328, 8192
      %vm1457 = vcmp.lt.s32.totalorder %v1329, 8192
      %vm1458 = vcmp.lt.s32.totalorder %v1330, 8192
      %vm1459 = vcmp.lt.s32.totalorder %v1331, 8192
      %vm1460 = vcmp.lt.s32.totalorder %v1332, 8192
      %vm1461 = vcmp.lt.s32.totalorder %v1333, 8192
      %vm1462 = vcmp.lt.s32.totalorder %v1334, 8192
      %vm1463 = vcmp.lt.s32.totalorder %v1335, 8192
      %vm1464 = vcmp.lt.s32.totalorder %v1336, 8192
      %vm1465 = vcmp.lt.s32.totalorder %v1337, 8192
      %vm1466 = vcmp.lt.s32.totalorder %v1338, 8192
      %vm1467 = vcmp.lt.s32.totalorder %v1339, 8192
      %vm1468 = vcmp.lt.s32.totalorder %v1340, 8192
      %vm1469 = vcmp.lt.s32.totalorder %v1341, 8192
      %vm1470 = vcmp.lt.s32.totalorder %v1342, 8192
      %vm1471 = vcmp.lt.s32.totalorder %v1343, 8192
      %vm1472 = vcmp.lt.s32.totalorder %v1344, 8192
      %vm1473 = vcmp.lt.s32.totalorder %v1345, 8192
      %vm1474 = vcmp.lt.s32.totalorder %v1346, 8192
      %vm1475 = vcmp.lt.s32.totalorder %v1347, 8192
      %vm1476 = vcmp.lt.s32.totalorder %v1348, 8192
      %vm1477 = vcmp.lt.s32.totalorder %v1349, 8192
      %vm1478 = vcmp.lt.s32.totalorder %v1350, 8192
      %vm1479 = vcmp.lt.s32.totalorder %v1351, 8192
      %vm1480 = vcmp.lt.s32.totalorder %v1352, 8192
      %vm1481 = vcmp.lt.s32.totalorder %v1353, 8192
      %vm1482 = vcmp.lt.s32.totalorder %v1354, 8192
      %vm1483 = vcmp.lt.s32.totalorder %v1355, 8192
      %vm1484 = vcmp.lt.s32.totalorder %v1356, 8192
      %vm1485 = vcmp.lt.s32.totalorder %v1357, 8192
      %vm1486 = vcmp.lt.s32.totalorder %v1358, 8192
      %vm1487 = vcmp.lt.s32.totalorder %v1359, 8192
      %vm1488 = vcmp.lt.s32.totalorder %v1360, 8192
      %vm1489 = vcmp.lt.s32.totalorder %v1361, 8192
      %vm1490 = vcmp.lt.s32.totalorder %v1362, 8192
      %vm1491 = vcmp.lt.s32.totalorder %v1363, 8192
      %vm1492 = vcmp.lt.s32.totalorder %v1364, 8192
      %vm1493 = vcmp.lt.s32.totalorder %v1365, 8192
      %vm1494 = vcmp.lt.s32.totalorder %v1366, 8192
      %vm1495 = vcmp.lt.s32.totalorder %v1367, 8192
      %vm1496 = vcmp.lt.s32.totalorder %v1368, 8192
      %vm1497 = vcmp.lt.s32.totalorder %v1369, 8192
      %vm1498 = vcmp.lt.s32.totalorder %v1370, 8192
      %vm1499 = vcmp.lt.s32.totalorder %v1371, 8192
      %vm1500 = vcmp.lt.s32.totalorder %v1372, 8192
      %vm1501 = vcmp.lt.s32.totalorder %v1373, 8192
      %vm1502 = vcmp.lt.s32.totalorder %v1374, 8192
      %vm1503 = vcmp.lt.s32.totalorder %v1375, 8192
      %vm1504 = vcmp.lt.s32.totalorder %v1376, 8192
      %vm1505 = vcmp.lt.s32.totalorder %v1377, 8192
      %vm1506 = vcmp.lt.s32.totalorder %v1378, 8192
      %vm1507 = vcmp.lt.s32.totalorder %v1379, 8192
      %vm1508 = vcmp.lt.s32.totalorder %v1380, 8192
      %vm1509 = vcmp.lt.s32.totalorder %v1381, 8192
      %vm1510 = vcmp.lt.s32.totalorder %v1382, 8192
      %vm1511 = vcmp.lt.s32.totalorder %v1383, 8192
      %vm1512 = vcmp.lt.s32.totalorder %v1384, 8192
      %vm1513 = vcmp.lt.s32.totalorder %v1385, 8192
      %vm1514 = vcmp.lt.s32.totalorder %v1386, 8192
      %vm1515 = vcmp.lt.s32.totalorder %v1387, 8192
      %vm1516 = vcmp.lt.s32.totalorder %v1388, 8192
      %vm1517 = vcmp.lt.s32.totalorder %v1389, 8192
      %vm1518 = vcmp.lt.s32.totalorder %v1390, 8192
      %vm1519 = vcmp.lt.s32.totalorder %v1391, 8192
      %vm1520 = vcmp.lt.s32.totalorder %v1392, 8192
      %vm1521 = vcmp.lt.s32.totalorder %v1393, 8192
      %vm1522 = vcmp.lt.s32.totalorder %v1394, 8192
      %vm1523 = vcmp.lt.s32.totalorder %v1395, 8192
      %vm1524 = vcmp.lt.s32.totalorder %v1396, 8192
      %vm1525 = vcmp.lt.s32.totalorder %v1397, 8192
      %vm1526 = vcmp.lt.s32.totalorder %v1398, 8192
      %vm1527 = vcmp.lt.s32.totalorder %v1399, 8192
      %vm1528 = vcmp.lt.s32.totalorder %v1400, 8192
      %vm1529 = vcmp.lt.s32.totalorder %v1401, 8192
      %vm1530 = vcmp.lt.s32.totalorder %v1402, 8192
      %vm1531 = vcmp.lt.s32.totalorder %v1403, 8192
      %vm1532 = vcmp.lt.s32.totalorder %v1404, 8192
      %vm1533 = vcmp.lt.s32.totalorder %v1405, 8192
      %vm1534 = vcmp.lt.s32.totalorder %v1406, 8192
      %vm1535 = vcmp.lt.s32.totalorder %v1407, 8192
      %vm1536 = vcmp.lt.s32.totalorder %v1408, 8192
      %vm1537 = vcmp.lt.s32.totalorder %v1409, 8192
      %vm1538 = vcmp.lt.s32.totalorder %v1410, 8192
      %vm1539 = vcmp.lt.s32.totalorder %v1411, 8192
      %vm1540 = vcmp.lt.s32.totalorder %v1412, 8192
      %vm1541 = vcmp.lt.s32.totalorder %v1413, 8192
      %vm1542 = vcmp.lt.s32.totalorder %v1414, 8192
      %vm1543 = vcmp.lt.s32.totalorder %v1415, 8192
      %vm1544 = vcmp.lt.s32.totalorder %v1416, 8192
      %vm1545 = vcmp.lt.s32.totalorder %v1417, 8192
      %vm1546 = vcmp.lt.s32.totalorder %v1418, 8192
      %vm1547 = vcmp.lt.s32.totalorder %v1419, 8192
      %vm1548 = vcmp.lt.s32.totalorder %v1420, 8192
      %vm1549 = vcmp.lt.s32.totalorder %v1421, 8192
      %vm1550 = vcmp.lt.s32.totalorder %v1422, 8192
      %vm1551 = vcmp.lt.s32.totalorder %v1423, 8192
      %vm1552 = vcmp.lt.s32.totalorder %v1424, 8192
      %vm1553 = vcmp.lt.s32.totalorder %v1425, 8192
      %vm1554 = vcmp.lt.s32.totalorder %v1426, 8192
      %vm1555 = vcmp.lt.s32.totalorder %v1427, 8192
      %vm1556 = vcmp.lt.s32.totalorder %v1428, 8192
      %vm1557 = vcmp.lt.s32.totalorder %v1429, 8192
      %vm1558 = vcmp.lt.s32.totalorder %v1430, 8192
      %vm1559 = vcmp.lt.s32.totalorder %v1431, 8192
      %vm1560 = vcmp.lt.s32.totalorder %v1432, 8192
      %vm1561 = vcmp.lt.s32.totalorder %v1433, 8192
      %vm1562 = vcmp.lt.s32.totalorder %v1434, 8192
      %vm1563 = vcmp.lt.s32.totalorder %v1435, 8192
      %vm1564 = vcmp.lt.s32.totalorder %v1436, 8192
      %vm1565 = vcmp.lt.s32.totalorder %v1437, 8192
      %vm1566 = vcmp.lt.s32.totalorder %v1438, 8192
      %vm1567 = vcmp.lt.s32.totalorder %v1439, 8192
      %vm1568 = vcmp.lt.s32.totalorder %v1440, 8192
      %vm1569 = vcmp.lt.s32.totalorder %v1441, 8192
      %vm1570 = vcmp.lt.s32.totalorder %v1442, 8192
      %vm1571 = vcmp.lt.s32.totalorder %v1443, 8192
      %vm1572 = vcmp.lt.s32.totalorder %v1444, 8192
      %vm1573 = vcmp.lt.s32.totalorder %v1445, 8192
      %vm1574 = vcmp.lt.s32.totalorder %v1446, 8192
      %vm1575 = vcmp.lt.s32.totalorder %v1447, 8192
      %vm1576 = vcmp.lt.s32.totalorder %v1448, 8192
      %vm1577 = vcmp.lt.s32.totalorder %v1449, 8192
      %vm1578 = vcmp.lt.s32.totalorder %v1450, 8192
      %vm1579 = vcmp.lt.s32.totalorder %v1451, 8192
      %vm1580 = vcmp.lt.s32.totalorder %v1452, 8192
      %vm1581 = vcmp.lt.s32.totalorder %v1453, 8192
      %vm1582 = vcmp.lt.s32.totalorder %v1454, 8192
      %v1583 = vsel %vm1455, %v1068, 0.0
      %v1584 = vsel %vm1456, %v1069, 0.0
      %v1585 = vsel %vm1457, %v1070, 0.0
      %v1586 = vsel %vm1458, %v1071, 0.0
      %v1587 = vsel %vm1459, %v1072, 0.0
      %v1588 = vsel %vm1460, %v1073, 0.0
      %v1589 = vsel %vm1461, %v1074, 0.0
      %v1590 = vsel %vm1462, %v1075, 0.0
      %v1591 = vsel %vm1463, %v1076, 0.0
      %v1592 = vsel %vm1464, %v1077, 0.0
      %v1593 = vsel %vm1465, %v1078, 0.0
      %v1594 = vsel %vm1466, %v1079, 0.0
      %v1595 = vsel %vm1467, %v1080, 0.0
      %v1596 = vsel %vm1468, %v1081, 0.0
      %v1597 = vsel %vm1469, %v1082, 0.0
      %v1598 = vsel %vm1470, %v1083, 0.0
      %v1599 = vsel %vm1471, %v1084, 0.0
      %v1600 = vsel %vm1472, %v1085, 0.0
      %v1601 = vsel %vm1473, %v1086, 0.0
      %v1602 = vsel %vm1474, %v1087, 0.0
      %v1603 = vsel %vm1475, %v1088, 0.0
      %v1604 = vsel %vm1476, %v1089, 0.0
      %v1605 = vsel %vm1477, %v1090, 0.0
      %v1606 = vsel %vm1478, %v1091, 0.0
      %v1607 = vsel %vm1479, %v1092, 0.0
      %v1608 = vsel %vm1480, %v1093, 0.0
      %v1609 = vsel %vm1481, %v1094, 0.0
      %v1610 = vsel %vm1482, %v1095, 0.0
      %v1611 = vsel %vm1483, %v1096, 0.0
      %v1612 = vsel %vm1484, %v1097, 0.0
      %v1613 = vsel %vm1485, %v1098, 0.0
      %v1614 = vsel %vm1486, %v1099, 0.0
      %v1615 = vsel %vm1487, %v1100, 0.0
      %v1616 = vsel %vm1488, %v1101, 0.0
      %v1617 = vsel %vm1489, %v1102, 0.0
      %v1618 = vsel %vm1490, %v1103, 0.0
      %v1619 = vsel %vm1491, %v1104, 0.0
      %v1620 = vsel %vm1492, %v1105, 0.0
      %v1621 = vsel %vm1493, %v1106, 0.0
      %v1622 = vsel %vm1494, %v1107, 0.0
      %v1623 = vsel %vm1495, %v1108, 0.0
      %v1624 = vsel %vm1496, %v1109, 0.0
      %v1625 = vsel %vm1497, %v1110, 0.0
      %v1626 = vsel %vm1498, %v1111, 0.0
      %v1627 = vsel %vm1499, %v1112, 0.0
      %v1628 = vsel %vm1500, %v1113, 0.0
      %v1629 = vsel %vm1501, %v1114, 0.0
      %v1630 = vsel %vm1502, %v1115, 0.0
      %v1631 = vsel %vm1503, %v1116, 0.0
      %v1632 = vsel %vm1504, %v1117, 0.0
      %v1633 = vsel %vm1505, %v1118, 0.0
      %v1634 = vsel %vm1506, %v1119, 0.0
      %v1635 = vsel %vm1507, %v1120, 0.0
      %v1636 = vsel %vm1508, %v1121, 0.0
      %v1637 = vsel %vm1509, %v1122, 0.0
      %v1638 = vsel %vm1510, %v1123, 0.0
      %v1639 = vsel %vm1511, %v1124, 0.0
      %v1640 = vsel %vm1512, %v1125, 0.0
      %v1641 = vsel %vm1513, %v1126, 0.0
      %v1642 = vsel %vm1514, %v1127, 0.0
      %v1643 = vsel %vm1515, %v1128, 0.0
      %v1644 = vsel %vm1516, %v1129, 0.0
      %v1645 = vsel %vm1517, %v1130, 0.0
      %v1646 = vsel %vm1518, %v1131, 0.0
      %v1647 = vsel %vm1519, %v1132, 0.0
      %v1648 = vsel %vm1520, %v1133, 0.0
      %v1649 = vsel %vm1521, %v1134, 0.0
      %v1650 = vsel %vm1522, %v1135, 0.0
      %v1651 = vsel %vm1523, %v1136, 0.0
      %v1652 = vsel %vm1524, %v1137, 0.0
      %v1653 = vsel %vm1525, %v1138, 0.0
      %v1654 = vsel %vm1526, %v1139, 0.0
      %v1655 = vsel %vm1527, %v1140, 0.0
      %v1656 = vsel %vm1528, %v1141, 0.0
      %v1657 = vsel %vm1529, %v1142, 0.0
      %v1658 = vsel %vm1530, %v1143, 0.0
      %v1659 = vsel %vm1531, %v1144, 0.0
      %v1660 = vsel %vm1532, %v1145, 0.0
      %v1661 = vsel %vm1533, %v1146, 0.0
      %v1662 = vsel %vm1534, %v1147, 0.0
      %v1663 = vsel %vm1535, %v1148, 0.0
      %v1664 = vsel %vm1536, %v1149, 0.0
      %v1665 = vsel %vm1537, %v1150, 0.0
      %v1666 = vsel %vm1538, %v1151, 0.0
      %v1667 = vsel %vm1539, %v1152, 0.0
      %v1668 = vsel %vm1540, %v1153, 0.0
      %v1669 = vsel %vm1541, %v1154, 0.0
      %v1670 = vsel %vm1542, %v1155, 0.0
      %v1671 = vsel %vm1543, %v1156, 0.0
      %v1672 = vsel %vm1544, %v1157, 0.0
      %v1673 = vsel %vm1545, %v1158, 0.0
      %v1674 = vsel %vm1546, %v1159, 0.0
      %v1675 = vsel %vm1547, %v1160, 0.0
      %v1676 = vsel %vm1548, %v1161, 0.0
      %v1677 = vsel %vm1549, %v1162, 0.0
      %v1678 = vsel %vm1550, %v1163, 0.0
      %v1679 = vsel %vm1551, %v1164, 0.0
      %v1680 = vsel %vm1552, %v1165, 0.0
      %v1681 = vsel %vm1553, %v1166, 0.0
      %v1682 = vsel %vm1554, %v1167, 0.0
      %v1683 = vsel %vm1555, %v1168, 0.0
      %v1684 = vsel %vm1556, %v1169, 0.0
      %v1685 = vsel %vm1557, %v1170, 0.0
      %v1686 = vsel %vm1558, %v1171, 0.0
      %v1687 = vsel %vm1559, %v1172, 0.0
      %v1688 = vsel %vm1560, %v1173, 0.0
      %v1689 = vsel %vm1561, %v1174, 0.0
      %v1690 = vsel %vm1562, %v1175, 0.0
      %v1691 = vsel %vm1563, %v1176, 0.0
      %v1692 = vsel %vm1564, %v1177, 0.0
      %v1693 = vsel %vm1565, %v1178, 0.0
      %v1694 = vsel %vm1566, %v1179, 0.0
      %v1695 = vsel %vm1567, %v1180, 0.0
      %v1696 = vsel %vm1568, %v1181, 0.0
      %v1697 = vsel %vm1569, %v1182, 0.0
      %v1698 = vsel %vm1570, %v1183, 0.0
      %v1699 = vsel %vm1571, %v1184, 0.0
      %v1700 = vsel %vm1572, %v1185, 0.0
      %v1701 = vsel %vm1573, %v1186, 0.0
      %v1702 = vsel %vm1574, %v1187, 0.0
      %v1703 = vsel %vm1575, %v1188, 0.0
      %v1704 = vsel %vm1576, %v1189, 0.0
      %v1705 = vsel %vm1577, %v1190, 0.0
      %v1706 = vsel %vm1578, %v1191, 0.0
      %v1707 = vsel %vm1579, %v1192, 0.0
      %v1708 = vsel %vm1580, %v1193, 0.0
      %v1709 = vsel %vm1581, %v1194, 0.0
      %v1710 = vsel %vm1582, %v1195, 0.0
      %1711 = vst [vmem:[%s206] sm:$0xff] %v1583
      %1712 = vst [vmem:[%s206 + $0x8] sm:$0xff] %v1584
      %1713 = vst [vmem:[%s206 + $0x10] sm:$0xff] %v1585
      %1714 = vst [vmem:[%s206 + $0x18] sm:$0xff] %v1586
      %1715 = vst [vmem:[%s206 + $0x20] sm:$0xff] %v1587
      %1716 = vst [vmem:[%s206 + $0x28] sm:$0xff] %v1588
      %1717 = vst [vmem:[%s206 + $0x30] sm:$0xff] %v1589
      %1718 = vst [vmem:[%s206 + $0x38] sm:$0xff] %v1590
      %1719 = vst [vmem:[%s206 + $0x40] sm:$0xff] %v1591
      %1720 = vst [vmem:[%s206 + $0x48] sm:$0xff] %v1592
      %1721 = vst [vmem:[%s206 + $0x50] sm:$0xff] %v1593
      %1722 = vst [vmem:[%s206 + $0x58] sm:$0xff] %v1594
      %1723 = vst [vmem:[%s206 + $0x60] sm:$0xff] %v1595
      %1724 = vst [vmem:[%s206 + $0x68] sm:$0xff] %v1596
      %1725 = vst [vmem:[%s206 + $0x70] sm:$0xff] %v1597
      %1726 = vst [vmem:[%s206 + $0x78] sm:$0xff] %v1598
      %1727 = vst [vmem:[%s206 + $0x80] sm:$0xff] %v1599
      %1728 = vst [vmem:[%s206 + $0x88] sm:$0xff] %v1600
      %1729 = vst [vmem:[%s206 + $0x90] sm:$0xff] %v1601
      %1730 = vst [vmem:[%s206 + $0x98] sm:$0xff] %v1602
      %1731 = vst [vmem:[%s206 + $0xa0] sm:$0xff] %v1603
      %1732 = vst [vmem:[%s206 + $0xa8] sm:$0xff] %v1604
      %1733 = vst [vmem:[%s206 + $0xb0] sm:$0xff] %v1605
      %1734 = vst [vmem:[%s206 + $0xb8] sm:$0xff] %v1606
      %1735 = vst [vmem:[%s206 + $0xc0] sm:$0xff] %v1607
      %1736 = vst [vmem:[%s206 + $0xc8] sm:$0xff] %v1608
      %1737 = vst [vmem:[%s206 + $0xd0] sm:$0xff] %v1609
      %1738 = vst [vmem:[%s206 + $0xd8] sm:$0xff] %v1610
      %1739 = vst [vmem:[%s206 + $0xe0] sm:$0xff] %v1611
      %1740 = vst [vmem:[%s206 + $0xe8] sm:$0xff] %v1612
      %1741 = vst [vmem:[%s206 + $0xf0] sm:$0xff] %v1613
      %1742 = vst [vmem:[%s206 + $0xf8] sm:$0xff] %v1614
      %1743 = vst [vmem:[%s206 + $0x100] sm:$0xff] %v1615
      %1744 = vst [vmem:[%s206 + $0x108] sm:$0xff] %v1616
      %1745 = vst [vmem:[%s206 + $0x110] sm:$0xff] %v1617
      %1746 = vst [vmem:[%s206 + $0x118] sm:$0xff] %v1618
      %1747 = vst [vmem:[%s206 + $0x120] sm:$0xff] %v1619
      %1748 = vst [vmem:[%s206 + $0x128] sm:$0xff] %v1620
      %1749 = vst [vmem:[%s206 + $0x130] sm:$0xff] %v1621
      %1750 = vst [vmem:[%s206 + $0x138] sm:$0xff] %v1622
      %1751 = vst [vmem:[%s206 + $0x140] sm:$0xff] %v1623
      %1752 = vst [vmem:[%s206 + $0x148] sm:$0xff] %v1624
      %1753 = vst [vmem:[%s206 + $0x150] sm:$0xff] %v1625
      %1754 = vst [vmem:[%s206 + $0x158] sm:$0xff] %v1626
      %1755 = vst [vmem:[%s206 + $0x160] sm:$0xff] %v1627
      %1756 = vst [vmem:[%s206 + $0x168] sm:$0xff] %v1628
      %1757 = vst [vmem:[%s206 + $0x170] sm:$0xff] %v1629
      %1758 = vst [vmem:[%s206 + $0x178] sm:$0xff] %v1630
      %1759 = vst [vmem:[%s206 + $0x180] sm:$0xff] %v1631
      %1760 = vst [vmem:[%s206 + $0x188] sm:$0xff] %v1632
      %1761 = vst [vmem:[%s206 + $0x190] sm:$0xff] %v1633
      %1762 = vst [vmem:[%s206 + $0x198] sm:$0xff] %v1634
      %1763 = vst [vmem:[%s206 + $0x1a0] sm:$0xff] %v1635
      %1764 = vst [vmem:[%s206 + $0x1a8] sm:$0xff] %v1636
      %1765 = vst [vmem:[%s206 + $0x1b0] sm:$0xff] %v1637
      %1766 = vst [vmem:[%s206 + $0x1b8] sm:$0xff] %v1638
      %1767 = vst [vmem:[%s206 + $0x1c0] sm:$0xff] %v1639
      %1768 = vst [vmem:[%s206 + $0x1c8] sm:$0xff] %v1640
      %1769 = vst [vmem:[%s206 + $0x1d0] sm:$0xff] %v1641
      %1770 = vst [vmem:[%s206 + $0x1d8] sm:$0xff] %v1642
      %1771 = vst [vmem:[%s206 + $0x1e0] sm:$0xff] %v1643
      %1772 = vst [vmem:[%s206 + $0x1e8] sm:$0xff] %v1644
      %1773 = vst [vmem:[%s206 + $0x1f0] sm:$0xff] %v1645
      %1774 = vst [vmem:[%s206 + $0x1f8] sm:$0xff] %v1646
      %1775 = vst [vmem:[%s206 + $0x200] sm:$0xff] %v1647
      %1776 = vst [vmem:[%s206 + $0x208] sm:$0xff] %v1648
      %1777 = vst [vmem:[%s206 + $0x210] sm:$0xff] %v1649
      %1778 = vst [vmem:[%s206 + $0x218] sm:$0xff] %v1650
      %1779 = vst [vmem:[%s206 + $0x220] sm:$0xff] %v1651
      %1780 = vst [vmem:[%s206 + $0x228] sm:$0xff] %v1652
      %1781 = vst [vmem:[%s206 + $0x230] sm:$0xff] %v1653
      %1782 = vst [vmem:[%s206 + $0x238] sm:$0xff] %v1654
      %1783 = vst [vmem:[%s206 + $0x240] sm:$0xff] %v1655
      %1784 = vst [vmem:[%s206 + $0x248] sm:$0xff] %v1656
      %1785 = vst [vmem:[%s206 + $0x250] sm:$0xff] %v1657
      %1786 = vst [vmem:[%s206 + $0x258] sm:$0xff] %v1658
      %1787 = vst [vmem:[%s206 + $0x260] sm:$0xff] %v1659
      %1788 = vst [vmem:[%s206 + $0x268] sm:$0xff] %v1660
      %1789 = vst [vmem:[%s206 + $0x270] sm:$0xff] %v1661
      %1790 = vst [vmem:[%s206 + $0x278] sm:$0xff] %v1662
      %1791 = vst [vmem:[%s206 + $0x280] sm:$0xff] %v1663
      %1792 = vst [vmem:[%s206 + $0x288] sm:$0xff] %v1664
      %1793 = vst [vmem:[%s206 + $0x290] sm:$0xff] %v1665
      %1794 = vst [vmem:[%s206 + $0x298] sm:$0xff] %v1666
      %1795 = vst [vmem:[%s206 + $0x2a0] sm:$0xff] %v1667
      %1796 = vst [vmem:[%s206 + $0x2a8] sm:$0xff] %v1668
      %1797 = vst [vmem:[%s206 + $0x2b0] sm:$0xff] %v1669
      %1798 = vst [vmem:[%s206 + $0x2b8] sm:$0xff] %v1670
      %1799 = vst [vmem:[%s206 + $0x2c0] sm:$0xff] %v1671
      %1800 = vst [vmem:[%s206 + $0x2c8] sm:$0xff] %v1672
      %1801 = vst [vmem:[%s206 + $0x2d0] sm:$0xff] %v1673
      %1802 = vst [vmem:[%s206 + $0x2d8] sm:$0xff] %v1674
      %1803 = vst [vmem:[%s206 + $0x2e0] sm:$0xff] %v1675
      %1804 = vst [vmem:[%s206 + $0x2e8] sm:$0xff] %v1676
      %1805 = vst [vmem:[%s206 + $0x2f0] sm:$0xff] %v1677
      %1806 = vst [vmem:[%s206 + $0x2f8] sm:$0xff] %v1678
      %1807 = vst [vmem:[%s206 + $0x300] sm:$0xff] %v1679
      %1808 = vst [vmem:[%s206 + $0x308] sm:$0xff] %v1680
      %1809 = vst [vmem:[%s206 + $0x310] sm:$0xff] %v1681
      %1810 = vst [vmem:[%s206 + $0x318] sm:$0xff] %v1682
      %1811 = vst [vmem:[%s206 + $0x320] sm:$0xff] %v1683
      %1812 = vst [vmem:[%s206 + $0x328] sm:$0xff] %v1684
      %1813 = vst [vmem:[%s206 + $0x330] sm:$0xff] %v1685
      %1814 = vst [vmem:[%s206 + $0x338] sm:$0xff] %v1686
      %1815 = vst [vmem:[%s206 + $0x340] sm:$0xff] %v1687
      %1816 = vst [vmem:[%s206 + $0x348] sm:$0xff] %v1688
      %1817 = vst [vmem:[%s206 + $0x350] sm:$0xff] %v1689
      %1818 = vst [vmem:[%s206 + $0x358] sm:$0xff] %v1690
      %1819 = vst [vmem:[%s206 + $0x360] sm:$0xff] %v1691
      %1820 = vst [vmem:[%s206 + $0x368] sm:$0xff] %v1692
      %1821 = vst [vmem:[%s206 + $0x370] sm:$0xff] %v1693
      %1822 = vst [vmem:[%s206 + $0x378] sm:$0xff] %v1694
      %1823 = vst [vmem:[%s206 + $0x380] sm:$0xff] %v1695
      %1824 = vst [vmem:[%s206 + $0x388] sm:$0xff] %v1696
      %1825 = vst [vmem:[%s206 + $0x390] sm:$0xff] %v1697
      %1826 = vst [vmem:[%s206 + $0x398] sm:$0xff] %v1698
      %1827 = vst [vmem:[%s206 + $0x3a0] sm:$0xff] %v1699
      %1828 = vst [vmem:[%s206 + $0x3a8] sm:$0xff] %v1700
      %1829 = vst [vmem:[%s206 + $0x3b0] sm:$0xff] %v1701
      %1830 = vst [vmem:[%s206 + $0x3b8] sm:$0xff] %v1702
      %1831 = vst [vmem:[%s206 + $0x3c0] sm:$0xff] %v1703
      %1832 = vst [vmem:[%s206 + $0x3c8] sm:$0xff] %v1704
      %1833 = vst [vmem:[%s206 + $0x3d0] sm:$0xff] %v1705
      %1834 = vst [vmem:[%s206 + $0x3d8] sm:$0xff] %v1706
      %1835 = vst [vmem:[%s206 + $0x3e0] sm:$0xff] %v1707
      %1836 = vst [vmem:[%s206 + $0x3e8] sm:$0xff] %v1708
      %1837 = vst [vmem:[%s206 + $0x3f0] sm:$0xff] %v1709
      %1838 = vst [vmem:[%s206 + $0x3f8] sm:$0xff] %v1710
      %v1839 = vadd.f32 %v1583, %v1584
      %v1840 = vadd.f32 %v1839, %v1585
      %v1841 = vadd.f32 %v1840, %v1586
      %v1842 = vadd.f32 %v1841, %v1587
      %v1843 = vadd.f32 %v1842, %v1588
      %v1844 = vadd.f32 %v1843, %v1589
      %v1845 = vadd.f32 %v1844, %v1590
      %v1846 = vadd.f32 %v1845, %v1591
      %v1847 = vadd.f32 %v1846, %v1592
      %v1848 = vadd.f32 %v1847, %v1593
      %v1849 = vadd.f32 %v1848, %v1594
      %v1850 = vadd.f32 %v1849, %v1595
      %v1851 = vadd.f32 %v1850, %v1596
      %v1852 = vadd.f32 %v1851, %v1597
      %v1853 = vadd.f32 %v1852, %v1598
      %v1854 = vadd.f32 %v1853, %v1599
      %v1855 = vadd.f32 %v1854, %v1600
      %v1856 = vadd.f32 %v1855, %v1601
      %v1857 = vadd.f32 %v1856, %v1602
      %v1858 = vadd.f32 %v1857, %v1603
      %v1859 = vadd.f32 %v1858, %v1604
      %v1860 = vadd.f32 %v1859, %v1605
      %v1861 = vadd.f32 %v1860, %v1606
      %v1862 = vadd.f32 %v1861, %v1607
      %v1863 = vadd.f32 %v1862, %v1608
      %v1864 = vadd.f32 %v1863, %v1609
      %v1865 = vadd.f32 %v1864, %v1610
      %v1866 = vadd.f32 %v1865, %v1611
      %v1867 = vadd.f32 %v1866, %v1612
      %v1868 = vadd.f32 %v1867, %v1613
      %v1869 = vadd.f32 %v1868, %v1614
      %v1870 = vadd.f32 %v1869, %v1615
      %v1871 = vadd.f32 %v1870, %v1616
      %v1872 = vadd.f32 %v1871, %v1617
      %v1873 = vadd.f32 %v1872, %v1618
      %v1874 = vadd.f32 %v1873, %v1619
      %v1875 = vadd.f32 %v1874, %v1620
      %v1876 = vadd.f32 %v1875, %v1621
      %v1877 = vadd.f32 %v1876, %v1622
      %v1878 = vadd.f32 %v1877, %v1623
      %v1879 = vadd.f32 %v1878, %v1624
      %v1880 = vadd.f32 %v1879, %v1625
      %v1881 = vadd.f32 %v1880, %v1626
      %v1882 = vadd.f32 %v1881, %v1627
      %v1883 = vadd.f32 %v1882, %v1628
      %v1884 = vadd.f32 %v1883, %v1629
      %v1885 = vadd.f32 %v1884, %v1630
      %v1886 = vadd.f32 %v1885, %v1631
      %v1887 = vadd.f32 %v1886, %v1632
      %v1888 = vadd.f32 %v1887, %v1633
      %v1889 = vadd.f32 %v1888, %v1634
      %v1890 = vadd.f32 %v1889, %v1635
      %v1891 = vadd.f32 %v1890, %v1636
      %v1892 = vadd.f32 %v1891, %v1637
      %v1893 = vadd.f32 %v1892, %v1638
      %v1894 = vadd.f32 %v1893, %v1639
      %v1895 = vadd.f32 %v1894, %v1640
      %v1896 = vadd.f32 %v1895, %v1641
      %v1897 = vadd.f32 %v1896, %v1642
      %v1898 = vadd.f32 %v1897, %v1643
      %v1899 = vadd.f32 %v1898, %v1644
      %v1900 = vadd.f32 %v1899, %v1645
      %v1901 = vadd.f32 %v1900, %v1646
      %v1902 = vadd.f32 %v1901, %v1647
      %v1903 = vadd.f32 %v1902, %v1648
      %v1904 = vadd.f32 %v1903, %v1649
      %v1905 = vadd.f32 %v1904, %v1650
      %v1906 = vadd.f32 %v1905, %v1651
      %v1907 = vadd.f32 %v1906, %v1652
      %v1908 = vadd.f32 %v1907, %v1653
      %v1909 = vadd.f32 %v1908, %v1654
      %v1910 = vadd.f32 %v1909, %v1655
      %v1911 = vadd.f32 %v1910, %v1656
      %v1912 = vadd.f32 %v1911, %v1657
      %v1913 = vadd.f32 %v1912, %v1658
      %v1914 = vadd.f32 %v1913, %v1659
      %v1915 = vadd.f32 %v1914, %v1660
      %v1916 = vadd.f32 %v1915, %v1661
      %v1917 = vadd.f32 %v1916, %v1662
      %v1918 = vadd.f32 %v1917, %v1663
      %v1919 = vadd.f32 %v1918, %v1664
      %v1920 = vadd.f32 %v1919, %v1665
      %v1921 = vadd.f32 %v1920, %v1666
      %v1922 = vadd.f32 %v1921, %v1667
      %v1923 = vadd.f32 %v1922, %v1668
      %v1924 = vadd.f32 %v1923, %v1669
      %v1925 = vadd.f32 %v1924, %v1670
      %v1926 = vadd.f32 %v1925, %v1671
      %v1927 = vadd.f32 %v1926, %v1672
      %v1928 = vadd.f32 %v1927, %v1673
      %v1929 = vadd.f32 %v1928, %v1674
      %v1930 = vadd.f32 %v1929, %v1675
      %v1931 = vadd.f32 %v1930, %v1676
      %v1932 = vadd.f32 %v1931, %v1677
      %v1933 = vadd.f32 %v1932, %v1678
      %v1934 = vadd.f32 %v1933, %v1679
      %v1935 = vadd.f32 %v1934, %v1680
      %v1936 = vadd.f32 %v1935, %v1681
      %v1937 = vadd.f32 %v1936, %v1682
      %v1938 = vadd.f32 %v1937, %v1683
      %v1939 = vadd.f32 %v1938, %v1684
      %v1940 = vadd.f32 %v1939, %v1685
      %v1941 = vadd.f32 %v1940, %v1686
      %v1942 = vadd.f32 %v1941, %v1687
      %v1943 = vadd.f32 %v1942, %v1688
      %v1944 = vadd.f32 %v1943, %v1689
      %v1945 = vadd.f32 %v1944, %v1690
      %v1946 = vadd.f32 %v1945, %v1691
      %v1947 = vadd.f32 %v1946, %v1692
      %v1948 = vadd.f32 %v1947, %v1693
      %v1949 = vadd.f32 %v1948, %v1694
      %v1950 = vadd.f32 %v1949, %v1695
      %v1951 = vadd.f32 %v1950, %v1696
      %v1952 = vadd.f32 %v1951, %v1697
      %v1953 = vadd.f32 %v1952, %v1698
      %v1954 = vadd.f32 %v1953, %v1699
      %v1955 = vadd.f32 %v1954, %v1700
      %v1956 = vadd.f32 %v1955, %v1701
      %v1957 = vadd.f32 %v1956, %v1702
      %v1958 = vadd.f32 %v1957, %v1703
      %v1959 = vadd.f32 %v1958, %v1704
      %v1960 = vadd.f32 %v1959, %v1705
      %v1961 = vadd.f32 %v1960, %v1706
      %v1962 = vadd.f32 %v1961, %v1707
      %v1963 = vadd.f32 %v1962, %v1708
      %v1964 = vadd.f32 %v1963, %v1709
      %v1965 = vadd.f32 %v1964, %v1710
      %v1966 = vrot.slane %v1965, 4
      %v1967 = vadd.f32 %v1965, %v1966
      %v1968 = vrot.slane %v1967, 2
      %v1969 = vadd.f32 %v1967, %v1968
      %v1970 = vrot.slane %v1969, 1
      %v1971 = vadd.f32 %v1969, %v1970
      %v1972 = vmul.f32 %v1583, %v1583
      %v1973 = vmul.f32 %v1584, %v1584
      %v1974 = vmul.f32 %v1585, %v1585
      %v1975 = vmul.f32 %v1586, %v1586
      %v1976 = vmul.f32 %v1587, %v1587
      %v1977 = vmul.f32 %v1588, %v1588
      %v1978 = vmul.f32 %v1589, %v1589
      %v1979 = vmul.f32 %v1590, %v1590
      %v1980 = vmul.f32 %v1591, %v1591
      %v1981 = vmul.f32 %v1592, %v1592
      %v1982 = vmul.f32 %v1593, %v1593
      %v1983 = vmul.f32 %v1594, %v1594
      %v1984 = vmul.f32 %v1595, %v1595
      %v1985 = vmul.f32 %v1596, %v1596
      %v1986 = vmul.f32 %v1597, %v1597
      %v1987 = vmul.f32 %v1598, %v1598
      %v1988 = vmul.f32 %v1599, %v1599
      %v1989 = vmul.f32 %v1600, %v1600
      %v1990 = vmul.f32 %v1601, %v1601
      %v1991 = vmul.f32 %v1602, %v1602
      %v1992 = vmul.f32 %v1603, %v1603
      %v1993 = vmul.f32 %v1604, %v1604
      %v1994 = vmul.f32 %v1605, %v1605
      %v1995 = vmul.f32 %v1606, %v1606
      %v1996 = vmul.f32 %v1607, %v1607
      %v1997 = vmul.f32 %v1608, %v1608
      %v1998 = vmul.f32 %v1609, %v1609
      %v1999 = vmul.f32 %v1610, %v1610
      %v2000 = vmul.f32 %v1611, %v1611
      %v2001 = vmul.f32 %v1612, %v1612
      %v2002 = vmul.f32 %v1613, %v1613
      %v2003 = vmul.f32 %v1614, %v1614
      %v2004 = vmul.f32 %v1615, %v1615
      %v2005 = vmul.f32 %v1616, %v1616
      %v2006 = vmul.f32 %v1617, %v1617
      %v2007 = vmul.f32 %v1618, %v1618
      %v2008 = vmul.f32 %v1619, %v1619
      %v2009 = vmul.f32 %v1620, %v1620
      %v2010 = vmul.f32 %v1621, %v1621
      %v2011 = vmul.f32 %v1622, %v1622
      %v2012 = vmul.f32 %v1623, %v1623
      %v2013 = vmul.f32 %v1624, %v1624
      %v2014 = vmul.f32 %v1625, %v1625
      %v2015 = vmul.f32 %v1626, %v1626
      %v2016 = vmul.f32 %v1627, %v1627
      %v2017 = vmul.f32 %v1628, %v1628
      %v2018 = vmul.f32 %v1629, %v1629
      %v2019 = vmul.f32 %v1630, %v1630
      %v2020 = vmul.f32 %v1631, %v1631
      %v2021 = vmul.f32 %v1632, %v1632
      %v2022 = vmul.f32 %v1633, %v1633
      %v2023 = vmul.f32 %v1634, %v1634
      %v2024 = vmul.f32 %v1635, %v1635
      %v2025 = vmul.f32 %v1636, %v1636
      %v2026 = vmul.f32 %v1637, %v1637
      %v2027 = vmul.f32 %v1638, %v1638
      %v2028 = vmul.f32 %v1639, %v1639
      %v2029 = vmul.f32 %v1640, %v1640
      %v2030 = vmul.f32 %v1641, %v1641
      %v2031 = vmul.f32 %v1642, %v1642
      %v2032 = vmul.f32 %v1643, %v1643
      %v2033 = vmul.f32 %v1644, %v1644
      %v2034 = vmul.f32 %v1645, %v1645
      %v2035 = vmul.f32 %v1646, %v1646
      %v2036 = vmul.f32 %v1647, %v1647
      %v2037 = vmul.f32 %v1648, %v1648
      %v2038 = vmul.f32 %v1649, %v1649
      %v2039 = vmul.f32 %v1650, %v1650
      %v2040 = vmul.f32 %v1651, %v1651
      %v2041 = vmul.f32 %v1652, %v1652
      %v2042 = vmul.f32 %v1653, %v1653
      %v2043 = vmul.f32 %v1654, %v1654
      %v2044 = vmul.f32 %v1655, %v1655
      %v2045 = vmul.f32 %v1656, %v1656
      %v2046 = vmul.f32 %v1657, %v1657
      %v2047 = vmul.f32 %v1658, %v1658
      %v2048 = vmul.f32 %v1659, %v1659
      %v2049 = vmul.f32 %v1660, %v1660
      %v2050 = vmul.f32 %v1661, %v1661
      %v2051 = vmul.f32 %v1662, %v1662
      %v2052 = vmul.f32 %v1663, %v1663
      %v2053 = vmul.f32 %v1664, %v1664
      %v2054 = vmul.f32 %v1665, %v1665
      %v2055 = vmul.f32 %v1666, %v1666
      %v2056 = vmul.f32 %v1667, %v1667
      %v2057 = vmul.f32 %v1668, %v1668
      %v2058 = vmul.f32 %v1669, %v1669
      %v2059 = vmul.f32 %v1670, %v1670
      %v2060 = vmul.f32 %v1671, %v1671
      %v2061 = vmul.f32 %v1672, %v1672
      %v2062 = vmul.f32 %v1673, %v1673
      %v2063 = vmul.f32 %v1674, %v1674
      %v2064 = vmul.f32 %v1675, %v1675
      %v2065 = vmul.f32 %v1676, %v1676
      %v2066 = vmul.f32 %v1677, %v1677
      %v2067 = vmul.f32 %v1678, %v1678
      %v2068 = vmul.f32 %v1679, %v1679
      %v2069 = vmul.f32 %v1680, %v1680
      %v2070 = vmul.f32 %v1681, %v1681
      %v2071 = vmul.f32 %v1682, %v1682
      %v2072 = vmul.f32 %v1683, %v1683
      %v2073 = vmul.f32 %v1684, %v1684
      %v2074 = vmul.f32 %v1685, %v1685
      %v2075 = vmul.f32 %v1686, %v1686
      %v2076 = vmul.f32 %v1687, %v1687
      %v2077 = vmul.f32 %v1688, %v1688
      %v2078 = vmul.f32 %v1689, %v1689
      %v2079 = vmul.f32 %v1690, %v1690
      %v2080 = vmul.f32 %v1691, %v1691
      %v2081 = vmul.f32 %v1692, %v1692
      %v2082 = vmul.f32 %v1693, %v1693
      %v2083 = vmul.f32 %v1694, %v1694
      %v2084 = vmul.f32 %v1695, %v1695
      %v2085 = vmul.f32 %v1696, %v1696
      %v2086 = vmul.f32 %v1697, %v1697
      %v2087 = vmul.f32 %v1698, %v1698
      %v2088 = vmul.f32 %v1699, %v1699
      %v2089 = vmul.f32 %v1700, %v1700
      %v2090 = vmul.f32 %v1701, %v1701
      %v2091 = vmul.f32 %v1702, %v1702
      %v2092 = vmul.f32 %v1703, %v1703
      %v2093 = vmul.f32 %v1704, %v1704
      %v2094 = vmul.f32 %v1705, %v1705
      %v2095 = vmul.f32 %v1706, %v1706
      %v2096 = vmul.f32 %v1707, %v1707
      %v2097 = vmul.f32 %v1708, %v1708
      %v2098 = vmul.f32 %v1709, %v1709
      %v2099 = vmul.f32 %v1710, %v1710
      %v2100 = vadd.f32 %v1972, %v1973
      %v2101 = vadd.f32 %v2100, %v1974
      %v2102 = vadd.f32 %v2101, %v1975
      %v2103 = vadd.f32 %v2102, %v1976
      %v2104 = vadd.f32 %v2103, %v1977
      %v2105 = vadd.f32 %v2104, %v1978
      %v2106 = vadd.f32 %v2105, %v1979
      %v2107 = vadd.f32 %v2106, %v1980
      %v2108 = vadd.f32 %v2107, %v1981
      %v2109 = vadd.f32 %v2108, %v1982
      %v2110 = vadd.f32 %v2109, %v1983
      %v2111 = vadd.f32 %v2110, %v1984
      %v2112 = vadd.f32 %v2111, %v1985
      %v2113 = vadd.f32 %v2112, %v1986
      %v2114 = vadd.f32 %v2113, %v1987
      %v2115 = vadd.f32 %v2114, %v1988
      %v2116 = vadd.f32 %v2115, %v1989
      %v2117 = vadd.f32 %v2116, %v1990
      %v2118 = vadd.f32 %v2117, %v1991
      %v2119 = vadd.f32 %v2118, %v1992
      %v2120 = vadd.f32 %v2119, %v1993
      %v2121 = vadd.f32 %v2120, %v1994
      %v2122 = vadd.f32 %v2121, %v1995
      %v2123 = vadd.f32 %v2122, %v1996
      %v2124 = vadd.f32 %v2123, %v1997
      %v2125 = vadd.f32 %v2124, %v1998
      %v2126 = vadd.f32 %v2125, %v1999
      %v2127 = vadd.f32 %v2126, %v2000
      %v2128 = vadd.f32 %v2127, %v2001
      %v2129 = vadd.f32 %v2128, %v2002
      %v2130 = vadd.f32 %v2129, %v2003
      %v2131 = vadd.f32 %v2130, %v2004
      %v2132 = vadd.f32 %v2131, %v2005
      %v2133 = vadd.f32 %v2132, %v2006
      %v2134 = vadd.f32 %v2133, %v2007
      %v2135 = vadd.f32 %v2134, %v2008
      %v2136 = vadd.f32 %v2135, %v2009
      %v2137 = vadd.f32 %v2136, %v2010
      %v2138 = vadd.f32 %v2137, %v2011
      %v2139 = vadd.f32 %v2138, %v2012
      %v2140 = vadd.f32 %v2139, %v2013
      %v2141 = vadd.f32 %v2140, %v2014
      %v2142 = vadd.f32 %v2141, %v2015
      %v2143 = vadd.f32 %v2142, %v2016
      %v2144 = vadd.f32 %v2143, %v2017
      %v2145 = vadd.f32 %v2144, %v2018
      %v2146 = vadd.f32 %v2145, %v2019
      %v2147 = vadd.f32 %v2146, %v2020
      %v2148 = vadd.f32 %v2147, %v2021
      %v2149 = vadd.f32 %v2148, %v2022
      %v2150 = vadd.f32 %v2149, %v2023
      %v2151 = vadd.f32 %v2150, %v2024
      %v2152 = vadd.f32 %v2151, %v2025
      %v2153 = vadd.f32 %v2152, %v2026
      %v2154 = vadd.f32 %v2153, %v2027
      %v2155 = vadd.f32 %v2154, %v2028
      %v2156 = vadd.f32 %v2155, %v2029
      %v2157 = vadd.f32 %v2156, %v2030
      %v2158 = vadd.f32 %v2157, %v2031
      %v2159 = vadd.f32 %v2158, %v2032
      %v2160 = vadd.f32 %v2159, %v2033
      %v2161 = vadd.f32 %v2160, %v2034
      %v2162 = vadd.f32 %v2161, %v2035
      %v2163 = vadd.f32 %v2162, %v2036
      %v2164 = vadd.f32 %v2163, %v2037
      %v2165 = vadd.f32 %v2164, %v2038
      %v2166 = vadd.f32 %v2165, %v2039
      %v2167 = vadd.f32 %v2166, %v2040
      %v2168 = vadd.f32 %v2167, %v2041
      %v2169 = vadd.f32 %v2168, %v2042
      %v2170 = vadd.f32 %v2169, %v2043
      %v2171 = vadd.f32 %v2170, %v2044
      %v2172 = vadd.f32 %v2171, %v2045
      %v2173 = vadd.f32 %v2172, %v2046
      %v2174 = vadd.f32 %v2173, %v2047
      %v2175 = vadd.f32 %v2174, %v2048
      %v2176 = vadd.f32 %v2175, %v2049
      %v2177 = vadd.f32 %v2176, %v2050
      %v2178 = vadd.f32 %v2177, %v2051
      %v2179 = vadd.f32 %v2178, %v2052
      %v2180 = vadd.f32 %v2179, %v2053
      %v2181 = vadd.f32 %v2180, %v2054
      %v2182 = vadd.f32 %v2181, %v2055
      %v2183 = vadd.f32 %v2182, %v2056
      %v2184 = vadd.f32 %v2183, %v2057
      %v2185 = vadd.f32 %v2184, %v2058
      %v2186 = vadd.f32 %v2185, %v2059
      %v2187 = vadd.f32 %v2186, %v2060
      %v2188 = vadd.f32 %v2187, %v2061
      %v2189 = vadd.f32 %v2188, %v2062
      %v2190 = vadd.f32 %v2189, %v2063
      %v2191 = vadd.f32 %v2190, %v2064
      %v2192 = vadd.f32 %v2191, %v2065
      %v2193 = vadd.f32 %v2192, %v2066
      %v2194 = vadd.f32 %v2193, %v2067
      %v2195 = vadd.f32 %v2194, %v2068
      %v2196 = vadd.f32 %v2195, %v2069
      %v2197 = vadd.f32 %v2196, %v2070
      %v2198 = vadd.f32 %v2197, %v2071
      %v2199 = vadd.f32 %v2198, %v2072
      %v2200 = vadd.f32 %v2199, %v2073
      %v2201 = vadd.f32 %v2200, %v2074
      %v2202 = vadd.f32 %v2201, %v2075
      %v2203 = vadd.f32 %v2202, %v2076
      %v2204 = vadd.f32 %v2203, %v2077
      %v2205 = vadd.f32 %v2204, %v2078
      %v2206 = vadd.f32 %v2205, %v2079
      %v2207 = vadd.f32 %v2206, %v2080
      %v2208 = vadd.f32 %v2207, %v2081
      %v2209 = vadd.f32 %v2208, %v2082
      %v2210 = vadd.f32 %v2209, %v2083
      %v2211 = vadd.f32 %v2210, %v2084
      %v2212 = vadd.f32 %v2211, %v2085
      %v2213 = vadd.f32 %v2212, %v2086
      %v2214 = vadd.f32 %v2213, %v2087
      %v2215 = vadd.f32 %v2214, %v2088
      %v2216 = vadd.f32 %v2215, %v2089
      %v2217 = vadd.f32 %v2216, %v2090
      %v2218 = vadd.f32 %v2217, %v2091
      %v2219 = vadd.f32 %v2218, %v2092
      %v2220 = vadd.f32 %v2219, %v2093
      %v2221 = vadd.f32 %v2220, %v2094
      %v2222 = vadd.f32 %v2221, %v2095
      %v2223 = vadd.f32 %v2222, %v2096
      %v2224 = vadd.f32 %v2223, %v2097
      %v2225 = vadd.f32 %v2224, %v2098
      %v2226 = vadd.f32 %v2225, %v2099
      %v2227 = vrot.slane %v2226, 4
      %v2228 = vadd.f32 %v2226, %v2227
      %v2229 = vrot.slane %v2228, 2
      %v2230 = vadd.f32 %v2228, %v2229
      %v2231 = vrot.slane %v2230, 1
      %v2232 = vadd.f32 %v2230, %v2231
      %vm2233 = vcmask 1040384
      %v2234 = vsel %vm2233, %v1971, %v2232
      %2235 = vst [vmem:[%s211] sm:$0x3] %v2234
      %s2236 = smul.u32 128, %s16
      %p2237 = scmp.lt.s32.totalorder %s2236, 1023
      %s2238 = scalar_select %p2237, %s2236, 1023
      %s2239 = smul.addr %s2238, 8
      %s2240 = scalar_lea.vmem %s3, %s2239
      %p2241 = scmp.lt.s32.totalorder %s16, 7
      %s2242 = scalar_select %p2241, %s16, 7
      %s2243 = smul.addr %s2242, 2
      %s2244 = scalar_lea.vmem %s4, %s2243
      // Predicated region
      $region33: #{cong_final_conv_forward.3} parent=31 // pred_check
        %p2245 = pneg %p102
      $region34: #{cong_final_conv_forward.3} parent=31 // pred_check_branch
        %2247 = sbr.rel (%p2245) target = $region36
      $region35: #{cong_final_conv_forward.3} parent=31 // pred_region
        %s2248 = smul.u32 128, %s16
      $region36: #{cong_final_conv_forward.3} parent=31 // pred_fallthru
        _
      // Predicated region
      $region37: #{cong_final_conv_forward.3} parent=31 // pred_check
        %p2249 = pneg %p128
      $region38: #{cong_final_conv_forward.3} parent=31 // pred_check_branch
        %2251 = sbr.rel (%p2249) target = $region40
      $region39: #{cong_final_conv_forward.3} parent=31 // pred_region
        _
      $region40: #{cong_final_conv_forward.3} parent=31 // pred_fallthru
        _
    $region32: #{cong_final_conv_forward.3} parent=5 // pred_fallthru
      _
    %p2252 = scmp.le.s32.totalorder 2, %s11
    // Predicated region
    $region41: #{cong_final_conv_forward.3} parent=5 // pred_check
      %p2253 = pneg %p2252
    $region42: #{cong_final_conv_forward.3} parent=5 // pred_check_branch
      %2255 = sbr.rel (%p2253) target = $region44
    $region43: #{cong_final_conv_forward.3} parent=5 // pred_region
      %s2256 = ssub.s32 %s11, 2
      // Predicated region
      $region45: #{cong_final_conv_forward.3} parent=43 // pred_check
        %p2257 = pneg %p108
      $region46: #{cong_final_conv_forward.3} parent=43 // pred_check_branch
        %2259 = sbr.rel (%p2257) target = $region48
      $region47: #{cong_final_conv_forward.3} parent=43 // pred_region
        %s2260 = smul.u32 128, %s17
        %p2261 = scmp.lt.s32.totalorder %s2260, 1023
        %s2262 = scalar_select %p2261, %s2260, 1023
        %s2263 = smul.addr %s2262, 8
        %s2264 = scalar_lea.vmem %s3, %s2263
      $region48: #{cong_final_conv_forward.3} parent=43 // pred_fallthru
        _
      // Predicated region
      $region49: #{cong_final_conv_forward.3} parent=43 // pred_check
        %p2265 = pneg %p134
      $region50: #{cong_final_conv_forward.3} parent=43 // pred_check_branch
        %2267 = sbr.rel (%p2265) target = $region52
      $region51: #{cong_final_conv_forward.3} parent=43 // pred_region
        %p2268 = scmp.lt.s32.totalorder %s17, 7
        %s2269 = scalar_select %p2268, %s17, 7
        %s2270 = smul.addr %s2269, 2
        %s2271 = scalar_lea.vmem %s4, %s2270
      $region52: #{cong_final_conv_forward.3} parent=43 // pred_fallthru
        _
    $region44: #{cong_final_conv_forward.3} parent=5 // pred_fallthru
      _
  $region6: #{cong_final_conv_forward.3} parent=0 // loop_footer
    %s15 = sadd.s32 1, %s11
  $region7: #{cong_final_conv_forward.3} parent=0 // loop_footer_branch
    %10 = sbr.rel target = $region3
  $region8: #{cong_final_conv_forward.3} parent=0 // loop_exit
    _

</llo_original>
